<compile_context>
chip_gen: v7x
topology: tpu7x:2x2x1
jax: 0.10.0
libtpu: 0.0.40
codegen_flags: <defaults>
</compile_context>

<pallas_src>
import jax
import jax.numpy as jnp
from jax import lax
from jax.experimental import pallas as pl
from jax.experimental.pallas import tpu as pltpu


def _round_up(x, m):
    return (x + m - 1) // m * m


# ----------------------------------------------------------------------------
# Fused kernel: all LSTM layers + final Linear, one invocation
# ----------------------------------------------------------------------------
def fused_lstm_kernel(x_ref,        # (T*Bp, Hp)   padded, time-major, flattened
                      w_ih_ref,     # (L, Hp, 4*Hp)  W_ih^T per layer (padded)
                      w_hh_ref,     # (L, Hp, 4*Hp)  W_hh^T per layer (padded)
                      b_ref,        # (L, 1, 4*Hp)   b_ih + b_hh per layer
                      w_lin_ref,    # (1, Hp)        final linear weight row
                      b_lin_ref,    # (1, 1)         final linear bias
                      o_ref,        # (Bp, 128)      prediction broadcast over lanes
                      seq_sc,       # VMEM (T*Bp, Hp)    inter-layer sequence
                      gx_sc):       # VMEM (T*Bp, 4*Hp)  precomputed input proj
    L, Hp, _ = w_ih_ref.shape
    Bp = o_ref.shape[0]
    T = x_ref.shape[0] // Bp

    h_last = None
    for l in range(L):                              # static, unrolled over layers
        # ---- phase 1: batched input projection for ALL timesteps at once ----
        # Layer 0 reads directly from x_ref (no x -> seq_sc copy); later
        # layers read the previous layer's hidden sequence from seq_sc.
        src = x_ref if l == 0 else seq_sc
        gx_sc[...] = (jnp.dot(src[...], w_ih_ref[l],
                              preferred_element_type=jnp.float32)
                      + b_ref[l])

        # ---- phase 2: serial recurrence, h/c carried in vregs ----
        last_layer = (l == L - 1)

        def step(t, carry, _l=l, _last=last_layer):
            h, c = carry
            idx = pl.multiple_of(t * Bp, Bp)
            g = (gx_sc[pl.ds(idx, Bp), :]
                 + jnp.dot(h, w_hh_ref[_l],
                           preferred_element_type=jnp.float32))
            # lane-aligned gate slices (Hp is a multiple of 128)
            i_g = jax.nn.sigmoid(g[:, 0 * Hp:1 * Hp])
            f_g = jax.nn.sigmoid(g[:, 1 * Hp:2 * Hp])
            g_g = jnp.tanh(g[:, 2 * Hp:3 * Hp])
            o_g = jax.nn.sigmoid(g[:, 3 * Hp:4 * Hp])
            c_new = f_g * c + i_g * g_g
            h_new = o_g * jnp.tanh(c_new)
            if not _last:                           # last layer only needs h_T
                seq_sc[pl.ds(idx, Bp), :] = h_new
            return (h_new, c_new)

        h0 = jnp.zeros((Bp, Hp), jnp.float32)
        c0 = jnp.zeros((Bp, Hp), jnp.float32)
        unroll = T if T <= 16 else 8                # full unroll short T, partial otherwise
        h_last, _ = lax.fori_loop(0, T, step, (h0, c0), unroll=unroll)

    # ---- final Linear(H, 1): VPU multiply + lane reduction on h_T ----
    pred = (jnp.sum(h_last * w_lin_ref[...], axis=-1, keepdims=True)
            + b_lin_ref[...])                       # (Bp, 1)
    # broadcast across 128 lanes -> unmasked full-tile store
    o_ref[...] = jnp.broadcast_to(pred, o_ref.shape)


# ----------------------------------------------------------------------------
# Wrapper
# ----------------------------------------------------------------------------
@jax.jit
def multivariate_lstm_forward(x_btd, kp):
    """x_btd: (B, T, D) batch_first, like the PyTorch module (inference)."""
    B, T, D = x_btd.shape
    Hp = kp["w_lin"].shape[1]
    Bp = _round_up(B, 8)

    # pad batch -> sublane multiple, features -> lane multiple (Hp),
    # go time-major and flatten to a lane/sublane-dense (T*Bp, Hp) slab.
    x_tm = jnp.transpose(x_btd, (1, 0, 2)).astype(jnp.float32)     # (T, B, D)
    x_pad = jnp.pad(x_tm, ((0, 0), (0, Bp - B), (0, Hp - D)))
    x2d = x_pad.reshape(T * Bp, Hp)

    vmem_bytes = 4 * (x2d.size + kp["w_ih"].size + kp["w_hh"].size
                      + kp["bias"].size + kp["w_lin"].size + 1
                      + Bp * 128                  # output tile
                      + T * Bp * Hp               # inter-layer sequence scratch
                      + T * Bp * 4 * Hp)          # precomputed gate scratch

    # chip-aware cap (v7x has 64 MiB physical VMEM; v5e/v6e have 128 MiB)
    try:
        vmem_cap = pltpu.get_tpu_info().vmem_capacity_bytes
    except Exception:
        vmem_cap = 64 << 20
    vmem_limit = min(int(vmem_bytes * 1.5) + (2 << 20), vmem_cap - (8 << 20))
    vmem_limit = max(vmem_limit, 4 << 20)

    out_padded = pl.pallas_call(
        fused_lstm_kernel,
        out_shape=jax.ShapeDtypeStruct((Bp, 128), jnp.float32),
        in_specs=[pl.BlockSpec(memory_space=pltpu.MemorySpace.VMEM)] * 6,
        out_specs=pl.BlockSpec(memory_space=pltpu.MemorySpace.VMEM),
        scratch_shapes=[
            pltpu.VMEM((T * Bp, Hp), jnp.float32),        # seq (inter-layer)
            pltpu.VMEM((T * Bp, 4 * Hp), jnp.float32),    # gx (input proj)
        ],
        compiler_params=pltpu.CompilerParams(vmem_limit_bytes=vmem_limit),
    )(x2d, kp["w_ih"], kp["w_hh"], kp["bias"], kp["w_lin"], kp["b_lin"])

    return out_padded[:B, :1]


# ----------------------------------------------------------------------------
# One-time parameter preparation (pre-transposed / padded / stacked)
# ----------------------------------------------------------------------------
def prepare_params(params, input_size, hidden_size):
    """PyTorch-layout params -> padded, pre-transposed kernel layout (once)."""
    H, D = hidden_size, input_size
    Hp = _round_up(max(D, H), 128)        # one padded feature dim for all layers

    def pad_gate_cols(w_t, rows_out):
        # w_t: (rows, 4H), gate order [i, f, g, o] -> (rows_out, 4*Hp),
        # each gate block padded to a 128-lane boundary.
        rows = w_t.shape[0]
        w4 = w_t.reshape(rows, 4, H)
        w4 = jnp.pad(w4, ((0, rows_out - rows), (0, 0), (0, Hp - H)))
        return w4.reshape(rows_out, 4 * Hp)

    w_ih_list, w_hh_list, b_list = [], [], []
    for (w_ih, w_hh, b_ih, b_hh) in params["lstm"]:
        w_ih_list.append(pad_gate_cols(w_ih.T.astype(jnp.float32), Hp))
        w_hh_list.append(pad_gate_cols(w_hh.T.astype(jnp.float32), Hp))
        b = (b_ih + b_hh).astype(jnp.float32).reshape(4, H)
        b = jnp.pad(b, ((0, 0), (0, Hp - H))).reshape(1, 4 * Hp)
        b_list.append(b)

    w_lin, b_lin = params["linear"]
    return {
        "w_ih": jnp.stack(w_ih_list),                                  # (L,Hp,4Hp)
        "w_hh": jnp.stack(w_hh_list),                                  # (L,Hp,4Hp)
        "bias": jnp.stack(b_list),                                     # (L,1,4Hp)
        "w_lin": jnp.pad(w_lin.astype(jnp.float32),
                         ((0, 0), (0, Hp - H))),                       # (1,Hp)
        "b_lin": b_lin.astype(jnp.float32).reshape(1, 1),              # (1,1)
    }


# ----------------------------------------------------------------------------
# Deterministic parameter init (PyTorch-style U(-1/sqrt(H), 1/sqrt(H)))
# ----------------------------------------------------------------------------
def init_params(key, input_size, hidden_size, num_layers):
    k = 1.0 / jnp.sqrt(hidden_size)
    lstm_params = []
    for layer in range(num_layers):
        d_in = input_size if layer == 0 else hidden_size
        key, k1, k2, k3, k4 = jax.random.split(key, 5)
        w_ih = jax.random.uniform(k1, (4 * hidden_size, d_in), jnp.float32, -k, k)
        w_hh = jax.random.uniform(k2, (4 * hidden_size, hidden_size), jnp.float32, -k, k)
        b_ih = jax.random.uniform(k3, (4 * hidden_size,), jnp.float32, -k, k)
        b_hh = jax.random.uniform(k4, (4 * hidden_size,), jnp.float32, -k, k)
        lstm_params.append((w_ih, w_hh, b_ih, b_hh))
    key, k5, k6 = jax.random.split(key, 3)
    w_lin = jax.random.uniform(k5, (1, hidden_size), jnp.float32, -k, k)
    b_lin = jax.random.uniform(k6, (1,), jnp.float32, -k, k)
    return {"lstm": lstm_params, "linear": (w_lin, b_lin)}


# ----------------------------------------------------------------------------
# Pure-JAX reference (same math, no Pallas) for correctness check
# ----------------------------------------------------------------------------
def reference_forward(x_btd, params):
    B = x_btd.shape[0]
    x = x_btd
    for (w_ih, w_hh, b_ih, b_hh) in params["lstm"]:
        H = w_hh.shape[1]
        h = jnp.zeros((B, H), jnp.float32)
        c = jnp.zeros((B, H), jnp.float32)
        outs = []
        for t in range(x.shape[1]):
            g = x[:, t, :] @ w_ih.T + h @ w_hh.T + b_ih + b_hh
            i = jax.nn.sigmoid(g[:, 0 * H:1 * H])
            f = jax.nn.sigmoid(g[:, 1 * H:2 * H])
            gg = jnp.tanh(g[:, 2 * H:3 * H])
            o = jax.nn.sigmoid(g[:, 3 * H:4 * H])
            c = f * c + i * gg
            h = o * jnp.tanh(c)
            outs.append(h)
        x = jnp.stack(outs, axis=1)
    w_lin, b_lin = params["linear"]
    return x[:, -1, :] @ w_lin.T + b_lin


# ----------------------------------------------------------------------------
if __name__ == "__main__":
    B, T, D, H, L = 2, 8, 4, 32, 2
    key = jax.random.PRNGKey(0)
    key, kx, kp = jax.random.split(key, 3)

    x = jax.random.normal(kx, (B, T, D), jnp.float32)   # (batch, seq, input_size)
    params = init_params(kp, input_size=D, hidden_size=H, num_layers=L)
    kparams = prepare_params(params, input_size=D, hidden_size=H)

    preds = multivariate_lstm_forward(x, kparams)
    preds = jax.block_until_ready(preds)

    ref = reference_forward(x, params)
    assert preds.shape == (B, 1)
    assert jnp.allclose(preds, ref, atol=1e-5, rtol=1e-5), (preds, ref)

    print("KERNEL_OK")
</pallas_src>

<mosaic_0001>
module attributes {stable_mosaic.version = 11 : i64} {
  func.func @fused_lstm_kernel(%arg0: memref<64x128xf32, #tpu.memory_space<vmem>>, %arg1: memref<2x128x512xf32, #tpu.memory_space<vmem>>, %arg2: memref<2x128x512xf32, #tpu.memory_space<vmem>>, %arg3: memref<2x1x512xf32, #tpu.memory_space<vmem>>, %arg4: memref<1x128xf32, #tpu.memory_space<vmem>>, %arg5: memref<1x1xf32, #tpu.memory_space<vmem>>, %arg6: memref<8x128xf32, #tpu.memory_space<vmem>>, %arg7: memref<64x128xf32, #tpu.memory_space<vmem>>, %arg8: memref<64x512xf32, #tpu.memory_space<vmem>>) attributes {dimension_semantics = [], scalar_prefetch = 0 : i64, scratch_operands = 2 : i64, tpu.core_type = #tpu.core_type<tc>} {
    %c0 = arith.constant 0 : index
    %c0_0 = arith.constant 0 : index
    %0 = vector.load %arg0[%c0, %c0_0] : memref<64x128xf32, #tpu.memory_space<vmem>>, vector<64x128xf32>
    %c0_1 = arith.constant 0 : index
    %c0_2 = arith.constant 0 : index
    %c0_3 = arith.constant 0 : index
    %1 = vector.load %arg1[%c0_1, %c0_2, %c0_3] : memref<2x128x512xf32, #tpu.memory_space<vmem>>, vector<1x128x512xf32>
    %2 = vector.shape_cast %1 : vector<1x128x512xf32> to vector<128x512xf32>
    %cst = arith.constant dense<0.000000e+00> : vector<64x512xf32>
    %3 = tpu.matmul %0, %2, %cst {dimension_numbers = #tpu.dot_dimension_numbers<[1], [0], [0], [1], [0, 0, 1, 1], [], []>} : vector<64x128xf32>, vector<128x512xf32>, vector<64x512xf32> -> vector<64x512xf32>
    %c0_4 = arith.constant 0 : index
    %c0_5 = arith.constant 0 : index
    %c0_6 = arith.constant 0 : index
    %4 = vector.load %arg3[%c0_4, %c0_5, %c0_6] : memref<2x1x512xf32, #tpu.memory_space<vmem>>, vector<1x1x512xf32>
    %5 = vector.shape_cast %4 : vector<1x1x512xf32> to vector<1x512xf32>
    %6 = vector.broadcast %5 : vector<1x512xf32> to vector<64x512xf32>
    %7 = arith.addf %3, %6 : vector<64x512xf32>
    %c0_7 = arith.constant 0 : index
    %c0_8 = arith.constant 0 : index
    %8 = vector.load %arg8[%c0_7, %c0_8] : memref<64x512xf32, #tpu.memory_space<vmem>>, vector<64x512xf32>
    tpu.vector_store %arg8[%c0_7, %c0_8], %7 {strides = array<i32>} : memref<64x512xf32, #tpu.memory_space<vmem>>, vector<64x512xf32>,
    %cst_9 = arith.constant 0.000000e+00 : f32
    %9 = vector.broadcast %cst_9 : f32 to vector<8x128xf32>
    %cst_10 = arith.constant 0.000000e+00 : f32
    %10 = vector.broadcast %cst_10 : f32 to vector<8x128xf32>
    %c0_i32 = arith.constant 0 : i32
    %c8_i32 = arith.constant 8 : i32
    %11 = arith.muli %c0_i32, %c8_i32 : i32
    %12 = tpu.assume_multiple %11, 8 : i32
    %13 = arith.index_cast %12 : i32 to index
    %c0_11 = arith.constant 0 : index
    %14 = vector.load %arg8[%13, %c0_11] : memref<64x512xf32, #tpu.memory_space<vmem>>, vector<8x512xf32>
    %c0_12 = arith.constant 0 : index
    %c0_13 = arith.constant 0 : index
    %c0_14 = arith.constant 0 : index
    %15 = vector.load %arg2[%c0_12, %c0_13, %c0_14] : memref<2x128x512xf32, #tpu.memory_space<vmem>>, vector<1x128x512xf32>
    %16 = vector.shape_cast %15 : vector<1x128x512xf32> to vector<128x512xf32>
    %cst_15 = arith.constant dense<0.000000e+00> : vector<8x512xf32>
    %17 = tpu.matmul %9, %16, %cst_15 {dimension_numbers = #tpu.dot_dimension_numbers<[1], [0], [0], [1], [0, 0, 1, 1], [], []>} : vector<8x128xf32>, vector<128x512xf32>, vector<8x512xf32> -> vector<8x512xf32>
    %18 = arith.addf %14, %17 : vector<8x512xf32>
    %19 = vector.extract_strided_slice %18 {offsets = [0, 0], sizes = [8, 128], strides = [1, 1]} : vector<8x512xf32> to vector<8x128xf32>
    %20 = arith.negf %19 : vector<8x128xf32>
    %21 = math.exp %20 : vector<8x128xf32>
    %cst_16 = arith.constant 1.000000e+00 : f32
    %22 = vector.broadcast %cst_16 : f32 to vector<8x128xf32>
    %23 = arith.addf %22, %21 : vector<8x128xf32>
    %24 = arith.divf %22, %23 : vector<8x128xf32>
    %25 = vector.extract_strided_slice %18 {offsets = [0, 128], sizes = [8, 128], strides = [1, 1]} : vector<8x512xf32> to vector<8x128xf32>
    %26 = arith.negf %25 : vector<8x128xf32>
    %27 = math.exp %26 : vector<8x128xf32>
    %cst_17 = arith.constant 1.000000e+00 : f32
    %28 = vector.broadcast %cst_17 : f32 to vector<8x128xf32>
    %29 = arith.addf %28, %27 : vector<8x128xf32>
    %30 = arith.divf %28, %29 : vector<8x128xf32>
    %31 = vector.extract_strided_slice %18 {offsets = [0, 256], sizes = [8, 128], strides = [1, 1]} : vector<8x512xf32> to vector<8x128xf32>
    %32 = math.tanh %31 : vector<8x128xf32>
    %33 = vector.extract_strided_slice %18 {offsets = [0, 384], sizes = [8, 128], strides = [1, 1]} : vector<8x512xf32> to vector<8x128xf32>
    %34 = arith.negf %33 : vector<8x128xf32>
    %35 = math.exp %34 : vector<8x128xf32>
    %cst_18 = arith.constant 1.000000e+00 : f32
    %36 = vector.broadcast %cst_18 : f32 to vector<8x128xf32>
    %37 = arith.addf %36, %35 : vector<8x128xf32>
    %38 = arith.divf %36, %37 : vector<8x128xf32>
    %39 = arith.mulf %30, %10 : vector<8x128xf32>
    %40 = arith.mulf %24, %32 : vector<8x128xf32>
    %41 = arith.addf %39, %40 : vector<8x128xf32>
    %42 = math.tanh %41 : vector<8x128xf32>
    %43 = arith.mulf %38, %42 : vector<8x128xf32>
    %44 = arith.index_cast %12 : i32 to index
    %c0_19 = arith.constant 0 : index
    %45 = vector.load %arg7[%44, %c0_19] : memref<64x128xf32, #tpu.memory_space<vmem>>, vector<8x128xf32>
    tpu.vector_store %arg7[%44, %c0_19], %43 {strides = array<i32>} : memref<64x128xf32, #tpu.memory_space<vmem>>, vector<8x128xf32>,
    %c1_i32 = arith.constant 1 : i32
    %c8_i32_20 = arith.constant 8 : i32
    %46 = arith.muli %c1_i32, %c8_i32_20 : i32
    %47 = tpu.assume_multiple %46, 8 : i32
    %48 = arith.index_cast %47 : i32 to index
    %c0_21 = arith.constant 0 : index
    %49 = vector.load %arg8[%48, %c0_21] : memref<64x512xf32, #tpu.memory_space<vmem>>, vector<8x512xf32>
    %c0_22 = arith.constant 0 : index
    %c0_23 = arith.constant 0 : index
    %c0_24 = arith.constant 0 : index
    %50 = vector.load %arg2[%c0_22, %c0_23, %c0_24] : memref<2x128x512xf32, #tpu.memory_space<vmem>>, vector<1x128x512xf32>
    %51 = vector.shape_cast %50 : vector<1x128x512xf32> to vector<128x512xf32>
    %cst_25 = arith.constant dense<0.000000e+00> : vector<8x512xf32>
    %52 = tpu.matmul %43, %51, %cst_25 {dimension_numbers = #tpu.dot_dimension_numbers<[1], [0], [0], [1], [0, 0, 1, 1], [], []>} : vector<8x128xf32>, vector<128x512xf32>, vector<8x512xf32> -> vector<8x512xf32>
    %53 = arith.addf %49, %52 : vector<8x512xf32>
    %54 = vector.extract_strided_slice %53 {offsets = [0, 0], sizes = [8, 128], strides = [1, 1]} : vector<8x512xf32> to vector<8x128xf32>
    %55 = arith.negf %54 : vector<8x128xf32>
    %56 = math.exp %55 : vector<8x128xf32>
    %cst_26 = arith.constant 1.000000e+00 : f32
    %57 = vector.broadcast %cst_26 : f32 to vector<8x128xf32>
    %58 = arith.addf %57, %56 : vector<8x128xf32>
    %59 = arith.divf %57, %58 : vector<8x128xf32>
    %60 = vector.extract_strided_slice %53 {offsets = [0, 128], sizes = [8, 128], strides = [1, 1]} : vector<8x512xf32> to vector<8x128xf32>
    %61 = arith.negf %60 : vector<8x128xf32>
    %62 = math.exp %61 : vector<8x128xf32>
    %cst_27 = arith.constant 1.000000e+00 : f32
    %63 = vector.broadcast %cst_27 : f32 to vector<8x128xf32>
    %64 = arith.addf %63, %62 : vector<8x128xf32>
    %65 = arith.divf %63, %64 : vector<8x128xf32>
    %66 = vector.extract_strided_slice %53 {offsets = [0, 256], sizes = [8, 128], strides = [1, 1]} : vector<8x512xf32> to vector<8x128xf32>
    %67 = math.tanh %66 : vector<8x128xf32>
    %68 = vector.extract_strided_slice %53 {offsets = [0, 384], sizes = [8, 128], strides = [1, 1]} : vector<8x512xf32> to vector<8x128xf32>
    %69 = arith.negf %68 : vector<8x128xf32>
    %70 = math.exp %69 : vector<8x128xf32>
    %cst_28 = arith.constant 1.000000e+00 : f32
    %71 = vector.broadcast %cst_28 : f32 to vector<8x128xf32>
    %72 = arith.addf %71, %70 : vector<8x128xf32>
    %73 = arith.divf %71, %72 : vector<8x128xf32>
    %74 = arith.mulf %65, %41 : vector<8x128xf32>
    %75 = arith.mulf %59, %67 : vector<8x128xf32>
    %76 = arith.addf %74, %75 : vector<8x128xf32>
    %77 = math.tanh %76 : vector<8x128xf32>
    %78 = arith.mulf %73, %77 : vector<8x128xf32>
    %79 = arith.index_cast %47 : i32 to index
    %c0_29 = arith.constant 0 : index
    %80 = vector.load %arg7[%79, %c0_29] : memref<64x128xf32, #tpu.memory_space<vmem>>, vector<8x128xf32>
    tpu.vector_store %arg7[%79, %c0_29], %78 {strides = array<i32>} : memref<64x128xf32, #tpu.memory_space<vmem>>, vector<8x128xf32>,
    %c2_i32 = arith.constant 2 : i32
    %c8_i32_30 = arith.constant 8 : i32
    %81 = arith.muli %c2_i32, %c8_i32_30 : i32
    %82 = tpu.assume_multiple %81, 8 : i32
    %83 = arith.index_cast %82 : i32 to index
    %c0_31 = arith.constant 0 : index
    %84 = vector.load %arg8[%83, %c0_31] : memref<64x512xf32, #tpu.memory_space<vmem>>, vector<8x512xf32>
    %c0_32 = arith.constant 0 : index
    %c0_33 = arith.constant 0 : index
    %c0_34 = arith.constant 0 : index
    %85 = vector.load %arg2[%c0_32, %c0_33, %c0_34] : memref<2x128x512xf32, #tpu.memory_space<vmem>>, vector<1x128x512xf32>
    %86 = vector.shape_cast %85 : vector<1x128x512xf32> to vector<128x512xf32>
    %cst_35 = arith.constant dense<0.000000e+00> : vector<8x512xf32>
    %87 = tpu.matmul %78, %86, %cst_35 {dimension_numbers = #tpu.dot_dimension_numbers<[1], [0], [0], [1], [0, 0, 1, 1], [], []>} : vector<8x128xf32>, vector<128x512xf32>, vector<8x512xf32> -> vector<8x512xf32>
    %88 = arith.addf %84, %87 : vector<8x512xf32>
    %89 = vector.extract_strided_slice %88 {offsets = [0, 0], sizes = [8, 128], strides = [1, 1]} : vector<8x512xf32> to vector<8x128xf32>
    %90 = arith.negf %89 : vector<8x128xf32>
    %91 = math.exp %90 : vector<8x128xf32>
    %cst_36 = arith.constant 1.000000e+00 : f32
    %92 = vector.broadcast %cst_36 : f32 to vector<8x128xf32>
    %93 = arith.addf %92, %91 : vector<8x128xf32>
    %94 = arith.divf %92, %93 : vector<8x128xf32>
    %95 = vector.extract_strided_slice %88 {offsets = [0, 128], sizes = [8, 128], strides = [1, 1]} : vector<8x512xf32> to vector<8x128xf32>
    %96 = arith.negf %95 : vector<8x128xf32>
    %97 = math.exp %96 : vector<8x128xf32>
    %cst_37 = arith.constant 1.000000e+00 : f32
    %98 = vector.broadcast %cst_37 : f32 to vector<8x128xf32>
    %99 = arith.addf %98, %97 : vector<8x128xf32>
    %100 = arith.divf %98, %99 : vector<8x128xf32>
    %101 = vector.extract_strided_slice %88 {offsets = [0, 256], sizes = [8, 128], strides = [1, 1]} : vector<8x512xf32> to vector<8x128xf32>
    %102 = math.tanh %101 : vector<8x128xf32>
    %103 = vector.extract_strided_slice %88 {offsets = [0, 384], sizes = [8, 128], strides = [1, 1]} : vector<8x512xf32> to vector<8x128xf32>
    %104 = arith.negf %103 : vector<8x128xf32>
    %105 = math.exp %104 : vector<8x128xf32>
    %cst_38 = arith.constant 1.000000e+00 : f32
    %106 = vector.broadcast %cst_38 : f32 to vector<8x128xf32>
    %107 = arith.addf %106, %105 : vector<8x128xf32>
    %108 = arith.divf %106, %107 : vector<8x128xf32>
    %109 = arith.mulf %100, %76 : vector<8x128xf32>
    %110 = arith.mulf %94, %102 : vector<8x128xf32>
    %111 = arith.addf %109, %110 : vector<8x128xf32>
    %112 = math.tanh %111 : vector<8x128xf32>
    %113 = arith.mulf %108, %112 : vector<8x128xf32>
    %114 = arith.index_cast %82 : i32 to index
    %c0_39 = arith.constant 0 : index
    %115 = vector.load %arg7[%114, %c0_39] : memref<64x128xf32, #tpu.memory_space<vmem>>, vector<8x128xf32>
    tpu.vector_store %arg7[%114, %c0_39], %113 {strides = array<i32>} : memref<64x128xf32, #tpu.memory_space<vmem>>, vector<8x128xf32>,
    %c3_i32 = arith.constant 3 : i32
    %c8_i32_40 = arith.constant 8 : i32
    %116 = arith.muli %c3_i32, %c8_i32_40 : i32
    %117 = tpu.assume_multiple %116, 8 : i32
    %118 = arith.index_cast %117 : i32 to index
    %c0_41 = arith.constant 0 : index
    %119 = vector.load %arg8[%118, %c0_41] : memref<64x512xf32, #tpu.memory_space<vmem>>, vector<8x512xf32>
    %c0_42 = arith.constant 0 : index
    %c0_43 = arith.constant 0 : index
    %c0_44 = arith.constant 0 : index
    %120 = vector.load %arg2[%c0_42, %c0_43, %c0_44] : memref<2x128x512xf32, #tpu.memory_space<vmem>>, vector<1x128x512xf32>
    %121 = vector.shape_cast %120 : vector<1x128x512xf32> to vector<128x512xf32>
    %cst_45 = arith.constant dense<0.000000e+00> : vector<8x512xf32>
    %122 = tpu.matmul %113, %121, %cst_45 {dimension_numbers = #tpu.dot_dimension_numbers<[1], [0], [0], [1], [0, 0, 1, 1], [], []>} : vector<8x128xf32>, vector<128x512xf32>, vector<8x512xf32> -> vector<8x512xf32>
    %123 = arith.addf %119, %122 : vector<8x512xf32>
    %124 = vector.extract_strided_slice %123 {offsets = [0, 0], sizes = [8, 128], strides = [1, 1]} : vector<8x512xf32> to vector<8x128xf32>
    %125 = arith.negf %124 : vector<8x128xf32>
    %126 = math.exp %125 : vector<8x128xf32>
    %cst_46 = arith.constant 1.000000e+00 : f32
    %127 = vector.broadcast %cst_46 : f32 to vector<8x128xf32>
    %128 = arith.addf %127, %126 : vector<8x128xf32>
    %129 = arith.divf %127, %128 : vector<8x128xf32>
    %130 = vector.extract_strided_slice %123 {offsets = [0, 128], sizes = [8, 128], strides = [1, 1]} : vector<8x512xf32> to vector<8x128xf32>
    %131 = arith.negf %130 : vector<8x128xf32>
    %132 = math.exp %131 : vector<8x128xf32>
    %cst_47 = arith.constant 1.000000e+00 : f32
    %133 = vector.broadcast %cst_47 : f32 to vector<8x128xf32>
    %134 = arith.addf %133, %132 : vector<8x128xf32>
    %135 = arith.divf %133, %134 : vector<8x128xf32>
    %136 = vector.extract_strided_slice %123 {offsets = [0, 256], sizes = [8, 128], strides = [1, 1]} : vector<8x512xf32> to vector<8x128xf32>
    %137 = math.tanh %136 : vector<8x128xf32>
    %138 = vector.extract_strided_slice %123 {offsets = [0, 384], sizes = [8, 128], strides = [1, 1]} : vector<8x512xf32> to vector<8x128xf32>
    %139 = arith.negf %138 : vector<8x128xf32>
    %140 = math.exp %139 : vector<8x128xf32>
    %cst_48 = arith.constant 1.000000e+00 : f32
    %141 = vector.broadcast %cst_48 : f32 to vector<8x128xf32>
    %142 = arith.addf %141, %140 : vector<8x128xf32>
    %143 = arith.divf %141, %142 : vector<8x128xf32>
    %144 = arith.mulf %135, %111 : vector<8x128xf32>
    %145 = arith.mulf %129, %137 : vector<8x128xf32>
    %146 = arith.addf %144, %145 : vector<8x128xf32>
    %147 = math.tanh %146 : vector<8x128xf32>
    %148 = arith.mulf %143, %147 : vector<8x128xf32>
    %149 = arith.index_cast %117 : i32 to index
    %c0_49 = arith.constant 0 : index
    %150 = vector.load %arg7[%149, %c0_49] : memref<64x128xf32, #tpu.memory_space<vmem>>, vector<8x128xf32>
    tpu.vector_store %arg7[%149, %c0_49], %148 {strides = array<i32>} : memref<64x128xf32, #tpu.memory_space<vmem>>, vector<8x128xf32>,
    %c4_i32 = arith.constant 4 : i32
    %c8_i32_50 = arith.constant 8 : i32
    %151 = arith.muli %c4_i32, %c8_i32_50 : i32
    %152 = tpu.assume_multiple %151, 8 : i32
    %153 = arith.index_cast %152 : i32 to index
    %c0_51 = arith.constant 0 : index
    %154 = vector.load %arg8[%153, %c0_51] : memref<64x512xf32, #tpu.memory_space<vmem>>, vector<8x512xf32>
    %c0_52 = arith.constant 0 : index
    %c0_53 = arith.constant 0 : index
    %c0_54 = arith.constant 0 : index
    %155 = vector.load %arg2[%c0_52, %c0_53, %c0_54] : memref<2x128x512xf32, #tpu.memory_space<vmem>>, vector<1x128x512xf32>
    %156 = vector.shape_cast %155 : vector<1x128x512xf32> to vector<128x512xf32>
    %cst_55 = arith.constant dense<0.000000e+00> : vector<8x512xf32>
    %157 = tpu.matmul %148, %156, %cst_55 {dimension_numbers = #tpu.dot_dimension_numbers<[1], [0], [0], [1], [0, 0, 1, 1], [], []>} : vector<8x128xf32>, vector<128x512xf32>, vector<8x512xf32> -> vector<8x512xf32>
    %158 = arith.addf %154, %157 : vector<8x512xf32>
    %159 = vector.extract_strided_slice %158 {offsets = [0, 0], sizes = [8, 128], strides = [1, 1]} : vector<8x512xf32> to vector<8x128xf32>
    %160 = arith.negf %159 : vector<8x128xf32>
    %161 = math.exp %160 : vector<8x128xf32>
    %cst_56 = arith.constant 1.000000e+00 : f32
    %162 = vector.broadcast %cst_56 : f32 to vector<8x128xf32>
    %163 = arith.addf %162, %161 : vector<8x128xf32>
    %164 = arith.divf %162, %163 : vector<8x128xf32>
    %165 = vector.extract_strided_slice %158 {offsets = [0, 128], sizes = [8, 128], strides = [1, 1]} : vector<8x512xf32> to vector<8x128xf32>
    %166 = arith.negf %165 : vector<8x128xf32>
    %167 = math.exp %166 : vector<8x128xf32>
    %cst_57 = arith.constant 1.000000e+00 : f32
    %168 = vector.broadcast %cst_57 : f32 to vector<8x128xf32>
    %169 = arith.addf %168, %167 : vector<8x128xf32>
    %170 = arith.divf %168, %169 : vector<8x128xf32>
    %171 = vector.extract_strided_slice %158 {offsets = [0, 256], sizes = [8, 128], strides = [1, 1]} : vector<8x512xf32> to vector<8x128xf32>
    %172 = math.tanh %171 : vector<8x128xf32>
    %173 = vector.extract_strided_slice %158 {offsets = [0, 384], sizes = [8, 128], strides = [1, 1]} : vector<8x512xf32> to vector<8x128xf32>
    %174 = arith.negf %173 : vector<8x128xf32>
    %175 = math.exp %174 : vector<8x128xf32>
    %cst_58 = arith.constant 1.000000e+00 : f32
    %176 = vector.broadcast %cst_58 : f32 to vector<8x128xf32>
    %177 = arith.addf %176, %175 : vector<8x128xf32>
    %178 = arith.divf %176, %177 : vector<8x128xf32>
    %179 = arith.mulf %170, %146 : vector<8x128xf32>
    %180 = arith.mulf %164, %172 : vector<8x128xf32>
    %181 = arith.addf %179, %180 : vector<8x128xf32>
    %182 = math.tanh %181 : vector<8x128xf32>
    %183 = arith.mulf %178, %182 : vector<8x128xf32>
    %184 = arith.index_cast %152 : i32 to index
    %c0_59 = arith.constant 0 : index
    %185 = vector.load %arg7[%184, %c0_59] : memref<64x128xf32, #tpu.memory_space<vmem>>, vector<8x128xf32>
    tpu.vector_store %arg7[%184, %c0_59], %183 {strides = array<i32>} : memref<64x128xf32, #tpu.memory_space<vmem>>, vector<8x128xf32>,
    %c5_i32 = arith.constant 5 : i32
    %c8_i32_60 = arith.constant 8 : i32
    %186 = arith.muli %c5_i32, %c8_i32_60 : i32
    %187 = tpu.assume_multiple %186, 8 : i32
    %188 = arith.index_cast %187 : i32 to index
    %c0_61 = arith.constant 0 : index
    %189 = vector.load %arg8[%188, %c0_61] : memref<64x512xf32, #tpu.memory_space<vmem>>, vector<8x512xf32>
    %c0_62 = arith.constant 0 : index
    %c0_63 = arith.constant 0 : index
    %c0_64 = arith.constant 0 : index
    %190 = vector.load %arg2[%c0_62, %c0_63, %c0_64] : memref<2x128x512xf32, #tpu.memory_space<vmem>>, vector<1x128x512xf32>
    %191 = vector.shape_cast %190 : vector<1x128x512xf32> to vector<128x512xf32>
    %cst_65 = arith.constant dense<0.000000e+00> : vector<8x512xf32>
    %192 = tpu.matmul %183, %191, %cst_65 {dimension_numbers = #tpu.dot_dimension_numbers<[1], [0], [0], [1], [0, 0, 1, 1], [], []>} : vector<8x128xf32>, vector<128x512xf32>, vector<8x512xf32> -> vector<8x512xf32>
    %193 = arith.addf %189, %192 : vector<8x512xf32>
    %194 = vector.extract_strided_slice %193 {offsets = [0, 0], sizes = [8, 128], strides = [1, 1]} : vector<8x512xf32> to vector<8x128xf32>
    %195 = arith.negf %194 : vector<8x128xf32>
    %196 = math.exp %195 : vector<8x128xf32>
    %cst_66 = arith.constant 1.000000e+00 : f32
    %197 = vector.broadcast %cst_66 : f32 to vector<8x128xf32>
    %198 = arith.addf %197, %196 : vector<8x128xf32>
    %199 = arith.divf %197, %198 : vector<8x128xf32>
    %200 = vector.extract_strided_slice %193 {offsets = [0, 128], sizes = [8, 128], strides = [1, 1]} : vector<8x512xf32> to vector<8x128xf32>
    %201 = arith.negf %200 : vector<8x128xf32>
    %202 = math.exp %201 : vector<8x128xf32>
    %cst_67 = arith.constant 1.000000e+00 : f32
    %203 = vector.broadcast %cst_67 : f32 to vector<8x128xf32>
    %204 = arith.addf %203, %202 : vector<8x128xf32>
    %205 = arith.divf %203, %204 : vector<8x128xf32>
    %206 = vector.extract_strided_slice %193 {offsets = [0, 256], sizes = [8, 128], strides = [1, 1]} : vector<8x512xf32> to vector<8x128xf32>
    %207 = math.tanh %206 : vector<8x128xf32>
    %208 = vector.extract_strided_slice %193 {offsets = [0, 384], sizes = [8, 128], strides = [1, 1]} : vector<8x512xf32> to vector<8x128xf32>
    %209 = arith.negf %208 : vector<8x128xf32>
    %210 = math.exp %209 : vector<8x128xf32>
    %cst_68 = arith.constant 1.000000e+00 : f32
    %211 = vector.broadcast %cst_68 : f32 to vector<8x128xf32>
    %212 = arith.addf %211, %210 : vector<8x128xf32>
    %213 = arith.divf %211, %212 : vector<8x128xf32>
    %214 = arith.mulf %205, %181 : vector<8x128xf32>
    %215 = arith.mulf %199, %207 : vector<8x128xf32>
    %216 = arith.addf %214, %215 : vector<8x128xf32>
    %217 = math.tanh %216 : vector<8x128xf32>
    %218 = arith.mulf %213, %217 : vector<8x128xf32>
    %219 = arith.index_cast %187 : i32 to index
    %c0_69 = arith.constant 0 : index
    %220 = vector.load %arg7[%219, %c0_69] : memref<64x128xf32, #tpu.memory_space<vmem>>, vector<8x128xf32>
    tpu.vector_store %arg7[%219, %c0_69], %218 {strides = array<i32>} : memref<64x128xf32, #tpu.memory_space<vmem>>, vector<8x128xf32>,
    %c6_i32 = arith.constant 6 : i32
    %c8_i32_70 = arith.constant 8 : i32
    %221 = arith.muli %c6_i32, %c8_i32_70 : i32
    %222 = tpu.assume_multiple %221, 8 : i32
    %223 = arith.index_cast %222 : i32 to index
    %c0_71 = arith.constant 0 : index
    %224 = vector.load %arg8[%223, %c0_71] : memref<64x512xf32, #tpu.memory_space<vmem>>, vector<8x512xf32>
    %c0_72 = arith.constant 0 : index
    %c0_73 = arith.constant 0 : index
    %c0_74 = arith.constant 0 : index
    %225 = vector.load %arg2[%c0_72, %c0_73, %c0_74] : memref<2x128x512xf32, #tpu.memory_space<vmem>>, vector<1x128x512xf32>
    %226 = vector.shape_cast %225 : vector<1x128x512xf32> to vector<128x512xf32>
    %cst_75 = arith.constant dense<0.000000e+00> : vector<8x512xf32>
    %227 = tpu.matmul %218, %226, %cst_75 {dimension_numbers = #tpu.dot_dimension_numbers<[1], [0], [0], [1], [0, 0, 1, 1], [], []>} : vector<8x128xf32>, vector<128x512xf32>, vector<8x512xf32> -> vector<8x512xf32>
    %228 = arith.addf %224, %227 : vector<8x512xf32>
    %229 = vector.extract_strided_slice %228 {offsets = [0, 0], sizes = [8, 128], strides = [1, 1]} : vector<8x512xf32> to vector<8x128xf32>
    %230 = arith.negf %229 : vector<8x128xf32>
    %231 = math.exp %230 : vector<8x128xf32>
    %cst_76 = arith.constant 1.000000e+00 : f32
    %232 = vector.broadcast %cst_76 : f32 to vector<8x128xf32>
    %233 = arith.addf %232, %231 : vector<8x128xf32>
    %234 = arith.divf %232, %233 : vector<8x128xf32>
    %235 = vector.extract_strided_slice %228 {offsets = [0, 128], sizes = [8, 128], strides = [1, 1]} : vector<8x512xf32> to vector<8x128xf32>
    %236 = arith.negf %235 : vector<8x128xf32>
    %237 = math.exp %236 : vector<8x128xf32>
    %cst_77 = arith.constant 1.000000e+00 : f32
    %238 = vector.broadcast %cst_77 : f32 to vector<8x128xf32>
    %239 = arith.addf %238, %237 : vector<8x128xf32>
    %240 = arith.divf %238, %239 : vector<8x128xf32>
    %241 = vector.extract_strided_slice %228 {offsets = [0, 256], sizes = [8, 128], strides = [1, 1]} : vector<8x512xf32> to vector<8x128xf32>
    %242 = math.tanh %241 : vector<8x128xf32>
    %243 = vector.extract_strided_slice %228 {offsets = [0, 384], sizes = [8, 128], strides = [1, 1]} : vector<8x512xf32> to vector<8x128xf32>
    %244 = arith.negf %243 : vector<8x128xf32>
    %245 = math.exp %244 : vector<8x128xf32>
    %cst_78 = arith.constant 1.000000e+00 : f32
    %246 = vector.broadcast %cst_78 : f32 to vector<8x128xf32>
    %247 = arith.addf %246, %245 : vector<8x128xf32>
    %248 = arith.divf %246, %247 : vector<8x128xf32>
    %249 = arith.mulf %240, %216 : vector<8x128xf32>
    %250 = arith.mulf %234, %242 : vector<8x128xf32>
    %251 = arith.addf %249, %250 : vector<8x128xf32>
    %252 = math.tanh %251 : vector<8x128xf32>
    %253 = arith.mulf %248, %252 : vector<8x128xf32>
    %254 = arith.index_cast %222 : i32 to index
    %c0_79 = arith.constant 0 : index
    %255 = vector.load %arg7[%254, %c0_79] : memref<64x128xf32, #tpu.memory_space<vmem>>, vector<8x128xf32>
    tpu.vector_store %arg7[%254, %c0_79], %253 {strides = array<i32>} : memref<64x128xf32, #tpu.memory_space<vmem>>, vector<8x128xf32>,
    %c7_i32 = arith.constant 7 : i32
    %c8_i32_80 = arith.constant 8 : i32
    %256 = arith.muli %c7_i32, %c8_i32_80 : i32
    %257 = tpu.assume_multiple %256, 8 : i32
    %258 = arith.index_cast %257 : i32 to index
    %c0_81 = arith.constant 0 : index
    %259 = vector.load %arg8[%258, %c0_81] : memref<64x512xf32, #tpu.memory_space<vmem>>, vector<8x512xf32>
    %c0_82 = arith.constant 0 : index
    %c0_83 = arith.constant 0 : index
    %c0_84 = arith.constant 0 : index
    %260 = vector.load %arg2[%c0_82, %c0_83, %c0_84] : memref<2x128x512xf32, #tpu.memory_space<vmem>>, vector<1x128x512xf32>
    %261 = vector.shape_cast %260 : vector<1x128x512xf32> to vector<128x512xf32>
    %cst_85 = arith.constant dense<0.000000e+00> : vector<8x512xf32>
    %262 = tpu.matmul %253, %261, %cst_85 {dimension_numbers = #tpu.dot_dimension_numbers<[1], [0], [0], [1], [0, 0, 1, 1], [], []>} : vector<8x128xf32>, vector<128x512xf32>, vector<8x512xf32> -> vector<8x512xf32>
    %263 = arith.addf %259, %262 : vector<8x512xf32>
    %264 = vector.extract_strided_slice %263 {offsets = [0, 0], sizes = [8, 128], strides = [1, 1]} : vector<8x512xf32> to vector<8x128xf32>
    %265 = arith.negf %264 : vector<8x128xf32>
    %266 = math.exp %265 : vector<8x128xf32>
    %cst_86 = arith.constant 1.000000e+00 : f32
    %267 = vector.broadcast %cst_86 : f32 to vector<8x128xf32>
    %268 = arith.addf %267, %266 : vector<8x128xf32>
    %269 = arith.divf %267, %268 : vector<8x128xf32>
    %270 = vector.extract_strided_slice %263 {offsets = [0, 128], sizes = [8, 128], strides = [1, 1]} : vector<8x512xf32> to vector<8x128xf32>
    %271 = arith.negf %270 : vector<8x128xf32>
    %272 = math.exp %271 : vector<8x128xf32>
    %cst_87 = arith.constant 1.000000e+00 : f32
    %273 = vector.broadcast %cst_87 : f32 to vector<8x128xf32>
    %274 = arith.addf %273, %272 : vector<8x128xf32>
    %275 = arith.divf %273, %274 : vector<8x128xf32>
    %276 = vector.extract_strided_slice %263 {offsets = [0, 256], sizes = [8, 128], strides = [1, 1]} : vector<8x512xf32> to vector<8x128xf32>
    %277 = math.tanh %276 : vector<8x128xf32>
    %278 = vector.extract_strided_slice %263 {offsets = [0, 384], sizes = [8, 128], strides = [1, 1]} : vector<8x512xf32> to vector<8x128xf32>
    %279 = arith.negf %278 : vector<8x128xf32>
    %280 = math.exp %279 : vector<8x128xf32>
    %cst_88 = arith.constant 1.000000e+00 : f32
    %281 = vector.broadcast %cst_88 : f32 to vector<8x128xf32>
    %282 = arith.addf %281, %280 : vector<8x128xf32>
    %283 = arith.divf %281, %282 : vector<8x128xf32>
    %284 = arith.mulf %275, %251 : vector<8x128xf32>
    %285 = arith.mulf %269, %277 : vector<8x128xf32>
    %286 = arith.addf %284, %285 : vector<8x128xf32>
    %287 = math.tanh %286 : vector<8x128xf32>
    %288 = arith.mulf %283, %287 : vector<8x128xf32>
    %289 = arith.index_cast %257 : i32 to index
    %c0_89 = arith.constant 0 : index
    %290 = vector.load %arg7[%289, %c0_89] : memref<64x128xf32, #tpu.memory_space<vmem>>, vector<8x128xf32>
    tpu.vector_store %arg7[%289, %c0_89], %288 {strides = array<i32>} : memref<64x128xf32, #tpu.memory_space<vmem>>, vector<8x128xf32>,
    %c8_i32_90 = arith.constant 8 : i32
    %c0_91 = arith.constant 0 : index
    %c0_92 = arith.constant 0 : index
    %291 = vector.load %arg7[%c0_91, %c0_92] : memref<64x128xf32, #tpu.memory_space<vmem>>, vector<64x128xf32>
    %c1 = arith.constant 1 : index
    %c0_93 = arith.constant 0 : index
    %c0_94 = arith.constant 0 : index
    %292 = vector.load %arg1[%c1, %c0_93, %c0_94] : memref<2x128x512xf32, #tpu.memory_space<vmem>>, vector<1x128x512xf32>
    %293 = vector.shape_cast %292 : vector<1x128x512xf32> to vector<128x512xf32>
    %cst_95 = arith.constant dense<0.000000e+00> : vector<64x512xf32>
    %294 = tpu.matmul %291, %293, %cst_95 {dimension_numbers = #tpu.dot_dimension_numbers<[1], [0], [0], [1], [0, 0, 1, 1], [], []>} : vector<64x128xf32>, vector<128x512xf32>, vector<64x512xf32> -> vector<64x512xf32>
    %c1_96 = arith.constant 1 : index
    %c0_97 = arith.constant 0 : index
    %c0_98 = arith.constant 0 : index
    %295 = vector.load %arg3[%c1_96, %c0_97, %c0_98] : memref<2x1x512xf32, #tpu.memory_space<vmem>>, vector<1x1x512xf32>
    %296 = vector.shape_cast %295 : vector<1x1x512xf32> to vector<1x512xf32>
    %297 = vector.broadcast %296 : vector<1x512xf32> to vector<64x512xf32>
    %298 = arith.addf %294, %297 : vector<64x512xf32>
    %c0_99 = arith.constant 0 : index
    %c0_100 = arith.constant 0 : index
    %299 = vector.load %arg8[%c0_99, %c0_100] : memref<64x512xf32, #tpu.memory_space<vmem>>, vector<64x512xf32>
    tpu.vector_store %arg8[%c0_99, %c0_100], %298 {strides = array<i32>} : memref<64x512xf32, #tpu.memory_space<vmem>>, vector<64x512xf32>,
    %cst_101 = arith.constant 0.000000e+00 : f32
    %300 = vector.broadcast %cst_101 : f32 to vector<8x128xf32>
    %cst_102 = arith.constant 0.000000e+00 : f32
    %301 = vector.broadcast %cst_102 : f32 to vector<8x128xf32>
    %c0_i32_103 = arith.constant 0 : i32
    %c8_i32_104 = arith.constant 8 : i32
    %302 = arith.muli %c0_i32_103, %c8_i32_104 : i32
    %303 = tpu.assume_multiple %302, 8 : i32
    %304 = arith.index_cast %303 : i32 to index
    %c0_105 = arith.constant 0 : index
    %305 = vector.load %arg8[%304, %c0_105] : memref<64x512xf32, #tpu.memory_space<vmem>>, vector<8x512xf32>
    %c1_106 = arith.constant 1 : index
    %c0_107 = arith.constant 0 : index
    %c0_108 = arith.constant 0 : index
    %306 = vector.load %arg2[%c1_106, %c0_107, %c0_108] : memref<2x128x512xf32, #tpu.memory_space<vmem>>, vector<1x128x512xf32>
    %307 = vector.shape_cast %306 : vector<1x128x512xf32> to vector<128x512xf32>
    %cst_109 = arith.constant dense<0.000000e+00> : vector<8x512xf32>
    %308 = tpu.matmul %300, %307, %cst_109 {dimension_numbers = #tpu.dot_dimension_numbers<[1], [0], [0], [1], [0, 0, 1, 1], [], []>} : vector<8x128xf32>, vector<128x512xf32>, vector<8x512xf32> -> vector<8x512xf32>
    %309 = arith.addf %305, %308 : vector<8x512xf32>
    %310 = vector.extract_strided_slice %309 {offsets = [0, 0], sizes = [8, 128], strides = [1, 1]} : vector<8x512xf32> to vector<8x128xf32>
    %311 = arith.negf %310 : vector<8x128xf32>
    %312 = math.exp %311 : vector<8x128xf32>
    %cst_110 = arith.constant 1.000000e+00 : f32
    %313 = vector.broadcast %cst_110 : f32 to vector<8x128xf32>
    %314 = arith.addf %313, %312 : vector<8x128xf32>
    %315 = arith.divf %313, %314 : vector<8x128xf32>
    %316 = vector.extract_strided_slice %309 {offsets = [0, 128], sizes = [8, 128], strides = [1, 1]} : vector<8x512xf32> to vector<8x128xf32>
    %317 = arith.negf %316 : vector<8x128xf32>
    %318 = math.exp %317 : vector<8x128xf32>
    %cst_111 = arith.constant 1.000000e+00 : f32
    %319 = vector.broadcast %cst_111 : f32 to vector<8x128xf32>
    %320 = arith.addf %319, %318 : vector<8x128xf32>
    %321 = arith.divf %319, %320 : vector<8x128xf32>
    %322 = vector.extract_strided_slice %309 {offsets = [0, 256], sizes = [8, 128], strides = [1, 1]} : vector<8x512xf32> to vector<8x128xf32>
    %323 = math.tanh %322 : vector<8x128xf32>
    %324 = vector.extract_strided_slice %309 {offsets = [0, 384], sizes = [8, 128], strides = [1, 1]} : vector<8x512xf32> to vector<8x128xf32>
    %325 = arith.negf %324 : vector<8x128xf32>
    %326 = math.exp %325 : vector<8x128xf32>
    %cst_112 = arith.constant 1.000000e+00 : f32
    %327 = vector.broadcast %cst_112 : f32 to vector<8x128xf32>
    %328 = arith.addf %327, %326 : vector<8x128xf32>
    %329 = arith.divf %327, %328 : vector<8x128xf32>
    %330 = arith.mulf %321, %301 : vector<8x128xf32>
    %331 = arith.mulf %315, %323 : vector<8x128xf32>
    %332 = arith.addf %330, %331 : vector<8x128xf32>
    %333 = math.tanh %332 : vector<8x128xf32>
    %334 = arith.mulf %329, %333 : vector<8x128xf32>
    %c1_i32_113 = arith.constant 1 : i32
    %c8_i32_114 = arith.constant 8 : i32
    %335 = arith.muli %c1_i32_113, %c8_i32_114 : i32
    %336 = tpu.assume_multiple %335, 8 : i32
    %337 = arith.index_cast %336 : i32 to index
    %c0_115 = arith.constant 0 : index
    %338 = vector.load %arg8[%337, %c0_115] : memref<64x512xf32, #tpu.memory_space<vmem>>, vector<8x512xf32>
    %c1_116 = arith.constant 1 : index
    %c0_117 = arith.constant 0 : index
    %c0_118 = arith.constant 0 : index
    %339 = vector.load %arg2[%c1_116, %c0_117, %c0_118] : memref<2x128x512xf32, #tpu.memory_space<vmem>>, vector<1x128x512xf32>
    %340 = vector.shape_cast %339 : vector<1x128x512xf32> to vector<128x512xf32>
    %cst_119 = arith.constant dense<0.000000e+00> : vector<8x512xf32>
    %341 = tpu.matmul %334, %340, %cst_119 {dimension_numbers = #tpu.dot_dimension_numbers<[1], [0], [0], [1], [0, 0, 1, 1], [], []>} : vector<8x128xf32>, vector<128x512xf32>, vector<8x512xf32> -> vector<8x512xf32>
    %342 = arith.addf %338, %341 : vector<8x512xf32>
    %343 = vector.extract_strided_slice %342 {offsets = [0, 0], sizes = [8, 128], strides = [1, 1]} : vector<8x512xf32> to vector<8x128xf32>
    %344 = arith.negf %343 : vector<8x128xf32>
    %345 = math.exp %344 : vector<8x128xf32>
    %cst_120 = arith.constant 1.000000e+00 : f32
    %346 = vector.broadcast %cst_120 : f32 to vector<8x128xf32>
    %347 = arith.addf %346, %345 : vector<8x128xf32>
    %348 = arith.divf %346, %347 : vector<8x128xf32>
    %349 = vector.extract_strided_slice %342 {offsets = [0, 128], sizes = [8, 128], strides = [1, 1]} : vector<8x512xf32> to vector<8x128xf32>
    %350 = arith.negf %349 : vector<8x128xf32>
    %351 = math.exp %350 : vector<8x128xf32>
    %cst_121 = arith.constant 1.000000e+00 : f32
    %352 = vector.broadcast %cst_121 : f32 to vector<8x128xf32>
    %353 = arith.addf %352, %351 : vector<8x128xf32>
    %354 = arith.divf %352, %353 : vector<8x128xf32>
    %355 = vector.extract_strided_slice %342 {offsets = [0, 256], sizes = [8, 128], strides = [1, 1]} : vector<8x512xf32> to vector<8x128xf32>
    %356 = math.tanh %355 : vector<8x128xf32>
    %357 = vector.extract_strided_slice %342 {offsets = [0, 384], sizes = [8, 128], strides = [1, 1]} : vector<8x512xf32> to vector<8x128xf32>
    %358 = arith.negf %357 : vector<8x128xf32>
    %359 = math.exp %358 : vector<8x128xf32>
    %cst_122 = arith.constant 1.000000e+00 : f32
    %360 = vector.broadcast %cst_122 : f32 to vector<8x128xf32>
    %361 = arith.addf %360, %359 : vector<8x128xf32>
    %362 = arith.divf %360, %361 : vector<8x128xf32>
    %363 = arith.mulf %354, %332 : vector<8x128xf32>
    %364 = arith.mulf %348, %356 : vector<8x128xf32>
    %365 = arith.addf %363, %364 : vector<8x128xf32>
    %366 = math.tanh %365 : vector<8x128xf32>
    %367 = arith.mulf %362, %366 : vector<8x128xf32>
    %c2_i32_123 = arith.constant 2 : i32
    %c8_i32_124 = arith.constant 8 : i32
    %368 = arith.muli %c2_i32_123, %c8_i32_124 : i32
    %369 = tpu.assume_multiple %368, 8 : i32
    %370 = arith.index_cast %369 : i32 to index
    %c0_125 = arith.constant 0 : index
    %371 = vector.load %arg8[%370, %c0_125] : memref<64x512xf32, #tpu.memory_space<vmem>>, vector<8x512xf32>
    %c1_126 = arith.constant 1 : index
    %c0_127 = arith.constant 0 : index
    %c0_128 = arith.constant 0 : index
    %372 = vector.load %arg2[%c1_126, %c0_127, %c0_128] : memref<2x128x512xf32, #tpu.memory_space<vmem>>, vector<1x128x512xf32>
    %373 = vector.shape_cast %372 : vector<1x128x512xf32> to vector<128x512xf32>
    %cst_129 = arith.constant dense<0.000000e+00> : vector<8x512xf32>
    %374 = tpu.matmul %367, %373, %cst_129 {dimension_numbers = #tpu.dot_dimension_numbers<[1], [0], [0], [1], [0, 0, 1, 1], [], []>} : vector<8x128xf32>, vector<128x512xf32>, vector<8x512xf32> -> vector<8x512xf32>
    %375 = arith.addf %371, %374 : vector<8x512xf32>
    %376 = vector.extract_strided_slice %375 {offsets = [0, 0], sizes = [8, 128], strides = [1, 1]} : vector<8x512xf32> to vector<8x128xf32>
    %377 = arith.negf %376 : vector<8x128xf32>
    %378 = math.exp %377 : vector<8x128xf32>
    %cst_130 = arith.constant 1.000000e+00 : f32
    %379 = vector.broadcast %cst_130 : f32 to vector<8x128xf32>
    %380 = arith.addf %379, %378 : vector<8x128xf32>
    %381 = arith.divf %379, %380 : vector<8x128xf32>
    %382 = vector.extract_strided_slice %375 {offsets = [0, 128], sizes = [8, 128], strides = [1, 1]} : vector<8x512xf32> to vector<8x128xf32>
    %383 = arith.negf %382 : vector<8x128xf32>
    %384 = math.exp %383 : vector<8x128xf32>
    %cst_131 = arith.constant 1.000000e+00 : f32
    %385 = vector.broadcast %cst_131 : f32 to vector<8x128xf32>
    %386 = arith.addf %385, %384 : vector<8x128xf32>
    %387 = arith.divf %385, %386 : vector<8x128xf32>
    %388 = vector.extract_strided_slice %375 {offsets = [0, 256], sizes = [8, 128], strides = [1, 1]} : vector<8x512xf32> to vector<8x128xf32>
    %389 = math.tanh %388 : vector<8x128xf32>
    %390 = vector.extract_strided_slice %375 {offsets = [0, 384], sizes = [8, 128], strides = [1, 1]} : vector<8x512xf32> to vector<8x128xf32>
    %391 = arith.negf %390 : vector<8x128xf32>
    %392 = math.exp %391 : vector<8x128xf32>
    %cst_132 = arith.constant 1.000000e+00 : f32
    %393 = vector.broadcast %cst_132 : f32 to vector<8x128xf32>
    %394 = arith.addf %393, %392 : vector<8x128xf32>
    %395 = arith.divf %393, %394 : vector<8x128xf32>
    %396 = arith.mulf %387, %365 : vector<8x128xf32>
    %397 = arith.mulf %381, %389 : vector<8x128xf32>
    %398 = arith.addf %396, %397 : vector<8x128xf32>
    %399 = math.tanh %398 : vector<8x128xf32>
    %400 = arith.mulf %395, %399 : vector<8x128xf32>
    %c3_i32_133 = arith.constant 3 : i32
    %c8_i32_134 = arith.constant 8 : i32
    %401 = arith.muli %c3_i32_133, %c8_i32_134 : i32
    %402 = tpu.assume_multiple %401, 8 : i32
    %403 = arith.index_cast %402 : i32 to index
    %c0_135 = arith.constant 0 : index
    %404 = vector.load %arg8[%403, %c0_135] : memref<64x512xf32, #tpu.memory_space<vmem>>, vector<8x512xf32>
    %c1_136 = arith.constant 1 : index
    %c0_137 = arith.constant 0 : index
    %c0_138 = arith.constant 0 : index
    %405 = vector.load %arg2[%c1_136, %c0_137, %c0_138] : memref<2x128x512xf32, #tpu.memory_space<vmem>>, vector<1x128x512xf32>
    %406 = vector.shape_cast %405 : vector<1x128x512xf32> to vector<128x512xf32>
    %cst_139 = arith.constant dense<0.000000e+00> : vector<8x512xf32>
    %407 = tpu.matmul %400, %406, %cst_139 {dimension_numbers = #tpu.dot_dimension_numbers<[1], [0], [0], [1], [0, 0, 1, 1], [], []>} : vector<8x128xf32>, vector<128x512xf32>, vector<8x512xf32> -> vector<8x512xf32>
    %408 = arith.addf %404, %407 : vector<8x512xf32>
    %409 = vector.extract_strided_slice %408 {offsets = [0, 0], sizes = [8, 128], strides = [1, 1]} : vector<8x512xf32> to vector<8x128xf32>
    %410 = arith.negf %409 : vector<8x128xf32>
    %411 = math.exp %410 : vector<8x128xf32>
    %cst_140 = arith.constant 1.000000e+00 : f32
    %412 = vector.broadcast %cst_140 : f32 to vector<8x128xf32>
    %413 = arith.addf %412, %411 : vector<8x128xf32>
    %414 = arith.divf %412, %413 : vector<8x128xf32>
    %415 = vector.extract_strided_slice %408 {offsets = [0, 128], sizes = [8, 128], strides = [1, 1]} : vector<8x512xf32> to vector<8x128xf32>
    %416 = arith.negf %415 : vector<8x128xf32>
    %417 = math.exp %416 : vector<8x128xf32>
    %cst_141 = arith.constant 1.000000e+00 : f32
    %418 = vector.broadcast %cst_141 : f32 to vector<8x128xf32>
    %419 = arith.addf %418, %417 : vector<8x128xf32>
    %420 = arith.divf %418, %419 : vector<8x128xf32>
    %421 = vector.extract_strided_slice %408 {offsets = [0, 256], sizes = [8, 128], strides = [1, 1]} : vector<8x512xf32> to vector<8x128xf32>
    %422 = math.tanh %421 : vector<8x128xf32>
    %423 = vector.extract_strided_slice %408 {offsets = [0, 384], sizes = [8, 128], strides = [1, 1]} : vector<8x512xf32> to vector<8x128xf32>
    %424 = arith.negf %423 : vector<8x128xf32>
    %425 = math.exp %424 : vector<8x128xf32>
    %cst_142 = arith.constant 1.000000e+00 : f32
    %426 = vector.broadcast %cst_142 : f32 to vector<8x128xf32>
    %427 = arith.addf %426, %425 : vector<8x128xf32>
    %428 = arith.divf %426, %427 : vector<8x128xf32>
    %429 = arith.mulf %420, %398 : vector<8x128xf32>
    %430 = arith.mulf %414, %422 : vector<8x128xf32>
    %431 = arith.addf %429, %430 : vector<8x128xf32>
    %432 = math.tanh %431 : vector<8x128xf32>
    %433 = arith.mulf %428, %432 : vector<8x128xf32>
    %c4_i32_143 = arith.constant 4 : i32
    %c8_i32_144 = arith.constant 8 : i32
    %434 = arith.muli %c4_i32_143, %c8_i32_144 : i32
    %435 = tpu.assume_multiple %434, 8 : i32
    %436 = arith.index_cast %435 : i32 to index
    %c0_145 = arith.constant 0 : index
    %437 = vector.load %arg8[%436, %c0_145] : memref<64x512xf32, #tpu.memory_space<vmem>>, vector<8x512xf32>
    %c1_146 = arith.constant 1 : index
    %c0_147 = arith.constant 0 : index
    %c0_148 = arith.constant 0 : index
    %438 = vector.load %arg2[%c1_146, %c0_147, %c0_148] : memref<2x128x512xf32, #tpu.memory_space<vmem>>, vector<1x128x512xf32>
    %439 = vector.shape_cast %438 : vector<1x128x512xf32> to vector<128x512xf32>
    %cst_149 = arith.constant dense<0.000000e+00> : vector<8x512xf32>
    %440 = tpu.matmul %433, %439, %cst_149 {dimension_numbers = #tpu.dot_dimension_numbers<[1], [0], [0], [1], [0, 0, 1, 1], [], []>} : vector<8x128xf32>, vector<128x512xf32>, vector<8x512xf32> -> vector<8x512xf32>
    %441 = arith.addf %437, %440 : vector<8x512xf32>
    %442 = vector.extract_strided_slice %441 {offsets = [0, 0], sizes = [8, 128], strides = [1, 1]} : vector<8x512xf32> to vector<8x128xf32>
    %443 = arith.negf %442 : vector<8x128xf32>
    %444 = math.exp %443 : vector<8x128xf32>
    %cst_150 = arith.constant 1.000000e+00 : f32
    %445 = vector.broadcast %cst_150 : f32 to vector<8x128xf32>
    %446 = arith.addf %445, %444 : vector<8x128xf32>
    %447 = arith.divf %445, %446 : vector<8x128xf32>
    %448 = vector.extract_strided_slice %441 {offsets = [0, 128], sizes = [8, 128], strides = [1, 1]} : vector<8x512xf32> to vector<8x128xf32>
    %449 = arith.negf %448 : vector<8x128xf32>
    %450 = math.exp %449 : vector<8x128xf32>
    %cst_151 = arith.constant 1.000000e+00 : f32
    %451 = vector.broadcast %cst_151 : f32 to vector<8x128xf32>
    %452 = arith.addf %451, %450 : vector<8x128xf32>
    %453 = arith.divf %451, %452 : vector<8x128xf32>
    %454 = vector.extract_strided_slice %441 {offsets = [0, 256], sizes = [8, 128], strides = [1, 1]} : vector<8x512xf32> to vector<8x128xf32>
    %455 = math.tanh %454 : vector<8x128xf32>
    %456 = vector.extract_strided_slice %441 {offsets = [0, 384], sizes = [8, 128], strides = [1, 1]} : vector<8x512xf32> to vector<8x128xf32>
    %457 = arith.negf %456 : vector<8x128xf32>
    %458 = math.exp %457 : vector<8x128xf32>
    %cst_152 = arith.constant 1.000000e+00 : f32
    %459 = vector.broadcast %cst_152 : f32 to vector<8x128xf32>
    %460 = arith.addf %459, %458 : vector<8x128xf32>
    %461 = arith.divf %459, %460 : vector<8x128xf32>
    %462 = arith.mulf %453, %431 : vector<8x128xf32>
    %463 = arith.mulf %447, %455 : vector<8x128xf32>
    %464 = arith.addf %462, %463 : vector<8x128xf32>
    %465 = math.tanh %464 : vector<8x128xf32>
    %466 = arith.mulf %461, %465 : vector<8x128xf32>
    %c5_i32_153 = arith.constant 5 : i32
    %c8_i32_154 = arith.constant 8 : i32
    %467 = arith.muli %c5_i32_153, %c8_i32_154 : i32
    %468 = tpu.assume_multiple %467, 8 : i32
    %469 = arith.index_cast %468 : i32 to index
    %c0_155 = arith.constant 0 : index
    %470 = vector.load %arg8[%469, %c0_155] : memref<64x512xf32, #tpu.memory_space<vmem>>, vector<8x512xf32>
    %c1_156 = arith.constant 1 : index
    %c0_157 = arith.constant 0 : index
    %c0_158 = arith.constant 0 : index
    %471 = vector.load %arg2[%c1_156, %c0_157, %c0_158] : memref<2x128x512xf32, #tpu.memory_space<vmem>>, vector<1x128x512xf32>
    %472 = vector.shape_cast %471 : vector<1x128x512xf32> to vector<128x512xf32>
    %cst_159 = arith.constant dense<0.000000e+00> : vector<8x512xf32>
    %473 = tpu.matmul %466, %472, %cst_159 {dimension_numbers = #tpu.dot_dimension_numbers<[1], [0], [0], [1], [0, 0, 1, 1], [], []>} : vector<8x128xf32>, vector<128x512xf32>, vector<8x512xf32> -> vector<8x512xf32>
    %474 = arith.addf %470, %473 : vector<8x512xf32>
    %475 = vector.extract_strided_slice %474 {offsets = [0, 0], sizes = [8, 128], strides = [1, 1]} : vector<8x512xf32> to vector<8x128xf32>
    %476 = arith.negf %475 : vector<8x128xf32>
    %477 = math.exp %476 : vector<8x128xf32>
    %cst_160 = arith.constant 1.000000e+00 : f32
    %478 = vector.broadcast %cst_160 : f32 to vector<8x128xf32>
    %479 = arith.addf %478, %477 : vector<8x128xf32>
    %480 = arith.divf %478, %479 : vector<8x128xf32>
    %481 = vector.extract_strided_slice %474 {offsets = [0, 128], sizes = [8, 128], strides = [1, 1]} : vector<8x512xf32> to vector<8x128xf32>
    %482 = arith.negf %481 : vector<8x128xf32>
    %483 = math.exp %482 : vector<8x128xf32>
    %cst_161 = arith.constant 1.000000e+00 : f32
    %484 = vector.broadcast %cst_161 : f32 to vector<8x128xf32>
    %485 = arith.addf %484, %483 : vector<8x128xf32>
    %486 = arith.divf %484, %485 : vector<8x128xf32>
    %487 = vector.extract_strided_slice %474 {offsets = [0, 256], sizes = [8, 128], strides = [1, 1]} : vector<8x512xf32> to vector<8x128xf32>
    %488 = math.tanh %487 : vector<8x128xf32>
    %489 = vector.extract_strided_slice %474 {offsets = [0, 384], sizes = [8, 128], strides = [1, 1]} : vector<8x512xf32> to vector<8x128xf32>
    %490 = arith.negf %489 : vector<8x128xf32>
    %491 = math.exp %490 : vector<8x128xf32>
    %cst_162 = arith.constant 1.000000e+00 : f32
    %492 = vector.broadcast %cst_162 : f32 to vector<8x128xf32>
    %493 = arith.addf %492, %491 : vector<8x128xf32>
    %494 = arith.divf %492, %493 : vector<8x128xf32>
    %495 = arith.mulf %486, %464 : vector<8x128xf32>
    %496 = arith.mulf %480, %488 : vector<8x128xf32>
    %497 = arith.addf %495, %496 : vector<8x128xf32>
    %498 = math.tanh %497 : vector<8x128xf32>
    %499 = arith.mulf %494, %498 : vector<8x128xf32>
    %c6_i32_163 = arith.constant 6 : i32
    %c8_i32_164 = arith.constant 8 : i32
    %500 = arith.muli %c6_i32_163, %c8_i32_164 : i32
    %501 = tpu.assume_multiple %500, 8 : i32
    %502 = arith.index_cast %501 : i32 to index
    %c0_165 = arith.constant 0 : index
    %503 = vector.load %arg8[%502, %c0_165] : memref<64x512xf32, #tpu.memory_space<vmem>>, vector<8x512xf32>
    %c1_166 = arith.constant 1 : index
    %c0_167 = arith.constant 0 : index
    %c0_168 = arith.constant 0 : index
    %504 = vector.load %arg2[%c1_166, %c0_167, %c0_168] : memref<2x128x512xf32, #tpu.memory_space<vmem>>, vector<1x128x512xf32>
    %505 = vector.shape_cast %504 : vector<1x128x512xf32> to vector<128x512xf32>
    %cst_169 = arith.constant dense<0.000000e+00> : vector<8x512xf32>
    %506 = tpu.matmul %499, %505, %cst_169 {dimension_numbers = #tpu.dot_dimension_numbers<[1], [0], [0], [1], [0, 0, 1, 1], [], []>} : vector<8x128xf32>, vector<128x512xf32>, vector<8x512xf32> -> vector<8x512xf32>
    %507 = arith.addf %503, %506 : vector<8x512xf32>
    %508 = vector.extract_strided_slice %507 {offsets = [0, 0], sizes = [8, 128], strides = [1, 1]} : vector<8x512xf32> to vector<8x128xf32>
    %509 = arith.negf %508 : vector<8x128xf32>
    %510 = math.exp %509 : vector<8x128xf32>
    %cst_170 = arith.constant 1.000000e+00 : f32
    %511 = vector.broadcast %cst_170 : f32 to vector<8x128xf32>
    %512 = arith.addf %511, %510 : vector<8x128xf32>
    %513 = arith.divf %511, %512 : vector<8x128xf32>
    %514 = vector.extract_strided_slice %507 {offsets = [0, 128], sizes = [8, 128], strides = [1, 1]} : vector<8x512xf32> to vector<8x128xf32>
    %515 = arith.negf %514 : vector<8x128xf32>
    %516 = math.exp %515 : vector<8x128xf32>
    %cst_171 = arith.constant 1.000000e+00 : f32
    %517 = vector.broadcast %cst_171 : f32 to vector<8x128xf32>
    %518 = arith.addf %517, %516 : vector<8x128xf32>
    %519 = arith.divf %517, %518 : vector<8x128xf32>
    %520 = vector.extract_strided_slice %507 {offsets = [0, 256], sizes = [8, 128], strides = [1, 1]} : vector<8x512xf32> to vector<8x128xf32>
    %521 = math.tanh %520 : vector<8x128xf32>
    %522 = vector.extract_strided_slice %507 {offsets = [0, 384], sizes = [8, 128], strides = [1, 1]} : vector<8x512xf32> to vector<8x128xf32>
    %523 = arith.negf %522 : vector<8x128xf32>
    %524 = math.exp %523 : vector<8x128xf32>
    %cst_172 = arith.constant 1.000000e+00 : f32
    %525 = vector.broadcast %cst_172 : f32 to vector<8x128xf32>
    %526 = arith.addf %525, %524 : vector<8x128xf32>
    %527 = arith.divf %525, %526 : vector<8x128xf32>
    %528 = arith.mulf %519, %497 : vector<8x128xf32>
    %529 = arith.mulf %513, %521 : vector<8x128xf32>
    %530 = arith.addf %528, %529 : vector<8x128xf32>
    %531 = math.tanh %530 : vector<8x128xf32>
    %532 = arith.mulf %527, %531 : vector<8x128xf32>
    %c7_i32_173 = arith.constant 7 : i32
    %c8_i32_174 = arith.constant 8 : i32
    %533 = arith.muli %c7_i32_173, %c8_i32_174 : i32
    %534 = tpu.assume_multiple %533, 8 : i32
    %535 = arith.index_cast %534 : i32 to index
    %c0_175 = arith.constant 0 : index
    %536 = vector.load %arg8[%535, %c0_175] : memref<64x512xf32, #tpu.memory_space<vmem>>, vector<8x512xf32>
    %c1_176 = arith.constant 1 : index
    %c0_177 = arith.constant 0 : index
    %c0_178 = arith.constant 0 : index
    %537 = vector.load %arg2[%c1_176, %c0_177, %c0_178] : memref<2x128x512xf32, #tpu.memory_space<vmem>>, vector<1x128x512xf32>
    %538 = vector.shape_cast %537 : vector<1x128x512xf32> to vector<128x512xf32>
    %cst_179 = arith.constant dense<0.000000e+00> : vector<8x512xf32>
    %539 = tpu.matmul %532, %538, %cst_179 {dimension_numbers = #tpu.dot_dimension_numbers<[1], [0], [0], [1], [0, 0, 1, 1], [], []>} : vector<8x128xf32>, vector<128x512xf32>, vector<8x512xf32> -> vector<8x512xf32>
    %540 = arith.addf %536, %539 : vector<8x512xf32>
    %541 = vector.extract_strided_slice %540 {offsets = [0, 0], sizes = [8, 128], strides = [1, 1]} : vector<8x512xf32> to vector<8x128xf32>
    %542 = arith.negf %541 : vector<8x128xf32>
    %543 = math.exp %542 : vector<8x128xf32>
    %cst_180 = arith.constant 1.000000e+00 : f32
    %544 = vector.broadcast %cst_180 : f32 to vector<8x128xf32>
    %545 = arith.addf %544, %543 : vector<8x128xf32>
    %546 = arith.divf %544, %545 : vector<8x128xf32>
    %547 = vector.extract_strided_slice %540 {offsets = [0, 128], sizes = [8, 128], strides = [1, 1]} : vector<8x512xf32> to vector<8x128xf32>
    %548 = arith.negf %547 : vector<8x128xf32>
    %549 = math.exp %548 : vector<8x128xf32>
    %cst_181 = arith.constant 1.000000e+00 : f32
    %550 = vector.broadcast %cst_181 : f32 to vector<8x128xf32>
    %551 = arith.addf %550, %549 : vector<8x128xf32>
    %552 = arith.divf %550, %551 : vector<8x128xf32>
    %553 = vector.extract_strided_slice %540 {offsets = [0, 256], sizes = [8, 128], strides = [1, 1]} : vector<8x512xf32> to vector<8x128xf32>
    %554 = math.tanh %553 : vector<8x128xf32>
    %555 = vector.extract_strided_slice %540 {offsets = [0, 384], sizes = [8, 128], strides = [1, 1]} : vector<8x512xf32> to vector<8x128xf32>
    %556 = arith.negf %555 : vector<8x128xf32>
    %557 = math.exp %556 : vector<8x128xf32>
    %cst_182 = arith.constant 1.000000e+00 : f32
    %558 = vector.broadcast %cst_182 : f32 to vector<8x128xf32>
    %559 = arith.addf %558, %557 : vector<8x128xf32>
    %560 = arith.divf %558, %559 : vector<8x128xf32>
    %561 = arith.mulf %552, %530 : vector<8x128xf32>
    %562 = arith.mulf %546, %554 : vector<8x128xf32>
    %563 = arith.addf %561, %562 : vector<8x128xf32>
    %564 = math.tanh %563 : vector<8x128xf32>
    %565 = arith.mulf %560, %564 : vector<8x128xf32>
    %c8_i32_183 = arith.constant 8 : i32
    %c0_184 = arith.constant 0 : index
    %c0_185 = arith.constant 0 : index
    %566 = vector.load %arg4[%c0_184, %c0_185] : memref<1x128xf32, #tpu.memory_space<vmem>>, vector<1x128xf32>
    %567 = vector.broadcast %566 : vector<1x128xf32> to vector<8x128xf32>
    %568 = arith.mulf %565, %567 : vector<8x128xf32>
    %cst_186 = arith.constant dense<0.000000e+00> : vector<8xf32>
    %569 = vector.multi_reduction <add>, %568, %cst_186 [1] : vector<8x128xf32> to vector<8xf32>
    %570 = vector.shape_cast %569 : vector<8xf32> to vector<8x1xf32>
    %c0_187 = arith.constant 0 : index
    %c0_188 = arith.constant 0 : index
    %571 = vector.load %arg5[%c0_187, %c0_188] : memref<1x1xf32, #tpu.memory_space<vmem>>, vector<1x1xf32>
    %572 = vector.broadcast %571 : vector<1x1xf32> to vector<8x1xf32>
    %573 = arith.addf %570, %572 : vector<8x1xf32>
    %574 = vector.shape_cast %573 : vector<8x1xf32> to vector<8x1xf32>
    %575 = vector.broadcast %574 : vector<8x1xf32> to vector<8x128xf32>
    %c0_189 = arith.constant 0 : index
    %c0_190 = arith.constant 0 : index
    %576 = vector.load %arg6[%c0_189, %c0_190] : memref<8x128xf32, #tpu.memory_space<vmem>>, vector<8x128xf32>
    tpu.vector_store %arg6[%c0_189, %c0_190], %575 {strides = array<i32>} : memref<8x128xf32, #tpu.memory_space<vmem>>, vector<8x128xf32>,
    return
  }
}

</mosaic_0001>

<llo_original>
// kernel: multivariate_lstm_forward.1
$region0: #{multivariate_lstm_forward.1}
  #allocation0 [shape = 'u32[]', space=smem, size = 0x4, offset = 0x4, fixed_abs, tag = 'smem constant byte address 0x4 - core index']
  #allocation1 [shape = 'u32[144,128]{1,0:T(1,128)}', space=vmem, size = 0x12000, scoped, tag = 'internal scratch']
  #allocation2 [shape = 'f32[64,128]{1,0:T(8,128)}', space=vmem, size = 0x8000, scoped, tag = 'scratch operand']
  #allocation3 [shape = 'f32[64,512]{1,0:T(8,128)}', space=vmem, size = 0x20000, scoped, tag = 'scratch operand']
  #allocation4 [shape = 'f32[1,1]{1,0:T(1,128)S(1)}', space=vmem, size = 0x200, scoped, tag = 'scoped memory for multivariate_lstm_forward.1']
  %s0 = inlined_call_operand.vmem [shape: f32[64,128], index: 0, kind: input, shape index: {}]
  %s1 = inlined_call_operand.hbm [shape: f32[2,128,512], index: 1, kind: input, shape index: {}]
  %s2 = inlined_call_operand.hbm [shape: f32[2,128,512], index: 2, kind: input, shape index: {}]
  %s3 = inlined_call_operand.vmem [shape: f32[2,1,512], index: 3, kind: input, shape index: {}]
  %s4 = inlined_call_operand.vmem [shape: f32[1,128], index: 4, kind: input, shape index: {}]
  %s5 = inlined_call_operand.<no memory space> [shape: f32[1,1], index: 5, kind: input, shape index: {}]
  %s6 = inlined_call_operand.vmem [shape: f32[8,128], index: 6, kind: output, shape index: {}]
  %s7 = sld [smem:[#allocation0]]
  $region42: #{multivariate_lstm_forward.1} parent=0
    _
  %s9 = ssub.s32 1, %s7
  %s10 = scalar_select 0, %s9, %s7
  %v11 = vstv %s5
  %12 = vst [vmem:[#allocation4] sm:$0x1] %v11
  $region1: #{multivariate_lstm_forward.1} parent=0
    #allocation5 [shape = 'u8[524288]{0}', space=vmem, size = 0x80000, scoped, tag = 'input window, operand 1, single buffered']
    #allocation6 [shape = 's32[1]{0}', space=sflag, size = 0x4, scoped, tag = 'scoped memory for multivariate_lstm_forward.1']
    #allocation7 [shape = 'u8[524288]{0}', space=vmem, size = 0x80000, scoped, tag = 'input window, operand 2, single buffered']
    #allocation8 [shape = 's32[1]{0}', space=sflag, size = 0x4, scoped, tag = 'scoped memory for multivariate_lstm_forward.1']
    %13 = vsyncpa [#allocation6], 0
    %14 = vsyncpa [#allocation8], 0
    // Predicated region
    $region2: #{multivariate_lstm_forward.1} parent=1 // pred_check
      _
    $region3: #{multivariate_lstm_forward.1} parent=1 // pred_check_branch
      %16 = sbr.rel (0) target = $region5
    $region4: #{multivariate_lstm_forward.1} parent=1 // pred_region
      _
    $region5: #{multivariate_lstm_forward.1} parent=1 // pred_fallthru
      _
    // Predicated region
    $region6: #{multivariate_lstm_forward.1} parent=1 // pred_check
      _
    $region7: #{multivariate_lstm_forward.1} parent=1 // pred_check_branch
      %18 = sbr.rel (0) target = $region9
    $region8: #{multivariate_lstm_forward.1} parent=1 // pred_region
      %s20 = ssub.s32 16384, 16384
      %21 = vsyncadd [#allocation6], %s20
      %s22 = sshll.u32 [#allocation5], 4
      %s23 = int_to_ptr.vmem [resolvable:$true] %s22
      %28 = dma.hbm_to_vmem [thread:$0]  %s1, 16384, %s23, [#allocation6], 512, 512, 32
    $region9: #{multivariate_lstm_forward.1} parent=1 // pred_fallthru
      _
    // Predicated region
    $region10: #{multivariate_lstm_forward.1} parent=1 // pred_check
      _
    $region11: #{multivariate_lstm_forward.1} parent=1 // pred_check_branch
      %30 = sbr.rel (0) target = $region13
    $region12: #{multivariate_lstm_forward.1} parent=1 // pred_region
      %s32 = ssub.s32 16384, 16384
      %33 = vsyncadd [#allocation8], %s32
      %s34 = sshll.u32 [#allocation7], 4
      %s35 = int_to_ptr.vmem [resolvable:$true] %s34
      %40 = dma.hbm_to_vmem [thread:$0]  %s2, 16384, %s35, [#allocation8], 512, 512, 32
    $region13: #{multivariate_lstm_forward.1} parent=1 // pred_fallthru
      _
    // Predicated region
    $region14: #{multivariate_lstm_forward.1} parent=1 // pred_check
      _
    $region15: #{multivariate_lstm_forward.1} parent=1 // pred_check_branch
      %42 = sbr.rel (0) target = $region17
    $region16: #{multivariate_lstm_forward.1} parent=1 // pred_region
      _
    $region17: #{multivariate_lstm_forward.1} parent=1 // pred_fallthru
      _
    // Predicated region
    $region18: #{multivariate_lstm_forward.1} parent=1 // pred_check
      _
    $region19: #{multivariate_lstm_forward.1} parent=1 // pred_check_branch
      %44 = sbr.rel (0) target = $region21
    $region20: #{multivariate_lstm_forward.1} parent=1 // pred_region
      _
    $region21: #{multivariate_lstm_forward.1} parent=1 // pred_fallthru
      _
    // Predicated region
    $region22: #{multivariate_lstm_forward.1} parent=1 // pred_check
      _
    $region23: #{multivariate_lstm_forward.1} parent=1 // pred_check_branch
      %46 = sbr.rel (0) target = $region25
    $region24: #{multivariate_lstm_forward.1} parent=1 // pred_region
      _
    $region25: #{multivariate_lstm_forward.1} parent=1 // pred_fallthru
      _
    // Predicated region
    $region26: #{multivariate_lstm_forward.1} parent=1 // pred_check
      _
    $region27: #{multivariate_lstm_forward.1} parent=1 // pred_check_branch
      %48 = sbr.rel (0) target = $region29
    $region28: #{multivariate_lstm_forward.1} parent=1 // pred_region
      %49 = dma.done [#allocation6], 16384
    $region29: #{multivariate_lstm_forward.1} parent=1 // pred_fallthru
      _
    // Predicated region
    $region30: #{multivariate_lstm_forward.1} parent=1 // pred_check
      _
    $region31: #{multivariate_lstm_forward.1} parent=1 // pred_check_branch
      %51 = sbr.rel (0) target = $region33
    $region32: #{multivariate_lstm_forward.1} parent=1 // pred_region
      %52 = dma.done [#allocation8], 16384
    $region33: #{multivariate_lstm_forward.1} parent=1 // pred_fallthru
      _
    %v53 = vld [vmem:[%s0] sm:$0xff]
    %v54 = vld [vmem:[%s0 + $0x8] sm:$0xff]
    %v55 = vld [vmem:[%s0 + $0x10] sm:$0xff]
    %v56 = vld [vmem:[%s0 + $0x18] sm:$0xff]
    %v57 = vld [vmem:[%s0 + $0x20] sm:$0xff]
    %v58 = vld [vmem:[%s0 + $0x28] sm:$0xff]
    %v59 = vld [vmem:[%s0 + $0x30] sm:$0xff]
    %v60 = vld [vmem:[%s0 + $0x38] sm:$0xff]
    %v61 = vld [vmem:[#allocation5] sm:$0xff]
    %v62 = vld [vmem:[#allocation5 + $0x8] sm:$0xff]
    %v63 = vld [vmem:[#allocation5 + $0x10] sm:$0xff]
    %v64 = vld [vmem:[#allocation5 + $0x18] sm:$0xff]
    %v65 = vld [vmem:[#allocation5 + $0x20] sm:$0xff]
    %v66 = vld [vmem:[#allocation5 + $0x28] sm:$0xff]
    %v67 = vld [vmem:[#allocation5 + $0x30] sm:$0xff]
    %v68 = vld [vmem:[#allocation5 + $0x38] sm:$0xff]
    %v69 = vld [vmem:[#allocation5 + $0x40] sm:$0xff]
    %v70 = vld [vmem:[#allocation5 + $0x48] sm:$0xff]
    %v71 = vld [vmem:[#allocation5 + $0x50] sm:$0xff]
    %v72 = vld [vmem:[#allocation5 + $0x58] sm:$0xff]
    %v73 = vld [vmem:[#allocation5 + $0x60] sm:$0xff]
    %v74 = vld [vmem:[#allocation5 + $0x68] sm:$0xff]
    %v75 = vld [vmem:[#allocation5 + $0x70] sm:$0xff]
    %v76 = vld [vmem:[#allocation5 + $0x78] sm:$0xff]
    %v77 = vld [vmem:[#allocation5 + $0x80] sm:$0xff]
    %v78 = vld [vmem:[#allocation5 + $0x88] sm:$0xff]
    %v79 = vld [vmem:[#allocation5 + $0x90] sm:$0xff]
    %v80 = vld [vmem:[#allocation5 + $0x98] sm:$0xff]
    %v81 = vld [vmem:[#allocation5 + $0xa0] sm:$0xff]
    %v82 = vld [vmem:[#allocation5 + $0xa8] sm:$0xff]
    %v83 = vld [vmem:[#allocation5 + $0xb0] sm:$0xff]
    %v84 = vld [vmem:[#allocation5 + $0xb8] sm:$0xff]
    %v85 = vld [vmem:[#allocation5 + $0xc0] sm:$0xff]
    %v86 = vld [vmem:[#allocation5 + $0xc8] sm:$0xff]
    %v87 = vld [vmem:[#allocation5 + $0xd0] sm:$0xff]
    %v88 = vld [vmem:[#allocation5 + $0xd8] sm:$0xff]
    %v89 = vld [vmem:[#allocation5 + $0xe0] sm:$0xff]
    %v90 = vld [vmem:[#allocation5 + $0xe8] sm:$0xff]
    %v91 = vld [vmem:[#allocation5 + $0xf0] sm:$0xff]
    %v92 = vld [vmem:[#allocation5 + $0xf8] sm:$0xff]
    %v93 = vld [vmem:[#allocation5 + $0x100] sm:$0xff]
    %v94 = vld [vmem:[#allocation5 + $0x108] sm:$0xff]
    %v95 = vld [vmem:[#allocation5 + $0x110] sm:$0xff]
    %v96 = vld [vmem:[#allocation5 + $0x118] sm:$0xff]
    %v97 = vld [vmem:[#allocation5 + $0x120] sm:$0xff]
    %v98 = vld [vmem:[#allocation5 + $0x128] sm:$0xff]
    %v99 = vld [vmem:[#allocation5 + $0x130] sm:$0xff]
    %v100 = vld [vmem:[#allocation5 + $0x138] sm:$0xff]
    %v101 = vld [vmem:[#allocation5 + $0x140] sm:$0xff]
    %v102 = vld [vmem:[#allocation5 + $0x148] sm:$0xff]
    %v103 = vld [vmem:[#allocation5 + $0x150] sm:$0xff]
    %v104 = vld [vmem:[#allocation5 + $0x158] sm:$0xff]
    %v105 = vld [vmem:[#allocation5 + $0x160] sm:$0xff]
    %v106 = vld [vmem:[#allocation5 + $0x168] sm:$0xff]
    %v107 = vld [vmem:[#allocation5 + $0x170] sm:$0xff]
    %v108 = vld [vmem:[#allocation5 + $0x178] sm:$0xff]
    %v109 = vld [vmem:[#allocation5 + $0x180] sm:$0xff]
    %v110 = vld [vmem:[#allocation5 + $0x188] sm:$0xff]
    %v111 = vld [vmem:[#allocation5 + $0x190] sm:$0xff]
    %v112 = vld [vmem:[#allocation5 + $0x198] sm:$0xff]
    %v113 = vld [vmem:[#allocation5 + $0x1a0] sm:$0xff]
    %v114 = vld [vmem:[#allocation5 + $0x1a8] sm:$0xff]
    %v115 = vld [vmem:[#allocation5 + $0x1b0] sm:$0xff]
    %v116 = vld [vmem:[#allocation5 + $0x1b8] sm:$0xff]
    %v117 = vld [vmem:[#allocation5 + $0x1c0] sm:$0xff]
    %v118 = vld [vmem:[#allocation5 + $0x1c8] sm:$0xff]
    %v119 = vld [vmem:[#allocation5 + $0x1d0] sm:$0xff]
    %v120 = vld [vmem:[#allocation5 + $0x1d8] sm:$0xff]
    %v121 = vld [vmem:[#allocation5 + $0x1e0] sm:$0xff]
    %v122 = vld [vmem:[#allocation5 + $0x1e8] sm:$0xff]
    %v123 = vld [vmem:[#allocation5 + $0x1f0] sm:$0xff]
    %v124 = vld [vmem:[#allocation5 + $0x1f8] sm:$0xff]
    %v125 = vld [vmem:[%s3] sm:$0xf]
    %v127 = vlaneseq
    %v128 = vshrl.u32 %v127, 7
    %v129 = vsub.s32 0, %v128
    %v130 = vrot.slane %v125, %v129
    %v131 = vlaneseq
    %v132 = vshrl.u32 %v131, 7
    %v133 = vsub.s32 1, %v132
    %v134 = vrot.slane %v125, %v133
    %v135 = vlaneseq
    %v136 = vshrl.u32 %v135, 7
    %v137 = vsub.s32 2, %v136
    %v138 = vrot.slane %v125, %v137
    %v139 = vlaneseq
    %v140 = vshrl.u32 %v139, 7
    %v141 = vsub.s32 3, %v140
    %v142 = vrot.slane %v125, %v141
    %147 = vmatprep.subr.mxu0 %v62
    %148 = vmatpush1.msra.mxu0 %v61
    %149 = vmatprep.subr.mxu0 %v66
    %150 = vmatpush1.msra.mxu0 %v65
    %151 = vmatprep.subr.mxu0 %v70
    %152 = vmatpush1.msra.mxu0 %v69
    %153 = vmatprep.subr.mxu0 %v74
    %154 = vmatpush1.msra.mxu0 %v73
    %155 = vmatprep.subr.mxu0 %v78
    %156 = vmatpush1.msra.mxu0 %v77
    %157 = vmatprep.subr.mxu0 %v82
    %158 = vmatpush1.msra.mxu0 %v81
    %159 = vmatprep.subr.mxu0 %v86
    %160 = vmatpush1.msra.mxu0 %v85
    %161 = vmatprep.subr.mxu0 %v90
    %162 = vmatpush1.msra.mxu0 %v89
    %163 = vmatprep.subr.mxu0 %v94
    %164 = vmatpush1.msra.mxu0 %v93
    %165 = vmatprep.subr.mxu0 %v98
    %166 = vmatpush1.msra.mxu0 %v97
    %167 = vmatprep.subr.mxu0 %v102
    %168 = vmatpush1.msra.mxu0 %v101
    %169 = vmatprep.subr.mxu0 %v106
    %170 = vmatpush1.msra.mxu0 %v105
    %171 = vmatprep.subr.mxu0 %v110
    %172 = vmatpush1.msra.mxu0 %v109
    %173 = vmatprep.subr.mxu0 %v114
    %174 = vmatpush1.msra.mxu0 %v113
    %175 = vmatprep.subr.mxu0 %v118
    %176 = vmatpush1.msra.mxu0 %v117
    %177 = vmatprep.subr.mxu0 %v122
    %178 = vmatpush1.msra.mxu0 %v121
    %179 = vmatprep.subr.mxu0 0.0
    %180 = vmatpush1.msra.mxu0 0.0
    %181 = vmatprep.subr.mxu0 0.0
    %182 = vmatpush1.msra.mxu0 0.0
    %183 = vmatprep.subr.mxu0 0.0
    %184 = vmatpush1.msra.mxu0 0.0
    %185 = vmatprep.subr.mxu0 0.0
    %186 = vmatpush1.msra.mxu0 0.0
    %187 = vmatprep.subr.mxu0 0.0
    %188 = vmatpush1.msra.mxu0 0.0
    %189 = vmatprep.subr.mxu0 0.0
    %190 = vmatpush1.msra.mxu0 0.0
    %191 = vmatprep.subr.mxu0 0.0
    %192 = vmatpush1.msra.mxu0 0.0
    %193 = vmatprep.subr.mxu0 0.0
    %194 = vmatpush1.msra.mxu0 0.0
    %195 = vmatprep.subr.mxu0 0.0
    %196 = vmatpush1.msra.mxu0 0.0
    %197 = vmatprep.subr.mxu0 0.0
    %198 = vmatpush1.msra.mxu0 0.0
    %199 = vmatprep.subr.mxu0 0.0
    %200 = vmatpush1.msra.mxu0 0.0
    %201 = vmatprep.subr.mxu0 0.0
    %202 = vmatpush1.msra.mxu0 0.0
    %203 = vmatprep.subr.mxu0 0.0
    %204 = vmatpush1.msra.mxu0 0.0
    %205 = vmatprep.subr.mxu0 0.0
    %206 = vmatpush1.msra.mxu0 0.0
    %207 = vmatprep.subr.mxu0 0.0
    %208 = vmatpush1.msra.mxu0 0.0
    %209 = vmatprep.subr.mxu0 0.0
    %210 = vmatpush1.msra.mxu0 0.0
    %211 = vmatprep.mubr.f32.mxu0 0.0
    %212 = vmatmul.mubr.f32.gmra.mrb[0].mxu0 %v53
    %v213 = vpop.f32.mrb[0].mxu0
    %v214 = vadd.f32 %v130, %v213
    %v215 = vpop.f32.mrb[0].mxu0
    %v216 = vadd.f32 %v134, %v215
    %217 = vmatprep.mubr.f32.mxu0 0.0
    %218 = vmatmul.mubr.f32.gmra.mrb[0].mxu0 %v54
    %v219 = vpop.f32.mrb[0].mxu0
    %v220 = vadd.f32 %v130, %v219
    %v221 = vpop.f32.mrb[0].mxu0
    %v222 = vadd.f32 %v134, %v221
    %223 = vmatprep.mubr.f32.mxu0 0.0
    %224 = vmatmul.mubr.f32.gmra.mrb[0].mxu0 %v55
    %v225 = vpop.f32.mrb[0].mxu0
    %v226 = vadd.f32 %v130, %v225
    %v227 = vpop.f32.mrb[0].mxu0
    %v228 = vadd.f32 %v134, %v227
    %229 = vmatprep.mubr.f32.mxu0 0.0
    %230 = vmatmul.mubr.f32.gmra.mrb[0].mxu0 %v56
    %v231 = vpop.f32.mrb[0].mxu0
    %v232 = vadd.f32 %v130, %v231
    %v233 = vpop.f32.mrb[0].mxu0
    %v234 = vadd.f32 %v134, %v233
    %235 = vmatprep.mubr.f32.mxu0 0.0
    %236 = vmatmul.mubr.f32.gmra.mrb[0].mxu0 %v57
    %v237 = vpop.f32.mrb[0].mxu0
    %v238 = vadd.f32 %v130, %v237
    %v239 = vpop.f32.mrb[0].mxu0
    %v240 = vadd.f32 %v134, %v239
    %241 = vmatprep.mubr.f32.mxu0 0.0
    %242 = vmatmul.mubr.f32.gmra.mrb[0].mxu0 %v58
    %v243 = vpop.f32.mrb[0].mxu0
    %v244 = vadd.f32 %v130, %v243
    %v245 = vpop.f32.mrb[0].mxu0
    %v246 = vadd.f32 %v134, %v245
    %247 = vmatprep.mubr.f32.mxu0 0.0
    %248 = vmatmul.mubr.f32.gmra.mrb[0].mxu0 %v59
    %v249 = vpop.f32.mrb[0].mxu0
    %v250 = vadd.f32 %v130, %v249
    %v251 = vpop.f32.mrb[0].mxu0
    %v252 = vadd.f32 %v134, %v251
    %253 = vmatprep.mubr.f32.mxu0 0.0
    %254 = vmatmul.mubr.f32.gmra.mrb[0].mxu0 %v60
    %v255 = vpop.f32.mrb[0].mxu0
    %v256 = vadd.f32 %v130, %v255
    %v257 = vpop.f32.mrb[0].mxu0
    %v258 = vadd.f32 %v134, %v257
    %259 = vdwg.mxu0
    %260 = vmatprep.subr.mxu0 %v64
    %261 = vmatpush1.msra.mxu0 %v63
    %262 = vmatprep.subr.mxu0 %v68
    %263 = vmatpush1.msra.mxu0 %v67
    %264 = vmatprep.subr.mxu0 %v72
    %265 = vmatpush1.msra.mxu0 %v71
    %266 = vmatprep.subr.mxu0 %v76
    %267 = vmatpush1.msra.mxu0 %v75
    %268 = vmatprep.subr.mxu0 %v80
    %269 = vmatpush1.msra.mxu0 %v79
    %270 = vmatprep.subr.mxu0 %v84
    %271 = vmatpush1.msra.mxu0 %v83
    %272 = vmatprep.subr.mxu0 %v88
    %273 = vmatpush1.msra.mxu0 %v87
    %274 = vmatprep.subr.mxu0 %v92
    %275 = vmatpush1.msra.mxu0 %v91
    %276 = vmatprep.subr.mxu0 %v96
    %277 = vmatpush1.msra.mxu0 %v95
    %278 = vmatprep.subr.mxu0 %v100
    %279 = vmatpush1.msra.mxu0 %v99
    %280 = vmatprep.subr.mxu0 %v104
    %281 = vmatpush1.msra.mxu0 %v103
    %282 = vmatprep.subr.mxu0 %v108
    %283 = vmatpush1.msra.mxu0 %v107
    %284 = vmatprep.subr.mxu0 %v112
    %285 = vmatpush1.msra.mxu0 %v111
    %286 = vmatprep.subr.mxu0 %v116
    %287 = vmatpush1.msra.mxu0 %v115
    %288 = vmatprep.subr.mxu0 %v120
    %289 = vmatpush1.msra.mxu0 %v119
    %290 = vmatprep.subr.mxu0 %v124
    %291 = vmatpush1.msra.mxu0 %v123
    %292 = vmatprep.subr.mxu0 0.0
    %293 = vmatpush1.msra.mxu0 0.0
    %294 = vmatprep.subr.mxu0 0.0
    %295 = vmatpush1.msra.mxu0 0.0
    %296 = vmatprep.subr.mxu0 0.0
    %297 = vmatpush1.msra.mxu0 0.0
    %298 = vmatprep.subr.mxu0 0.0
    %299 = vmatpush1.msra.mxu0 0.0
    %300 = vmatprep.subr.mxu0 0.0
    %301 = vmatpush1.msra.mxu0 0.0
    %302 = vmatprep.subr.mxu0 0.0
    %303 = vmatpush1.msra.mxu0 0.0
    %304 = vmatprep.subr.mxu0 0.0
    %305 = vmatpush1.msra.mxu0 0.0
    %306 = vmatprep.subr.mxu0 0.0
    %307 = vmatpush1.msra.mxu0 0.0
    %308 = vmatprep.subr.mxu0 0.0
    %309 = vmatpush1.msra.mxu0 0.0
    %310 = vmatprep.subr.mxu0 0.0
    %311 = vmatpush1.msra.mxu0 0.0
    %312 = vmatprep.subr.mxu0 0.0
    %313 = vmatpush1.msra.mxu0 0.0
    %314 = vmatprep.subr.mxu0 0.0
    %315 = vmatpush1.msra.mxu0 0.0
    %316 = vmatprep.subr.mxu0 0.0
    %317 = vmatpush1.msra.mxu0 0.0
    %318 = vmatprep.subr.mxu0 0.0
    %319 = vmatpush1.msra.mxu0 0.0
    %320 = vmatprep.subr.mxu0 0.0
    %321 = vmatpush1.msra.mxu0 0.0
    %322 = vmatprep.subr.mxu0 0.0
    %323 = vmatpush1.msra.mxu0 0.0
    %324 = vmatprep.mubr.f32.mxu0 0.0
    %325 = vmatmul.mubr.f32.gmra.mrb[0].mxu0 %v53
    %v326 = vpop.f32.mrb[0].mxu0
    %v327 = vadd.f32 %v138, %v326
    %v328 = vpop.f32.mrb[0].mxu0
    %v329 = vadd.f32 %v142, %v328
    %330 = vmatprep.mubr.f32.mxu0 0.0
    %331 = vmatmul.mubr.f32.gmra.mrb[0].mxu0 %v54
    %v332 = vpop.f32.mrb[0].mxu0
    %v333 = vadd.f32 %v138, %v332
    %v334 = vpop.f32.mrb[0].mxu0
    %v335 = vadd.f32 %v142, %v334
    %336 = vmatprep.mubr.f32.mxu0 0.0
    %337 = vmatmul.mubr.f32.gmra.mrb[0].mxu0 %v55
    %v338 = vpop.f32.mrb[0].mxu0
    %v339 = vadd.f32 %v138, %v338
    %v340 = vpop.f32.mrb[0].mxu0
    %v341 = vadd.f32 %v142, %v340
    %342 = vmatprep.mubr.f32.mxu0 0.0
    %343 = vmatmul.mubr.f32.gmra.mrb[0].mxu0 %v56
    %v344 = vpop.f32.mrb[0].mxu0
    %v345 = vadd.f32 %v138, %v344
    %v346 = vpop.f32.mrb[0].mxu0
    %v347 = vadd.f32 %v142, %v346
    %348 = vmatprep.mubr.f32.mxu0 0.0
    %349 = vmatmul.mubr.f32.gmra.mrb[0].mxu0 %v57
    %v350 = vpop.f32.mrb[0].mxu0
    %v351 = vadd.f32 %v138, %v350
    %v352 = vpop.f32.mrb[0].mxu0
    %v353 = vadd.f32 %v142, %v352
    %354 = vmatprep.mubr.f32.mxu0 0.0
    %355 = vmatmul.mubr.f32.gmra.mrb[0].mxu0 %v58
    %v356 = vpop.f32.mrb[0].mxu0
    %v357 = vadd.f32 %v138, %v356
    %v358 = vpop.f32.mrb[0].mxu0
    %v359 = vadd.f32 %v142, %v358
    %360 = vmatprep.mubr.f32.mxu0 0.0
    %361 = vmatmul.mubr.f32.gmra.mrb[0].mxu0 %v59
    %v362 = vpop.f32.mrb[0].mxu0
    %v363 = vadd.f32 %v138, %v362
    %v364 = vpop.f32.mrb[0].mxu0
    %v365 = vadd.f32 %v142, %v364
    %366 = vmatprep.mubr.f32.mxu0 0.0
    %367 = vmatmul.mubr.f32.gmra.mrb[0].mxu0 %v60
    %v368 = vpop.f32.mrb[0].mxu0
    %v369 = vadd.f32 %v138, %v368
    %v370 = vpop.f32.mrb[0].mxu0
    %v371 = vadd.f32 %v142, %v370
    %372 = vdwg.mxu0
    %373 = vst [vmem:[#allocation3] sm:$0xff] %v214
    %374 = vst [vmem:[#allocation3 + $0x8] sm:$0xff] %v216
    %375 = vst [vmem:[#allocation3 + $0x10] sm:$0xff] %v327
    %376 = vst [vmem:[#allocation3 + $0x18] sm:$0xff] %v329
    %377 = vst [vmem:[#allocation3 + $0x20] sm:$0xff] %v220
    %378 = vst [vmem:[#allocation3 + $0x28] sm:$0xff] %v222
    %379 = vst [vmem:[#allocation3 + $0x30] sm:$0xff] %v333
    %380 = vst [vmem:[#allocation3 + $0x38] sm:$0xff] %v335
    %381 = vst [vmem:[#allocation3 + $0x40] sm:$0xff] %v226
    %382 = vst [vmem:[#allocation3 + $0x48] sm:$0xff] %v228
    %383 = vst [vmem:[#allocation3 + $0x50] sm:$0xff] %v339
    %384 = vst [vmem:[#allocation3 + $0x58] sm:$0xff] %v341
    %385 = vst [vmem:[#allocation3 + $0x60] sm:$0xff] %v232
    %386 = vst [vmem:[#allocation3 + $0x68] sm:$0xff] %v234
    %387 = vst [vmem:[#allocation3 + $0x70] sm:$0xff] %v345
    %388 = vst [vmem:[#allocation3 + $0x78] sm:$0xff] %v347
    %389 = vst [vmem:[#allocation3 + $0x80] sm:$0xff] %v238
    %390 = vst [vmem:[#allocation3 + $0x88] sm:$0xff] %v240
    %391 = vst [vmem:[#allocation3 + $0x90] sm:$0xff] %v351
    %392 = vst [vmem:[#allocation3 + $0x98] sm:$0xff] %v353
    %393 = vst [vmem:[#allocation3 + $0xa0] sm:$0xff] %v244
    %394 = vst [vmem:[#allocation3 + $0xa8] sm:$0xff] %v246
    %395 = vst [vmem:[#allocation3 + $0xb0] sm:$0xff] %v357
    %396 = vst [vmem:[#allocation3 + $0xb8] sm:$0xff] %v359
    %397 = vst [vmem:[#allocation3 + $0xc0] sm:$0xff] %v250
    %398 = vst [vmem:[#allocation3 + $0xc8] sm:$0xff] %v252
    %399 = vst [vmem:[#allocation3 + $0xd0] sm:$0xff] %v363
    %400 = vst [vmem:[#allocation3 + $0xd8] sm:$0xff] %v365
    %401 = vst [vmem:[#allocation3 + $0xe0] sm:$0xff] %v256
    %402 = vst [vmem:[#allocation3 + $0xe8] sm:$0xff] %v258
    %403 = vst [vmem:[#allocation3 + $0xf0] sm:$0xff] %v369
    %404 = vst [vmem:[#allocation3 + $0xf8] sm:$0xff] %v371
    %s405 = smul.u32 0, 4
    %s406 = smul.addr %s405, 8
    %s407 = scalar_lea.vmem [#allocation3], %s406
    %v408 = vld [vmem:[%s407] sm:$0xff]
    %v409 = vld [vmem:[%s407 + $0x8] sm:$0xff]
    %v410 = vld [vmem:[%s407 + $0x10] sm:$0xff]
    %v411 = vld [vmem:[%s407 + $0x18] sm:$0xff]
    %v412 = vld [vmem:[#allocation7] sm:$0xff]
    %v413 = vld [vmem:[#allocation7 + $0x8] sm:$0xff]
    %v414 = vld [vmem:[#allocation7 + $0x10] sm:$0xff]
    %v415 = vld [vmem:[#allocation7 + $0x18] sm:$0xff]
    %v416 = vld [vmem:[#allocation7 + $0x20] sm:$0xff]
    %v417 = vld [vmem:[#allocation7 + $0x28] sm:$0xff]
    %v418 = vld [vmem:[#allocation7 + $0x30] sm:$0xff]
    %v419 = vld [vmem:[#allocation7 + $0x38] sm:$0xff]
    %v420 = vld [vmem:[#allocation7 + $0x40] sm:$0xff]
    %v421 = vld [vmem:[#allocation7 + $0x48] sm:$0xff]
    %v422 = vld [vmem:[#allocation7 + $0x50] sm:$0xff]
    %v423 = vld [vmem:[#allocation7 + $0x58] sm:$0xff]
    %v424 = vld [vmem:[#allocation7 + $0x60] sm:$0xff]
    %v425 = vld [vmem:[#allocation7 + $0x68] sm:$0xff]
    %v426 = vld [vmem:[#allocation7 + $0x70] sm:$0xff]
    %v427 = vld [vmem:[#allocation7 + $0x78] sm:$0xff]
    %v428 = vld [vmem:[#allocation7 + $0x80] sm:$0xff]
    %v429 = vld [vmem:[#allocation7 + $0x88] sm:$0xff]
    %v430 = vld [vmem:[#allocation7 + $0x90] sm:$0xff]
    %v431 = vld [vmem:[#allocation7 + $0x98] sm:$0xff]
    %v432 = vld [vmem:[#allocation7 + $0xa0] sm:$0xff]
    %v433 = vld [vmem:[#allocation7 + $0xa8] sm:$0xff]
    %v434 = vld [vmem:[#allocation7 + $0xb0] sm:$0xff]
    %v435 = vld [vmem:[#allocation7 + $0xb8] sm:$0xff]
    %v436 = vld [vmem:[#allocation7 + $0xc0] sm:$0xff]
    %v437 = vld [vmem:[#allocation7 + $0xc8] sm:$0xff]
    %v438 = vld [vmem:[#allocation7 + $0xd0] sm:$0xff]
    %v439 = vld [vmem:[#allocation7 + $0xd8] sm:$0xff]
    %v440 = vld [vmem:[#allocation7 + $0xe0] sm:$0xff]
    %v441 = vld [vmem:[#allocation7 + $0xe8] sm:$0xff]
    %v442 = vld [vmem:[#allocation7 + $0xf0] sm:$0xff]
    %v443 = vld [vmem:[#allocation7 + $0xf8] sm:$0xff]
    %v444 = vld [vmem:[#allocation7 + $0x100] sm:$0xff]
    %v445 = vld [vmem:[#allocation7 + $0x108] sm:$0xff]
    %v446 = vld [vmem:[#allocation7 + $0x110] sm:$0xff]
    %v447 = vld [vmem:[#allocation7 + $0x118] sm:$0xff]
    %v448 = vld [vmem:[#allocation7 + $0x120] sm:$0xff]
    %v449 = vld [vmem:[#allocation7 + $0x128] sm:$0xff]
    %v450 = vld [vmem:[#allocation7 + $0x130] sm:$0xff]
    %v451 = vld [vmem:[#allocation7 + $0x138] sm:$0xff]
    %v452 = vld [vmem:[#allocation7 + $0x140] sm:$0xff]
    %v453 = vld [vmem:[#allocation7 + $0x148] sm:$0xff]
    %v454 = vld [vmem:[#allocation7 + $0x150] sm:$0xff]
    %v455 = vld [vmem:[#allocation7 + $0x158] sm:$0xff]
    %v456 = vld [vmem:[#allocation7 + $0x160] sm:$0xff]
    %v457 = vld [vmem:[#allocation7 + $0x168] sm:$0xff]
    %v458 = vld [vmem:[#allocation7 + $0x170] sm:$0xff]
    %v459 = vld [vmem:[#allocation7 + $0x178] sm:$0xff]
    %v460 = vld [vmem:[#allocation7 + $0x180] sm:$0xff]
    %v461 = vld [vmem:[#allocation7 + $0x188] sm:$0xff]
    %v462 = vld [vmem:[#allocation7 + $0x190] sm:$0xff]
    %v463 = vld [vmem:[#allocation7 + $0x198] sm:$0xff]
    %v464 = vld [vmem:[#allocation7 + $0x1a0] sm:$0xff]
    %v465 = vld [vmem:[#allocation7 + $0x1a8] sm:$0xff]
    %v466 = vld [vmem:[#allocation7 + $0x1b0] sm:$0xff]
    %v467 = vld [vmem:[#allocation7 + $0x1b8] sm:$0xff]
    %v468 = vld [vmem:[#allocation7 + $0x1c0] sm:$0xff]
    %v469 = vld [vmem:[#allocation7 + $0x1c8] sm:$0xff]
    %v470 = vld [vmem:[#allocation7 + $0x1d0] sm:$0xff]
    %v471 = vld [vmem:[#allocation7 + $0x1d8] sm:$0xff]
    %v472 = vld [vmem:[#allocation7 + $0x1e0] sm:$0xff]
    %v473 = vld [vmem:[#allocation7 + $0x1e8] sm:$0xff]
    %v474 = vld [vmem:[#allocation7 + $0x1f0] sm:$0xff]
    %v475 = vld [vmem:[#allocation7 + $0x1f8] sm:$0xff]
    %476 = vmatprep.subr.mxu0 %v413
    %477 = vmatpush1.msra.mxu0 %v412
    %478 = vmatprep.subr.mxu0 %v417
    %479 = vmatpush1.msra.mxu0 %v416
    %480 = vmatprep.subr.mxu0 %v421
    %481 = vmatpush1.msra.mxu0 %v420
    %482 = vmatprep.subr.mxu0 %v425
    %483 = vmatpush1.msra.mxu0 %v424
    %484 = vmatprep.subr.mxu0 %v429
    %485 = vmatpush1.msra.mxu0 %v428
    %486 = vmatprep.subr.mxu0 %v433
    %487 = vmatpush1.msra.mxu0 %v432
    %488 = vmatprep.subr.mxu0 %v437
    %489 = vmatpush1.msra.mxu0 %v436
    %490 = vmatprep.subr.mxu0 %v441
    %491 = vmatpush1.msra.mxu0 %v440
    %492 = vmatprep.subr.mxu0 %v445
    %493 = vmatpush1.msra.mxu0 %v444
    %494 = vmatprep.subr.mxu0 %v449
    %495 = vmatpush1.msra.mxu0 %v448
    %496 = vmatprep.subr.mxu0 %v453
    %497 = vmatpush1.msra.mxu0 %v452
    %498 = vmatprep.subr.mxu0 %v457
    %499 = vmatpush1.msra.mxu0 %v456
    %500 = vmatprep.subr.mxu0 %v461
    %501 = vmatpush1.msra.mxu0 %v460
    %502 = vmatprep.subr.mxu0 %v465
    %503 = vmatpush1.msra.mxu0 %v464
    %504 = vmatprep.subr.mxu0 %v469
    %505 = vmatpush1.msra.mxu0 %v468
    %506 = vmatprep.subr.mxu0 %v473
    %507 = vmatpush1.msra.mxu0 %v472
    %508 = vmatprep.subr.mxu0 0.0
    %509 = vmatpush1.msra.mxu0 0.0
    %510 = vmatprep.subr.mxu0 0.0
    %511 = vmatpush1.msra.mxu0 0.0
    %512 = vmatprep.subr.mxu0 0.0
    %513 = vmatpush1.msra.mxu0 0.0
    %514 = vmatprep.subr.mxu0 0.0
    %515 = vmatpush1.msra.mxu0 0.0
    %516 = vmatprep.subr.mxu0 0.0
    %517 = vmatpush1.msra.mxu0 0.0
    %518 = vmatprep.subr.mxu0 0.0
    %519 = vmatpush1.msra.mxu0 0.0
    %520 = vmatprep.subr.mxu0 0.0
    %521 = vmatpush1.msra.mxu0 0.0
    %522 = vmatprep.subr.mxu0 0.0
    %523 = vmatpush1.msra.mxu0 0.0
    %524 = vmatprep.subr.mxu0 0.0
    %525 = vmatpush1.msra.mxu0 0.0
    %526 = vmatprep.subr.mxu0 0.0
    %527 = vmatpush1.msra.mxu0 0.0
    %528 = vmatprep.subr.mxu0 0.0
    %529 = vmatpush1.msra.mxu0 0.0
    %530 = vmatprep.subr.mxu0 0.0
    %531 = vmatpush1.msra.mxu0 0.0
    %532 = vmatprep.subr.mxu0 0.0
    %533 = vmatpush1.msra.mxu0 0.0
    %534 = vmatprep.subr.mxu0 0.0
    %535 = vmatpush1.msra.mxu0 0.0
    %536 = vmatprep.subr.mxu0 0.0
    %537 = vmatpush1.msra.mxu0 0.0
    %538 = vmatprep.subr.mxu0 0.0
    %539 = vmatpush1.msra.mxu0 0.0
    %540 = vmatprep.mubr.f32.mxu0 0.0
    %541 = vmatmul.mubr.f32.gmra.mrb[0].mxu0 0.0
    %v542 = vpop.f32.mrb[0].mxu0
    %v543 = vadd.f32 0.0, %v542
    %v544 = vpop.f32.mrb[0].mxu0
    %v545 = vadd.f32 0.0, %v544
    %546 = vdwg.mxu0
    %547 = vmatprep.subr.mxu0 %v415
    %548 = vmatpush1.msra.mxu0 %v414
    %549 = vmatprep.subr.mxu0 %v419
    %550 = vmatpush1.msra.mxu0 %v418
    %551 = vmatprep.subr.mxu0 %v423
    %552 = vmatpush1.msra.mxu0 %v422
    %553 = vmatprep.subr.mxu0 %v427
    %554 = vmatpush1.msra.mxu0 %v426
    %555 = vmatprep.subr.mxu0 %v431
    %556 = vmatpush1.msra.mxu0 %v430
    %557 = vmatprep.subr.mxu0 %v435
    %558 = vmatpush1.msra.mxu0 %v434
    %559 = vmatprep.subr.mxu0 %v439
    %560 = vmatpush1.msra.mxu0 %v438
    %561 = vmatprep.subr.mxu0 %v443
    %562 = vmatpush1.msra.mxu0 %v442
    %563 = vmatprep.subr.mxu0 %v447
    %564 = vmatpush1.msra.mxu0 %v446
    %565 = vmatprep.subr.mxu0 %v451
    %566 = vmatpush1.msra.mxu0 %v450
    %567 = vmatprep.subr.mxu0 %v455
    %568 = vmatpush1.msra.mxu0 %v454
    %569 = vmatprep.subr.mxu0 %v459
    %570 = vmatpush1.msra.mxu0 %v458
    %571 = vmatprep.subr.mxu0 %v463
    %572 = vmatpush1.msra.mxu0 %v462
    %573 = vmatprep.subr.mxu0 %v467
    %574 = vmatpush1.msra.mxu0 %v466
    %575 = vmatprep.subr.mxu0 %v471
    %576 = vmatpush1.msra.mxu0 %v470
    %577 = vmatprep.subr.mxu0 %v475
    %578 = vmatpush1.msra.mxu0 %v474
    %579 = vmatprep.subr.mxu0 0.0
    %580 = vmatpush1.msra.mxu0 0.0
    %581 = vmatprep.subr.mxu0 0.0
    %582 = vmatpush1.msra.mxu0 0.0
    %583 = vmatprep.subr.mxu0 0.0
    %584 = vmatpush1.msra.mxu0 0.0
    %585 = vmatprep.subr.mxu0 0.0
    %586 = vmatpush1.msra.mxu0 0.0
    %587 = vmatprep.subr.mxu0 0.0
    %588 = vmatpush1.msra.mxu0 0.0
    %589 = vmatprep.subr.mxu0 0.0
    %590 = vmatpush1.msra.mxu0 0.0
    %591 = vmatprep.subr.mxu0 0.0
    %592 = vmatpush1.msra.mxu0 0.0
    %593 = vmatprep.subr.mxu0 0.0
    %594 = vmatpush1.msra.mxu0 0.0
    %595 = vmatprep.subr.mxu0 0.0
    %596 = vmatpush1.msra.mxu0 0.0
    %597 = vmatprep.subr.mxu0 0.0
    %598 = vmatpush1.msra.mxu0 0.0
    %599 = vmatprep.subr.mxu0 0.0
    %600 = vmatpush1.msra.mxu0 0.0
    %601 = vmatprep.subr.mxu0 0.0
    %602 = vmatpush1.msra.mxu0 0.0
    %603 = vmatprep.subr.mxu0 0.0
    %604 = vmatpush1.msra.mxu0 0.0
    %605 = vmatprep.subr.mxu0 0.0
    %606 = vmatpush1.msra.mxu0 0.0
    %607 = vmatprep.subr.mxu0 0.0
    %608 = vmatpush1.msra.mxu0 0.0
    %609 = vmatprep.subr.mxu0 0.0
    %610 = vmatpush1.msra.mxu0 0.0
    %611 = vmatprep.mubr.f32.mxu0 0.0
    %612 = vmatmul.mubr.f32.gmra.mrb[0].mxu0 0.0
    %v613 = vpop.f32.mrb[0].mxu0
    %v614 = vadd.f32 0.0, %v613
    %v615 = vpop.f32.mrb[0].mxu0
    %v616 = vadd.f32 0.0, %v615
    %617 = vdwg.mxu0
    %v618 = vadd.f32 %v408, %v543
    %v619 = vadd.f32 %v409, %v545
    %v620 = vadd.f32 %v410, %v614
    %v621 = vadd.f32 %v411, %v616
    %v622 = vxor.u32 %v618, 2147483648
    %v623 = vmul.f32 %v622, 1.442695
    %v624 = vpow.pop %v623
    %v625 = vadd.f32 %v624, 1.0
    %v626 = vrcp.pop %v625
    %v627 = vmul.f32 1.0, %v626
    %v628 = vxor.u32 %v619, 2147483648
    %v629 = vmul.f32 %v628, 1.442695
    %v630 = vpow.pop %v629
    %v631 = vadd.f32 %v630, 1.0
    %v632 = vrcp.pop %v631
    %v633 = vmul.f32 1.0, %v632
    %v634 = vtanh.pop %v620
    %v635 = vxor.u32 %v621, 2147483648
    %v636 = vmul.f32 %v635, 1.442695
    %v637 = vpow.pop %v636
    %v638 = vadd.f32 %v637, 1.0
    %v639 = vrcp.pop %v638
    %v640 = vmul.f32 1.0, %v639
    %v641 = vmul.f32 %v633, 0.0
    %v642 = vmul.f32 %v627, %v634
    %v643 = vadd.f32 %v641, %v642
    %v644 = vtanh.pop %v643
    %v645 = vmul.f32 %v640, %v644
    %646 = vst [vmem:[#allocation2] sm:$0xff] %v645
    %s647 = smul.u32 1, 4
    %s648 = smul.addr %s647, 8
    %s649 = scalar_lea.vmem [#allocation3], %s648
    %v650 = vld [vmem:[%s649] sm:$0xff]
    %v651 = vld [vmem:[%s649 + $0x8] sm:$0xff]
    %v652 = vld [vmem:[%s649 + $0x10] sm:$0xff]
    %v653 = vld [vmem:[%s649 + $0x18] sm:$0xff]
    %v654 = vld [vmem:[#allocation7] sm:$0xff]
    %v655 = vld [vmem:[#allocation7 + $0x8] sm:$0xff]
    %v656 = vld [vmem:[#allocation7 + $0x10] sm:$0xff]
    %v657 = vld [vmem:[#allocation7 + $0x18] sm:$0xff]
    %v658 = vld [vmem:[#allocation7 + $0x20] sm:$0xff]
    %v659 = vld [vmem:[#allocation7 + $0x28] sm:$0xff]
    %v660 = vld [vmem:[#allocation7 + $0x30] sm:$0xff]
    %v661 = vld [vmem:[#allocation7 + $0x38] sm:$0xff]
    %v662 = vld [vmem:[#allocation7 + $0x40] sm:$0xff]
    %v663 = vld [vmem:[#allocation7 + $0x48] sm:$0xff]
    %v664 = vld [vmem:[#allocation7 + $0x50] sm:$0xff]
    %v665 = vld [vmem:[#allocation7 + $0x58] sm:$0xff]
    %v666 = vld [vmem:[#allocation7 + $0x60] sm:$0xff]
    %v667 = vld [vmem:[#allocation7 + $0x68] sm:$0xff]
    %v668 = vld [vmem:[#allocation7 + $0x70] sm:$0xff]
    %v669 = vld [vmem:[#allocation7 + $0x78] sm:$0xff]
    %v670 = vld [vmem:[#allocation7 + $0x80] sm:$0xff]
    %v671 = vld [vmem:[#allocation7 + $0x88] sm:$0xff]
    %v672 = vld [vmem:[#allocation7 + $0x90] sm:$0xff]
    %v673 = vld [vmem:[#allocation7 + $0x98] sm:$0xff]
    %v674 = vld [vmem:[#allocation7 + $0xa0] sm:$0xff]
    %v675 = vld [vmem:[#allocation7 + $0xa8] sm:$0xff]
    %v676 = vld [vmem:[#allocation7 + $0xb0] sm:$0xff]
    %v677 = vld [vmem:[#allocation7 + $0xb8] sm:$0xff]
    %v678 = vld [vmem:[#allocation7 + $0xc0] sm:$0xff]
    %v679 = vld [vmem:[#allocation7 + $0xc8] sm:$0xff]
    %v680 = vld [vmem:[#allocation7 + $0xd0] sm:$0xff]
    %v681 = vld [vmem:[#allocation7 + $0xd8] sm:$0xff]
    %v682 = vld [vmem:[#allocation7 + $0xe0] sm:$0xff]
    %v683 = vld [vmem:[#allocation7 + $0xe8] sm:$0xff]
    %v684 = vld [vmem:[#allocation7 + $0xf0] sm:$0xff]
    %v685 = vld [vmem:[#allocation7 + $0xf8] sm:$0xff]
    %v686 = vld [vmem:[#allocation7 + $0x100] sm:$0xff]
    %v687 = vld [vmem:[#allocation7 + $0x108] sm:$0xff]
    %v688 = vld [vmem:[#allocation7 + $0x110] sm:$0xff]
    %v689 = vld [vmem:[#allocation7 + $0x118] sm:$0xff]
    %v690 = vld [vmem:[#allocation7 + $0x120] sm:$0xff]
    %v691 = vld [vmem:[#allocation7 + $0x128] sm:$0xff]
    %v692 = vld [vmem:[#allocation7 + $0x130] sm:$0xff]
    %v693 = vld [vmem:[#allocation7 + $0x138] sm:$0xff]
    %v694 = vld [vmem:[#allocation7 + $0x140] sm:$0xff]
    %v695 = vld [vmem:[#allocation7 + $0x148] sm:$0xff]
    %v696 = vld [vmem:[#allocation7 + $0x150] sm:$0xff]
    %v697 = vld [vmem:[#allocation7 + $0x158] sm:$0xff]
    %v698 = vld [vmem:[#allocation7 + $0x160] sm:$0xff]
    %v699 = vld [vmem:[#allocation7 + $0x168] sm:$0xff]
    %v700 = vld [vmem:[#allocation7 + $0x170] sm:$0xff]
    %v701 = vld [vmem:[#allocation7 + $0x178] sm:$0xff]
    %v702 = vld [vmem:[#allocation7 + $0x180] sm:$0xff]
    %v703 = vld [vmem:[#allocation7 + $0x188] sm:$0xff]
    %v704 = vld [vmem:[#allocation7 + $0x190] sm:$0xff]
    %v705 = vld [vmem:[#allocation7 + $0x198] sm:$0xff]
    %v706 = vld [vmem:[#allocation7 + $0x1a0] sm:$0xff]
    %v707 = vld [vmem:[#allocation7 + $0x1a8] sm:$0xff]
    %v708 = vld [vmem:[#allocation7 + $0x1b0] sm:$0xff]
    %v709 = vld [vmem:[#allocation7 + $0x1b8] sm:$0xff]
    %v710 = vld [vmem:[#allocation7 + $0x1c0] sm:$0xff]
    %v711 = vld [vmem:[#allocation7 + $0x1c8] sm:$0xff]
    %v712 = vld [vmem:[#allocation7 + $0x1d0] sm:$0xff]
    %v713 = vld [vmem:[#allocation7 + $0x1d8] sm:$0xff]
    %v714 = vld [vmem:[#allocation7 + $0x1e0] sm:$0xff]
    %v715 = vld [vmem:[#allocation7 + $0x1e8] sm:$0xff]
    %v716 = vld [vmem:[#allocation7 + $0x1f0] sm:$0xff]
    %v717 = vld [vmem:[#allocation7 + $0x1f8] sm:$0xff]
    %718 = vmatprep.subr.mxu0 %v655
    %719 = vmatpush1.msra.mxu0 %v654
    %720 = vmatprep.subr.mxu0 %v659
    %721 = vmatpush1.msra.mxu0 %v658
    %722 = vmatprep.subr.mxu0 %v663
    %723 = vmatpush1.msra.mxu0 %v662
    %724 = vmatprep.subr.mxu0 %v667
    %725 = vmatpush1.msra.mxu0 %v666
    %726 = vmatprep.subr.mxu0 %v671
    %727 = vmatpush1.msra.mxu0 %v670
    %728 = vmatprep.subr.mxu0 %v675
    %729 = vmatpush1.msra.mxu0 %v674
    %730 = vmatprep.subr.mxu0 %v679
    %731 = vmatpush1.msra.mxu0 %v678
    %732 = vmatprep.subr.mxu0 %v683
    %733 = vmatpush1.msra.mxu0 %v682
    %734 = vmatprep.subr.mxu0 %v687
    %735 = vmatpush1.msra.mxu0 %v686
    %736 = vmatprep.subr.mxu0 %v691
    %737 = vmatpush1.msra.mxu0 %v690
    %738 = vmatprep.subr.mxu0 %v695
    %739 = vmatpush1.msra.mxu0 %v694
    %740 = vmatprep.subr.mxu0 %v699
    %741 = vmatpush1.msra.mxu0 %v698
    %742 = vmatprep.subr.mxu0 %v703
    %743 = vmatpush1.msra.mxu0 %v702
    %744 = vmatprep.subr.mxu0 %v707
    %745 = vmatpush1.msra.mxu0 %v706
    %746 = vmatprep.subr.mxu0 %v711
    %747 = vmatpush1.msra.mxu0 %v710
    %748 = vmatprep.subr.mxu0 %v715
    %749 = vmatpush1.msra.mxu0 %v714
    %750 = vmatprep.subr.mxu0 0.0
    %751 = vmatpush1.msra.mxu0 0.0
    %752 = vmatprep.subr.mxu0 0.0
    %753 = vmatpush1.msra.mxu0 0.0
    %754 = vmatprep.subr.mxu0 0.0
    %755 = vmatpush1.msra.mxu0 0.0
    %756 = vmatprep.subr.mxu0 0.0
    %757 = vmatpush1.msra.mxu0 0.0
    %758 = vmatprep.subr.mxu0 0.0
    %759 = vmatpush1.msra.mxu0 0.0
    %760 = vmatprep.subr.mxu0 0.0
    %761 = vmatpush1.msra.mxu0 0.0
    %762 = vmatprep.subr.mxu0 0.0
    %763 = vmatpush1.msra.mxu0 0.0
    %764 = vmatprep.subr.mxu0 0.0
    %765 = vmatpush1.msra.mxu0 0.0
    %766 = vmatprep.subr.mxu0 0.0
    %767 = vmatpush1.msra.mxu0 0.0
    %768 = vmatprep.subr.mxu0 0.0
    %769 = vmatpush1.msra.mxu0 0.0
    %770 = vmatprep.subr.mxu0 0.0
    %771 = vmatpush1.msra.mxu0 0.0
    %772 = vmatprep.subr.mxu0 0.0
    %773 = vmatpush1.msra.mxu0 0.0
    %774 = vmatprep.subr.mxu0 0.0
    %775 = vmatpush1.msra.mxu0 0.0
    %776 = vmatprep.subr.mxu0 0.0
    %777 = vmatpush1.msra.mxu0 0.0
    %778 = vmatprep.subr.mxu0 0.0
    %779 = vmatpush1.msra.mxu0 0.0
    %780 = vmatprep.subr.mxu0 0.0
    %781 = vmatpush1.msra.mxu0 0.0
    %782 = vmatprep.mubr.f32.mxu0 0.0
    %783 = vmatmul.mubr.f32.gmra.mrb[0].mxu0 %v645
    %v784 = vpop.f32.mrb[0].mxu0
    %v785 = vadd.f32 0.0, %v784
    %v786 = vpop.f32.mrb[0].mxu0
    %v787 = vadd.f32 0.0, %v786
    %788 = vdwg.mxu0
    %789 = vmatprep.subr.mxu0 %v657
    %790 = vmatpush1.msra.mxu0 %v656
    %791 = vmatprep.subr.mxu0 %v661
    %792 = vmatpush1.msra.mxu0 %v660
    %793 = vmatprep.subr.mxu0 %v665
    %794 = vmatpush1.msra.mxu0 %v664
    %795 = vmatprep.subr.mxu0 %v669
    %796 = vmatpush1.msra.mxu0 %v668
    %797 = vmatprep.subr.mxu0 %v673
    %798 = vmatpush1.msra.mxu0 %v672
    %799 = vmatprep.subr.mxu0 %v677
    %800 = vmatpush1.msra.mxu0 %v676
    %801 = vmatprep.subr.mxu0 %v681
    %802 = vmatpush1.msra.mxu0 %v680
    %803 = vmatprep.subr.mxu0 %v685
    %804 = vmatpush1.msra.mxu0 %v684
    %805 = vmatprep.subr.mxu0 %v689
    %806 = vmatpush1.msra.mxu0 %v688
    %807 = vmatprep.subr.mxu0 %v693
    %808 = vmatpush1.msra.mxu0 %v692
    %809 = vmatprep.subr.mxu0 %v697
    %810 = vmatpush1.msra.mxu0 %v696
    %811 = vmatprep.subr.mxu0 %v701
    %812 = vmatpush1.msra.mxu0 %v700
    %813 = vmatprep.subr.mxu0 %v705
    %814 = vmatpush1.msra.mxu0 %v704
    %815 = vmatprep.subr.mxu0 %v709
    %816 = vmatpush1.msra.mxu0 %v708
    %817 = vmatprep.subr.mxu0 %v713
    %818 = vmatpush1.msra.mxu0 %v712
    %819 = vmatprep.subr.mxu0 %v717
    %820 = vmatpush1.msra.mxu0 %v716
    %821 = vmatprep.subr.mxu0 0.0
    %822 = vmatpush1.msra.mxu0 0.0
    %823 = vmatprep.subr.mxu0 0.0
    %824 = vmatpush1.msra.mxu0 0.0
    %825 = vmatprep.subr.mxu0 0.0
    %826 = vmatpush1.msra.mxu0 0.0
    %827 = vmatprep.subr.mxu0 0.0
    %828 = vmatpush1.msra.mxu0 0.0
    %829 = vmatprep.subr.mxu0 0.0
    %830 = vmatpush1.msra.mxu0 0.0
    %831 = vmatprep.subr.mxu0 0.0
    %832 = vmatpush1.msra.mxu0 0.0
    %833 = vmatprep.subr.mxu0 0.0
    %834 = vmatpush1.msra.mxu0 0.0
    %835 = vmatprep.subr.mxu0 0.0
    %836 = vmatpush1.msra.mxu0 0.0
    %837 = vmatprep.subr.mxu0 0.0
    %838 = vmatpush1.msra.mxu0 0.0
    %839 = vmatprep.subr.mxu0 0.0
    %840 = vmatpush1.msra.mxu0 0.0
    %841 = vmatprep.subr.mxu0 0.0
    %842 = vmatpush1.msra.mxu0 0.0
    %843 = vmatprep.subr.mxu0 0.0
    %844 = vmatpush1.msra.mxu0 0.0
    %845 = vmatprep.subr.mxu0 0.0
    %846 = vmatpush1.msra.mxu0 0.0
    %847 = vmatprep.subr.mxu0 0.0
    %848 = vmatpush1.msra.mxu0 0.0
    %849 = vmatprep.subr.mxu0 0.0
    %850 = vmatpush1.msra.mxu0 0.0
    %851 = vmatprep.subr.mxu0 0.0
    %852 = vmatpush1.msra.mxu0 0.0
    %853 = vmatprep.mubr.f32.mxu0 0.0
    %854 = vmatmul.mubr.f32.gmra.mrb[0].mxu0 %v645
    %v855 = vpop.f32.mrb[0].mxu0
    %v856 = vadd.f32 0.0, %v855
    %v857 = vpop.f32.mrb[0].mxu0
    %v858 = vadd.f32 0.0, %v857
    %859 = vdwg.mxu0
    %v860 = vadd.f32 %v650, %v785
    %v861 = vadd.f32 %v651, %v787
    %v862 = vadd.f32 %v652, %v856
    %v863 = vadd.f32 %v653, %v858
    %v864 = vxor.u32 %v860, 2147483648
    %v865 = vmul.f32 %v864, 1.442695
    %v866 = vpow.pop %v865
    %v867 = vadd.f32 %v866, 1.0
    %v868 = vrcp.pop %v867
    %v869 = vmul.f32 1.0, %v868
    %v870 = vxor.u32 %v861, 2147483648
    %v871 = vmul.f32 %v870, 1.442695
    %v872 = vpow.pop %v871
    %v873 = vadd.f32 %v872, 1.0
    %v874 = vrcp.pop %v873
    %v875 = vmul.f32 1.0, %v874
    %v876 = vtanh.pop %v862
    %v877 = vxor.u32 %v863, 2147483648
    %v878 = vmul.f32 %v877, 1.442695
    %v879 = vpow.pop %v878
    %v880 = vadd.f32 %v879, 1.0
    %v881 = vrcp.pop %v880
    %v882 = vmul.f32 1.0, %v881
    %v883 = vmul.f32 %v875, %v643
    %v884 = vmul.f32 %v869, %v876
    %v885 = vadd.f32 %v883, %v884
    %v886 = vtanh.pop %v885
    %v887 = vmul.f32 %v882, %v886
    %s888 = scalar_lea.vmem [#allocation2], 8
    %889 = vst [vmem:[%s888] sm:$0xff] %v887
    %s890 = smul.u32 2, 4
    %s891 = smul.addr %s890, 8
    %s892 = scalar_lea.vmem [#allocation3], %s891
    %v893 = vld [vmem:[%s892] sm:$0xff]
    %v894 = vld [vmem:[%s892 + $0x8] sm:$0xff]
    %v895 = vld [vmem:[%s892 + $0x10] sm:$0xff]
    %v896 = vld [vmem:[%s892 + $0x18] sm:$0xff]
    %v897 = vld [vmem:[#allocation7] sm:$0xff]
    %v898 = vld [vmem:[#allocation7 + $0x8] sm:$0xff]
    %v899 = vld [vmem:[#allocation7 + $0x10] sm:$0xff]
    %v900 = vld [vmem:[#allocation7 + $0x18] sm:$0xff]
    %v901 = vld [vmem:[#allocation7 + $0x20] sm:$0xff]
    %v902 = vld [vmem:[#allocation7 + $0x28] sm:$0xff]
    %v903 = vld [vmem:[#allocation7 + $0x30] sm:$0xff]
    %v904 = vld [vmem:[#allocation7 + $0x38] sm:$0xff]
    %v905 = vld [vmem:[#allocation7 + $0x40] sm:$0xff]
    %v906 = vld [vmem:[#allocation7 + $0x48] sm:$0xff]
    %v907 = vld [vmem:[#allocation7 + $0x50] sm:$0xff]
    %v908 = vld [vmem:[#allocation7 + $0x58] sm:$0xff]
    %v909 = vld [vmem:[#allocation7 + $0x60] sm:$0xff]
    %v910 = vld [vmem:[#allocation7 + $0x68] sm:$0xff]
    %v911 = vld [vmem:[#allocation7 + $0x70] sm:$0xff]
    %v912 = vld [vmem:[#allocation7 + $0x78] sm:$0xff]
    %v913 = vld [vmem:[#allocation7 + $0x80] sm:$0xff]
    %v914 = vld [vmem:[#allocation7 + $0x88] sm:$0xff]
    %v915 = vld [vmem:[#allocation7 + $0x90] sm:$0xff]
    %v916 = vld [vmem:[#allocation7 + $0x98] sm:$0xff]
    %v917 = vld [vmem:[#allocation7 + $0xa0] sm:$0xff]
    %v918 = vld [vmem:[#allocation7 + $0xa8] sm:$0xff]
    %v919 = vld [vmem:[#allocation7 + $0xb0] sm:$0xff]
    %v920 = vld [vmem:[#allocation7 + $0xb8] sm:$0xff]
    %v921 = vld [vmem:[#allocation7 + $0xc0] sm:$0xff]
    %v922 = vld [vmem:[#allocation7 + $0xc8] sm:$0xff]
    %v923 = vld [vmem:[#allocation7 + $0xd0] sm:$0xff]
    %v924 = vld [vmem:[#allocation7 + $0xd8] sm:$0xff]
    %v925 = vld [vmem:[#allocation7 + $0xe0] sm:$0xff]
    %v926 = vld [vmem:[#allocation7 + $0xe8] sm:$0xff]
    %v927 = vld [vmem:[#allocation7 + $0xf0] sm:$0xff]
    %v928 = vld [vmem:[#allocation7 + $0xf8] sm:$0xff]
    %v929 = vld [vmem:[#allocation7 + $0x100] sm:$0xff]
    %v930 = vld [vmem:[#allocation7 + $0x108] sm:$0xff]
    %v931 = vld [vmem:[#allocation7 + $0x110] sm:$0xff]
    %v932 = vld [vmem:[#allocation7 + $0x118] sm:$0xff]
    %v933 = vld [vmem:[#allocation7 + $0x120] sm:$0xff]
    %v934 = vld [vmem:[#allocation7 + $0x128] sm:$0xff]
    %v935 = vld [vmem:[#allocation7 + $0x130] sm:$0xff]
    %v936 = vld [vmem:[#allocation7 + $0x138] sm:$0xff]
    %v937 = vld [vmem:[#allocation7 + $0x140] sm:$0xff]
    %v938 = vld [vmem:[#allocation7 + $0x148] sm:$0xff]
    %v939 = vld [vmem:[#allocation7 + $0x150] sm:$0xff]
    %v940 = vld [vmem:[#allocation7 + $0x158] sm:$0xff]
    %v941 = vld [vmem:[#allocation7 + $0x160] sm:$0xff]
    %v942 = vld [vmem:[#allocation7 + $0x168] sm:$0xff]
    %v943 = vld [vmem:[#allocation7 + $0x170] sm:$0xff]
    %v944 = vld [vmem:[#allocation7 + $0x178] sm:$0xff]
    %v945 = vld [vmem:[#allocation7 + $0x180] sm:$0xff]
    %v946 = vld [vmem:[#allocation7 + $0x188] sm:$0xff]
    %v947 = vld [vmem:[#allocation7 + $0x190] sm:$0xff]
    %v948 = vld [vmem:[#allocation7 + $0x198] sm:$0xff]
    %v949 = vld [vmem:[#allocation7 + $0x1a0] sm:$0xff]
    %v950 = vld [vmem:[#allocation7 + $0x1a8] sm:$0xff]
    %v951 = vld [vmem:[#allocation7 + $0x1b0] sm:$0xff]
    %v952 = vld [vmem:[#allocation7 + $0x1b8] sm:$0xff]
    %v953 = vld [vmem:[#allocation7 + $0x1c0] sm:$0xff]
    %v954 = vld [vmem:[#allocation7 + $0x1c8] sm:$0xff]
    %v955 = vld [vmem:[#allocation7 + $0x1d0] sm:$0xff]
    %v956 = vld [vmem:[#allocation7 + $0x1d8] sm:$0xff]
    %v957 = vld [vmem:[#allocation7 + $0x1e0] sm:$0xff]
    %v958 = vld [vmem:[#allocation7 + $0x1e8] sm:$0xff]
    %v959 = vld [vmem:[#allocation7 + $0x1f0] sm:$0xff]
    %v960 = vld [vmem:[#allocation7 + $0x1f8] sm:$0xff]
    %961 = vmatprep.subr.mxu0 %v898
    %962 = vmatpush1.msra.mxu0 %v897
    %963 = vmatprep.subr.mxu0 %v902
    %964 = vmatpush1.msra.mxu0 %v901
    %965 = vmatprep.subr.mxu0 %v906
    %966 = vmatpush1.msra.mxu0 %v905
    %967 = vmatprep.subr.mxu0 %v910
    %968 = vmatpush1.msra.mxu0 %v909
    %969 = vmatprep.subr.mxu0 %v914
    %970 = vmatpush1.msra.mxu0 %v913
    %971 = vmatprep.subr.mxu0 %v918
    %972 = vmatpush1.msra.mxu0 %v917
    %973 = vmatprep.subr.mxu0 %v922
    %974 = vmatpush1.msra.mxu0 %v921
    %975 = vmatprep.subr.mxu0 %v926
    %976 = vmatpush1.msra.mxu0 %v925
    %977 = vmatprep.subr.mxu0 %v930
    %978 = vmatpush1.msra.mxu0 %v929
    %979 = vmatprep.subr.mxu0 %v934
    %980 = vmatpush1.msra.mxu0 %v933
    %981 = vmatprep.subr.mxu0 %v938
    %982 = vmatpush1.msra.mxu0 %v937
    %983 = vmatprep.subr.mxu0 %v942
    %984 = vmatpush1.msra.mxu0 %v941
    %985 = vmatprep.subr.mxu0 %v946
    %986 = vmatpush1.msra.mxu0 %v945
    %987 = vmatprep.subr.mxu0 %v950
    %988 = vmatpush1.msra.mxu0 %v949
    %989 = vmatprep.subr.mxu0 %v954
    %990 = vmatpush1.msra.mxu0 %v953
    %991 = vmatprep.subr.mxu0 %v958
    %992 = vmatpush1.msra.mxu0 %v957
    %993 = vmatprep.subr.mxu0 0.0
    %994 = vmatpush1.msra.mxu0 0.0
    %995 = vmatprep.subr.mxu0 0.0
    %996 = vmatpush1.msra.mxu0 0.0
    %997 = vmatprep.subr.mxu0 0.0
    %998 = vmatpush1.msra.mxu0 0.0
    %999 = vmatprep.subr.mxu0 0.0
    %1000 = vmatpush1.msra.mxu0 0.0
    %1001 = vmatprep.subr.mxu0 0.0
    %1002 = vmatpush1.msra.mxu0 0.0
    %1003 = vmatprep.subr.mxu0 0.0
    %1004 = vmatpush1.msra.mxu0 0.0
    %1005 = vmatprep.subr.mxu0 0.0
    %1006 = vmatpush1.msra.mxu0 0.0
    %1007 = vmatprep.subr.mxu0 0.0
    %1008 = vmatpush1.msra.mxu0 0.0
    %1009 = vmatprep.subr.mxu0 0.0
    %1010 = vmatpush1.msra.mxu0 0.0
    %1011 = vmatprep.subr.mxu0 0.0
    %1012 = vmatpush1.msra.mxu0 0.0
    %1013 = vmatprep.subr.mxu0 0.0
    %1014 = vmatpush1.msra.mxu0 0.0
    %1015 = vmatprep.subr.mxu0 0.0
    %1016 = vmatpush1.msra.mxu0 0.0
    %1017 = vmatprep.subr.mxu0 0.0
    %1018 = vmatpush1.msra.mxu0 0.0
    %1019 = vmatprep.subr.mxu0 0.0
    %1020 = vmatpush1.msra.mxu0 0.0
    %1021 = vmatprep.subr.mxu0 0.0
    %1022 = vmatpush1.msra.mxu0 0.0
    %1023 = vmatprep.subr.mxu0 0.0
    %1024 = vmatpush1.msra.mxu0 0.0
    %1025 = vmatprep.mubr.f32.mxu0 0.0
    %1026 = vmatmul.mubr.f32.gmra.mrb[0].mxu0 %v887
    %v1027 = vpop.f32.mrb[0].mxu0
    %v1028 = vadd.f32 0.0, %v1027
    %v1029 = vpop.f32.mrb[0].mxu0
    %v1030 = vadd.f32 0.0, %v1029
    %1031 = vdwg.mxu0
    %1032 = vmatprep.subr.mxu0 %v900
    %1033 = vmatpush1.msra.mxu0 %v899
    %1034 = vmatprep.subr.mxu0 %v904
    %1035 = vmatpush1.msra.mxu0 %v903
    %1036 = vmatprep.subr.mxu0 %v908
    %1037 = vmatpush1.msra.mxu0 %v907
    %1038 = vmatprep.subr.mxu0 %v912
    %1039 = vmatpush1.msra.mxu0 %v911
    %1040 = vmatprep.subr.mxu0 %v916
    %1041 = vmatpush1.msra.mxu0 %v915
    %1042 = vmatprep.subr.mxu0 %v920
    %1043 = vmatpush1.msra.mxu0 %v919
    %1044 = vmatprep.subr.mxu0 %v924
    %1045 = vmatpush1.msra.mxu0 %v923
    %1046 = vmatprep.subr.mxu0 %v928
    %1047 = vmatpush1.msra.mxu0 %v927
    %1048 = vmatprep.subr.mxu0 %v932
    %1049 = vmatpush1.msra.mxu0 %v931
    %1050 = vmatprep.subr.mxu0 %v936
    %1051 = vmatpush1.msra.mxu0 %v935
    %1052 = vmatprep.subr.mxu0 %v940
    %1053 = vmatpush1.msra.mxu0 %v939
    %1054 = vmatprep.subr.mxu0 %v944
    %1055 = vmatpush1.msra.mxu0 %v943
    %1056 = vmatprep.subr.mxu0 %v948
    %1057 = vmatpush1.msra.mxu0 %v947
    %1058 = vmatprep.subr.mxu0 %v952
    %1059 = vmatpush1.msra.mxu0 %v951
    %1060 = vmatprep.subr.mxu0 %v956
    %1061 = vmatpush1.msra.mxu0 %v955
    %1062 = vmatprep.subr.mxu0 %v960
    %1063 = vmatpush1.msra.mxu0 %v959
    %1064 = vmatprep.subr.mxu0 0.0
    %1065 = vmatpush1.msra.mxu0 0.0
    %1066 = vmatprep.subr.mxu0 0.0
    %1067 = vmatpush1.msra.mxu0 0.0
    %1068 = vmatprep.subr.mxu0 0.0
    %1069 = vmatpush1.msra.mxu0 0.0
    %1070 = vmatprep.subr.mxu0 0.0
    %1071 = vmatpush1.msra.mxu0 0.0
    %1072 = vmatprep.subr.mxu0 0.0
    %1073 = vmatpush1.msra.mxu0 0.0
    %1074 = vmatprep.subr.mxu0 0.0
    %1075 = vmatpush1.msra.mxu0 0.0
    %1076 = vmatprep.subr.mxu0 0.0
    %1077 = vmatpush1.msra.mxu0 0.0
    %1078 = vmatprep.subr.mxu0 0.0
    %1079 = vmatpush1.msra.mxu0 0.0
    %1080 = vmatprep.subr.mxu0 0.0
    %1081 = vmatpush1.msra.mxu0 0.0
    %1082 = vmatprep.subr.mxu0 0.0
    %1083 = vmatpush1.msra.mxu0 0.0
    %1084 = vmatprep.subr.mxu0 0.0
    %1085 = vmatpush1.msra.mxu0 0.0
    %1086 = vmatprep.subr.mxu0 0.0
    %1087 = vmatpush1.msra.mxu0 0.0
    %1088 = vmatprep.subr.mxu0 0.0
    %1089 = vmatpush1.msra.mxu0 0.0
    %1090 = vmatprep.subr.mxu0 0.0
    %1091 = vmatpush1.msra.mxu0 0.0
    %1092 = vmatprep.subr.mxu0 0.0
    %1093 = vmatpush1.msra.mxu0 0.0
    %1094 = vmatprep.subr.mxu0 0.0
    %1095 = vmatpush1.msra.mxu0 0.0
    %1096 = vmatprep.mubr.f32.mxu0 0.0
    %1097 = vmatmul.mubr.f32.gmra.mrb[0].mxu0 %v887
    %v1098 = vpop.f32.mrb[0].mxu0
    %v1099 = vadd.f32 0.0, %v1098
    %v1100 = vpop.f32.mrb[0].mxu0
    %v1101 = vadd.f32 0.0, %v1100
    %1102 = vdwg.mxu0
    %v1103 = vadd.f32 %v893, %v1028
    %v1104 = vadd.f32 %v894, %v1030
    %v1105 = vadd.f32 %v895, %v1099
    %v1106 = vadd.f32 %v896, %v1101
    %v1107 = vxor.u32 %v1103, 2147483648
    %v1108 = vmul.f32 %v1107, 1.442695
    %v1109 = vpow.pop %v1108
    %v1110 = vadd.f32 %v1109, 1.0
    %v1111 = vrcp.pop %v1110
    %v1112 = vmul.f32 1.0, %v1111
    %v1113 = vxor.u32 %v1104, 2147483648
    %v1114 = vmul.f32 %v1113, 1.442695
    %v1115 = vpow.pop %v1114
    %v1116 = vadd.f32 %v1115, 1.0
    %v1117 = vrcp.pop %v1116
    %v1118 = vmul.f32 1.0, %v1117
    %v1119 = vtanh.pop %v1105
    %v1120 = vxor.u32 %v1106, 2147483648
    %v1121 = vmul.f32 %v1120, 1.442695
    %v1122 = vpow.pop %v1121
    %v1123 = vadd.f32 %v1122, 1.0
    %v1124 = vrcp.pop %v1123
    %v1125 = vmul.f32 1.0, %v1124
    %v1126 = vmul.f32 %v1118, %v885
    %v1127 = vmul.f32 %v1112, %v1119
    %v1128 = vadd.f32 %v1126, %v1127
    %v1129 = vtanh.pop %v1128
    %v1130 = vmul.f32 %v1125, %v1129
    %s1131 = scalar_lea.vmem [#allocation2], 16
    %1132 = vst [vmem:[%s1131] sm:$0xff] %v1130
    %s1133 = smul.u32 3, 4
    %s1134 = smul.addr %s1133, 8
    %s1135 = scalar_lea.vmem [#allocation3], %s1134
    %v1136 = vld [vmem:[%s1135] sm:$0xff]
    %v1137 = vld [vmem:[%s1135 + $0x8] sm:$0xff]
    %v1138 = vld [vmem:[%s1135 + $0x10] sm:$0xff]
    %v1139 = vld [vmem:[%s1135 + $0x18] sm:$0xff]
    %v1140 = vld [vmem:[#allocation7] sm:$0xff]
    %v1141 = vld [vmem:[#allocation7 + $0x8] sm:$0xff]
    %v1142 = vld [vmem:[#allocation7 + $0x10] sm:$0xff]
    %v1143 = vld [vmem:[#allocation7 + $0x18] sm:$0xff]
    %v1144 = vld [vmem:[#allocation7 + $0x20] sm:$0xff]
    %v1145 = vld [vmem:[#allocation7 + $0x28] sm:$0xff]
    %v1146 = vld [vmem:[#allocation7 + $0x30] sm:$0xff]
    %v1147 = vld [vmem:[#allocation7 + $0x38] sm:$0xff]
    %v1148 = vld [vmem:[#allocation7 + $0x40] sm:$0xff]
    %v1149 = vld [vmem:[#allocation7 + $0x48] sm:$0xff]
    %v1150 = vld [vmem:[#allocation7 + $0x50] sm:$0xff]
    %v1151 = vld [vmem:[#allocation7 + $0x58] sm:$0xff]
    %v1152 = vld [vmem:[#allocation7 + $0x60] sm:$0xff]
    %v1153 = vld [vmem:[#allocation7 + $0x68] sm:$0xff]
    %v1154 = vld [vmem:[#allocation7 + $0x70] sm:$0xff]
    %v1155 = vld [vmem:[#allocation7 + $0x78] sm:$0xff]
    %v1156 = vld [vmem:[#allocation7 + $0x80] sm:$0xff]
    %v1157 = vld [vmem:[#allocation7 + $0x88] sm:$0xff]
    %v1158 = vld [vmem:[#allocation7 + $0x90] sm:$0xff]
    %v1159 = vld [vmem:[#allocation7 + $0x98] sm:$0xff]
    %v1160 = vld [vmem:[#allocation7 + $0xa0] sm:$0xff]
    %v1161 = vld [vmem:[#allocation7 + $0xa8] sm:$0xff]
    %v1162 = vld [vmem:[#allocation7 + $0xb0] sm:$0xff]
    %v1163 = vld [vmem:[#allocation7 + $0xb8] sm:$0xff]
    %v1164 = vld [vmem:[#allocation7 + $0xc0] sm:$0xff]
    %v1165 = vld [vmem:[#allocation7 + $0xc8] sm:$0xff]
    %v1166 = vld [vmem:[#allocation7 + $0xd0] sm:$0xff]
    %v1167 = vld [vmem:[#allocation7 + $0xd8] sm:$0xff]
    %v1168 = vld [vmem:[#allocation7 + $0xe0] sm:$0xff]
    %v1169 = vld [vmem:[#allocation7 + $0xe8] sm:$0xff]
    %v1170 = vld [vmem:[#allocation7 + $0xf0] sm:$0xff]
    %v1171 = vld [vmem:[#allocation7 + $0xf8] sm:$0xff]
    %v1172 = vld [vmem:[#allocation7 + $0x100] sm:$0xff]
    %v1173 = vld [vmem:[#allocation7 + $0x108] sm:$0xff]
    %v1174 = vld [vmem:[#allocation7 + $0x110] sm:$0xff]
    %v1175 = vld [vmem:[#allocation7 + $0x118] sm:$0xff]
    %v1176 = vld [vmem:[#allocation7 + $0x120] sm:$0xff]
    %v1177 = vld [vmem:[#allocation7 + $0x128] sm:$0xff]
    %v1178 = vld [vmem:[#allocation7 + $0x130] sm:$0xff]
    %v1179 = vld [vmem:[#allocation7 + $0x138] sm:$0xff]
    %v1180 = vld [vmem:[#allocation7 + $0x140] sm:$0xff]
    %v1181 = vld [vmem:[#allocation7 + $0x148] sm:$0xff]
    %v1182 = vld [vmem:[#allocation7 + $0x150] sm:$0xff]
    %v1183 = vld [vmem:[#allocation7 + $0x158] sm:$0xff]
    %v1184 = vld [vmem:[#allocation7 + $0x160] sm:$0xff]
    %v1185 = vld [vmem:[#allocation7 + $0x168] sm:$0xff]
    %v1186 = vld [vmem:[#allocation7 + $0x170] sm:$0xff]
    %v1187 = vld [vmem:[#allocation7 + $0x178] sm:$0xff]
    %v1188 = vld [vmem:[#allocation7 + $0x180] sm:$0xff]
    %v1189 = vld [vmem:[#allocation7 + $0x188] sm:$0xff]
    %v1190 = vld [vmem:[#allocation7 + $0x190] sm:$0xff]
    %v1191 = vld [vmem:[#allocation7 + $0x198] sm:$0xff]
    %v1192 = vld [vmem:[#allocation7 + $0x1a0] sm:$0xff]
    %v1193 = vld [vmem:[#allocation7 + $0x1a8] sm:$0xff]
    %v1194 = vld [vmem:[#allocation7 + $0x1b0] sm:$0xff]
    %v1195 = vld [vmem:[#allocation7 + $0x1b8] sm:$0xff]
    %v1196 = vld [vmem:[#allocation7 + $0x1c0] sm:$0xff]
    %v1197 = vld [vmem:[#allocation7 + $0x1c8] sm:$0xff]
    %v1198 = vld [vmem:[#allocation7 + $0x1d0] sm:$0xff]
    %v1199 = vld [vmem:[#allocation7 + $0x1d8] sm:$0xff]
    %v1200 = vld [vmem:[#allocation7 + $0x1e0] sm:$0xff]
    %v1201 = vld [vmem:[#allocation7 + $0x1e8] sm:$0xff]
    %v1202 = vld [vmem:[#allocation7 + $0x1f0] sm:$0xff]
    %v1203 = vld [vmem:[#allocation7 + $0x1f8] sm:$0xff]
    %1204 = vmatprep.subr.mxu0 %v1141
    %1205 = vmatpush1.msra.mxu0 %v1140
    %1206 = vmatprep.subr.mxu0 %v1145
    %1207 = vmatpush1.msra.mxu0 %v1144
    %1208 = vmatprep.subr.mxu0 %v1149
    %1209 = vmatpush1.msra.mxu0 %v1148
    %1210 = vmatprep.subr.mxu0 %v1153
    %1211 = vmatpush1.msra.mxu0 %v1152
    %1212 = vmatprep.subr.mxu0 %v1157
    %1213 = vmatpush1.msra.mxu0 %v1156
    %1214 = vmatprep.subr.mxu0 %v1161
    %1215 = vmatpush1.msra.mxu0 %v1160
    %1216 = vmatprep.subr.mxu0 %v1165
    %1217 = vmatpush1.msra.mxu0 %v1164
    %1218 = vmatprep.subr.mxu0 %v1169
    %1219 = vmatpush1.msra.mxu0 %v1168
    %1220 = vmatprep.subr.mxu0 %v1173
    %1221 = vmatpush1.msra.mxu0 %v1172
    %1222 = vmatprep.subr.mxu0 %v1177
    %1223 = vmatpush1.msra.mxu0 %v1176
    %1224 = vmatprep.subr.mxu0 %v1181
    %1225 = vmatpush1.msra.mxu0 %v1180
    %1226 = vmatprep.subr.mxu0 %v1185
    %1227 = vmatpush1.msra.mxu0 %v1184
    %1228 = vmatprep.subr.mxu0 %v1189
    %1229 = vmatpush1.msra.mxu0 %v1188
    %1230 = vmatprep.subr.mxu0 %v1193
    %1231 = vmatpush1.msra.mxu0 %v1192
    %1232 = vmatprep.subr.mxu0 %v1197
    %1233 = vmatpush1.msra.mxu0 %v1196
    %1234 = vmatprep.subr.mxu0 %v1201
    %1235 = vmatpush1.msra.mxu0 %v1200
    %1236 = vmatprep.subr.mxu0 0.0
    %1237 = vmatpush1.msra.mxu0 0.0
    %1238 = vmatprep.subr.mxu0 0.0
    %1239 = vmatpush1.msra.mxu0 0.0
    %1240 = vmatprep.subr.mxu0 0.0
    %1241 = vmatpush1.msra.mxu0 0.0
    %1242 = vmatprep.subr.mxu0 0.0
    %1243 = vmatpush1.msra.mxu0 0.0
    %1244 = vmatprep.subr.mxu0 0.0
    %1245 = vmatpush1.msra.mxu0 0.0
    %1246 = vmatprep.subr.mxu0 0.0
    %1247 = vmatpush1.msra.mxu0 0.0
    %1248 = vmatprep.subr.mxu0 0.0
    %1249 = vmatpush1.msra.mxu0 0.0
    %1250 = vmatprep.subr.mxu0 0.0
    %1251 = vmatpush1.msra.mxu0 0.0
    %1252 = vmatprep.subr.mxu0 0.0
    %1253 = vmatpush1.msra.mxu0 0.0
    %1254 = vmatprep.subr.mxu0 0.0
    %1255 = vmatpush1.msra.mxu0 0.0
    %1256 = vmatprep.subr.mxu0 0.0
    %1257 = vmatpush1.msra.mxu0 0.0
    %1258 = vmatprep.subr.mxu0 0.0
    %1259 = vmatpush1.msra.mxu0 0.0
    %1260 = vmatprep.subr.mxu0 0.0
    %1261 = vmatpush1.msra.mxu0 0.0
    %1262 = vmatprep.subr.mxu0 0.0
    %1263 = vmatpush1.msra.mxu0 0.0
    %1264 = vmatprep.subr.mxu0 0.0
    %1265 = vmatpush1.msra.mxu0 0.0
    %1266 = vmatprep.subr.mxu0 0.0
    %1267 = vmatpush1.msra.mxu0 0.0
    %1268 = vmatprep.mubr.f32.mxu0 0.0
    %1269 = vmatmul.mubr.f32.gmra.mrb[0].mxu0 %v1130
    %v1270 = vpop.f32.mrb[0].mxu0
    %v1271 = vadd.f32 0.0, %v1270
    %v1272 = vpop.f32.mrb[0].mxu0
    %v1273 = vadd.f32 0.0, %v1272
    %1274 = vdwg.mxu0
    %1275 = vmatprep.subr.mxu0 %v1143
    %1276 = vmatpush1.msra.mxu0 %v1142
    %1277 = vmatprep.subr.mxu0 %v1147
    %1278 = vmatpush1.msra.mxu0 %v1146
    %1279 = vmatprep.subr.mxu0 %v1151
    %1280 = vmatpush1.msra.mxu0 %v1150
    %1281 = vmatprep.subr.mxu0 %v1155
    %1282 = vmatpush1.msra.mxu0 %v1154
    %1283 = vmatprep.subr.mxu0 %v1159
    %1284 = vmatpush1.msra.mxu0 %v1158
    %1285 = vmatprep.subr.mxu0 %v1163
    %1286 = vmatpush1.msra.mxu0 %v1162
    %1287 = vmatprep.subr.mxu0 %v1167
    %1288 = vmatpush1.msra.mxu0 %v1166
    %1289 = vmatprep.subr.mxu0 %v1171
    %1290 = vmatpush1.msra.mxu0 %v1170
    %1291 = vmatprep.subr.mxu0 %v1175
    %1292 = vmatpush1.msra.mxu0 %v1174
    %1293 = vmatprep.subr.mxu0 %v1179
    %1294 = vmatpush1.msra.mxu0 %v1178
    %1295 = vmatprep.subr.mxu0 %v1183
    %1296 = vmatpush1.msra.mxu0 %v1182
    %1297 = vmatprep.subr.mxu0 %v1187
    %1298 = vmatpush1.msra.mxu0 %v1186
    %1299 = vmatprep.subr.mxu0 %v1191
    %1300 = vmatpush1.msra.mxu0 %v1190
    %1301 = vmatprep.subr.mxu0 %v1195
    %1302 = vmatpush1.msra.mxu0 %v1194
    %1303 = vmatprep.subr.mxu0 %v1199
    %1304 = vmatpush1.msra.mxu0 %v1198
    %1305 = vmatprep.subr.mxu0 %v1203
    %1306 = vmatpush1.msra.mxu0 %v1202
    %1307 = vmatprep.subr.mxu0 0.0
    %1308 = vmatpush1.msra.mxu0 0.0
    %1309 = vmatprep.subr.mxu0 0.0
    %1310 = vmatpush1.msra.mxu0 0.0
    %1311 = vmatprep.subr.mxu0 0.0
    %1312 = vmatpush1.msra.mxu0 0.0
    %1313 = vmatprep.subr.mxu0 0.0
    %1314 = vmatpush1.msra.mxu0 0.0
    %1315 = vmatprep.subr.mxu0 0.0
    %1316 = vmatpush1.msra.mxu0 0.0
    %1317 = vmatprep.subr.mxu0 0.0
    %1318 = vmatpush1.msra.mxu0 0.0
    %1319 = vmatprep.subr.mxu0 0.0
    %1320 = vmatpush1.msra.mxu0 0.0
    %1321 = vmatprep.subr.mxu0 0.0
    %1322 = vmatpush1.msra.mxu0 0.0
    %1323 = vmatprep.subr.mxu0 0.0
    %1324 = vmatpush1.msra.mxu0 0.0
    %1325 = vmatprep.subr.mxu0 0.0
    %1326 = vmatpush1.msra.mxu0 0.0
    %1327 = vmatprep.subr.mxu0 0.0
    %1328 = vmatpush1.msra.mxu0 0.0
    %1329 = vmatprep.subr.mxu0 0.0
    %1330 = vmatpush1.msra.mxu0 0.0
    %1331 = vmatprep.subr.mxu0 0.0
    %1332 = vmatpush1.msra.mxu0 0.0
    %1333 = vmatprep.subr.mxu0 0.0
    %1334 = vmatpush1.msra.mxu0 0.0
    %1335 = vmatprep.subr.mxu0 0.0
    %1336 = vmatpush1.msra.mxu0 0.0
    %1337 = vmatprep.subr.mxu0 0.0
    %1338 = vmatpush1.msra.mxu0 0.0
    %1339 = vmatprep.mubr.f32.mxu0 0.0
    %1340 = vmatmul.mubr.f32.gmra.mrb[0].mxu0 %v1130
    %v1341 = vpop.f32.mrb[0].mxu0
    %v1342 = vadd.f32 0.0, %v1341
    %v1343 = vpop.f32.mrb[0].mxu0
    %v1344 = vadd.f32 0.0, %v1343
    %1345 = vdwg.mxu0
    %v1346 = vadd.f32 %v1136, %v1271
    %v1347 = vadd.f32 %v1137, %v1273
    %v1348 = vadd.f32 %v1138, %v1342
    %v1349 = vadd.f32 %v1139, %v1344
    %v1350 = vxor.u32 %v1346, 2147483648
    %v1351 = vmul.f32 %v1350, 1.442695
    %v1352 = vpow.pop %v1351
    %v1353 = vadd.f32 %v1352, 1.0
    %v1354 = vrcp.pop %v1353
    %v1355 = vmul.f32 1.0, %v1354
    %v1356 = vxor.u32 %v1347, 2147483648
    %v1357 = vmul.f32 %v1356, 1.442695
    %v1358 = vpow.pop %v1357
    %v1359 = vadd.f32 %v1358, 1.0
    %v1360 = vrcp.pop %v1359
    %v1361 = vmul.f32 1.0, %v1360
    %v1362 = vtanh.pop %v1348
    %v1363 = vxor.u32 %v1349, 2147483648
    %v1364 = vmul.f32 %v1363, 1.442695
    %v1365 = vpow.pop %v1364
    %v1366 = vadd.f32 %v1365, 1.0
    %v1367 = vrcp.pop %v1366
    %v1368 = vmul.f32 1.0, %v1367
    %v1369 = vmul.f32 %v1361, %v1128
    %v1370 = vmul.f32 %v1355, %v1362
    %v1371 = vadd.f32 %v1369, %v1370
    %v1372 = vtanh.pop %v1371
    %v1373 = vmul.f32 %v1368, %v1372
    %s1374 = scalar_lea.vmem [#allocation2], 24
    %1375 = vst [vmem:[%s1374] sm:$0xff] %v1373
    %s1376 = smul.u32 4, 4
    %s1377 = smul.addr %s1376, 8
    %s1378 = scalar_lea.vmem [#allocation3], %s1377
    %v1379 = vld [vmem:[%s1378] sm:$0xff]
    %v1380 = vld [vmem:[%s1378 + $0x8] sm:$0xff]
    %v1381 = vld [vmem:[%s1378 + $0x10] sm:$0xff]
    %v1382 = vld [vmem:[%s1378 + $0x18] sm:$0xff]
    %v1383 = vld [vmem:[#allocation7] sm:$0xff]
    %v1384 = vld [vmem:[#allocation7 + $0x8] sm:$0xff]
    %v1385 = vld [vmem:[#allocation7 + $0x10] sm:$0xff]
    %v1386 = vld [vmem:[#allocation7 + $0x18] sm:$0xff]
    %v1387 = vld [vmem:[#allocation7 + $0x20] sm:$0xff]
    %v1388 = vld [vmem:[#allocation7 + $0x28] sm:$0xff]
    %v1389 = vld [vmem:[#allocation7 + $0x30] sm:$0xff]
    %v1390 = vld [vmem:[#allocation7 + $0x38] sm:$0xff]
    %v1391 = vld [vmem:[#allocation7 + $0x40] sm:$0xff]
    %v1392 = vld [vmem:[#allocation7 + $0x48] sm:$0xff]
    %v1393 = vld [vmem:[#allocation7 + $0x50] sm:$0xff]
    %v1394 = vld [vmem:[#allocation7 + $0x58] sm:$0xff]
    %v1395 = vld [vmem:[#allocation7 + $0x60] sm:$0xff]
    %v1396 = vld [vmem:[#allocation7 + $0x68] sm:$0xff]
    %v1397 = vld [vmem:[#allocation7 + $0x70] sm:$0xff]
    %v1398 = vld [vmem:[#allocation7 + $0x78] sm:$0xff]
    %v1399 = vld [vmem:[#allocation7 + $0x80] sm:$0xff]
    %v1400 = vld [vmem:[#allocation7 + $0x88] sm:$0xff]
    %v1401 = vld [vmem:[#allocation7 + $0x90] sm:$0xff]
    %v1402 = vld [vmem:[#allocation7 + $0x98] sm:$0xff]
    %v1403 = vld [vmem:[#allocation7 + $0xa0] sm:$0xff]
    %v1404 = vld [vmem:[#allocation7 + $0xa8] sm:$0xff]
    %v1405 = vld [vmem:[#allocation7 + $0xb0] sm:$0xff]
    %v1406 = vld [vmem:[#allocation7 + $0xb8] sm:$0xff]
    %v1407 = vld [vmem:[#allocation7 + $0xc0] sm:$0xff]
    %v1408 = vld [vmem:[#allocation7 + $0xc8] sm:$0xff]
    %v1409 = vld [vmem:[#allocation7 + $0xd0] sm:$0xff]
    %v1410 = vld [vmem:[#allocation7 + $0xd8] sm:$0xff]
    %v1411 = vld [vmem:[#allocation7 + $0xe0] sm:$0xff]
    %v1412 = vld [vmem:[#allocation7 + $0xe8] sm:$0xff]
    %v1413 = vld [vmem:[#allocation7 + $0xf0] sm:$0xff]
    %v1414 = vld [vmem:[#allocation7 + $0xf8] sm:$0xff]
    %v1415 = vld [vmem:[#allocation7 + $0x100] sm:$0xff]
    %v1416 = vld [vmem:[#allocation7 + $0x108] sm:$0xff]
    %v1417 = vld [vmem:[#allocation7 + $0x110] sm:$0xff]
    %v1418 = vld [vmem:[#allocation7 + $0x118] sm:$0xff]
    %v1419 = vld [vmem:[#allocation7 + $0x120] sm:$0xff]
    %v1420 = vld [vmem:[#allocation7 + $0x128] sm:$0xff]
    %v1421 = vld [vmem:[#allocation7 + $0x130] sm:$0xff]
    %v1422 = vld [vmem:[#allocation7 + $0x138] sm:$0xff]
    %v1423 = vld [vmem:[#allocation7 + $0x140] sm:$0xff]
    %v1424 = vld [vmem:[#allocation7 + $0x148] sm:$0xff]
    %v1425 = vld [vmem:[#allocation7 + $0x150] sm:$0xff]
    %v1426 = vld [vmem:[#allocation7 + $0x158] sm:$0xff]
    %v1427 = vld [vmem:[#allocation7 + $0x160] sm:$0xff]
    %v1428 = vld [vmem:[#allocation7 + $0x168] sm:$0xff]
    %v1429 = vld [vmem:[#allocation7 + $0x170] sm:$0xff]
    %v1430 = vld [vmem:[#allocation7 + $0x178] sm:$0xff]
    %v1431 = vld [vmem:[#allocation7 + $0x180] sm:$0xff]
    %v1432 = vld [vmem:[#allocation7 + $0x188] sm:$0xff]
    %v1433 = vld [vmem:[#allocation7 + $0x190] sm:$0xff]
    %v1434 = vld [vmem:[#allocation7 + $0x198] sm:$0xff]
    %v1435 = vld [vmem:[#allocation7 + $0x1a0] sm:$0xff]
    %v1436 = vld [vmem:[#allocation7 + $0x1a8] sm:$0xff]
    %v1437 = vld [vmem:[#allocation7 + $0x1b0] sm:$0xff]
    %v1438 = vld [vmem:[#allocation7 + $0x1b8] sm:$0xff]
    %v1439 = vld [vmem:[#allocation7 + $0x1c0] sm:$0xff]
    %v1440 = vld [vmem:[#allocation7 + $0x1c8] sm:$0xff]
    %v1441 = vld [vmem:[#allocation7 + $0x1d0] sm:$0xff]
    %v1442 = vld [vmem:[#allocation7 + $0x1d8] sm:$0xff]
    %v1443 = vld [vmem:[#allocation7 + $0x1e0] sm:$0xff]
    %v1444 = vld [vmem:[#allocation7 + $0x1e8] sm:$0xff]
    %v1445 = vld [vmem:[#allocation7 + $0x1f0] sm:$0xff]
    %v1446 = vld [vmem:[#allocation7 + $0x1f8] sm:$0xff]
    %1447 = vmatprep.subr.mxu0 %v1384
    %1448 = vmatpush1.msra.mxu0 %v1383
    %1449 = vmatprep.subr.mxu0 %v1388
    %1450 = vmatpush1.msra.mxu0 %v1387
    %1451 = vmatprep.subr.mxu0 %v1392
    %1452 = vmatpush1.msra.mxu0 %v1391
    %1453 = vmatprep.subr.mxu0 %v1396
    %1454 = vmatpush1.msra.mxu0 %v1395
    %1455 = vmatprep.subr.mxu0 %v1400
    %1456 = vmatpush1.msra.mxu0 %v1399
    %1457 = vmatprep.subr.mxu0 %v1404
    %1458 = vmatpush1.msra.mxu0 %v1403
    %1459 = vmatprep.subr.mxu0 %v1408
    %1460 = vmatpush1.msra.mxu0 %v1407
    %1461 = vmatprep.subr.mxu0 %v1412
    %1462 = vmatpush1.msra.mxu0 %v1411
    %1463 = vmatprep.subr.mxu0 %v1416
    %1464 = vmatpush1.msra.mxu0 %v1415
    %1465 = vmatprep.subr.mxu0 %v1420
    %1466 = vmatpush1.msra.mxu0 %v1419
    %1467 = vmatprep.subr.mxu0 %v1424
    %1468 = vmatpush1.msra.mxu0 %v1423
    %1469 = vmatprep.subr.mxu0 %v1428
    %1470 = vmatpush1.msra.mxu0 %v1427
    %1471 = vmatprep.subr.mxu0 %v1432
    %1472 = vmatpush1.msra.mxu0 %v1431
    %1473 = vmatprep.subr.mxu0 %v1436
    %1474 = vmatpush1.msra.mxu0 %v1435
    %1475 = vmatprep.subr.mxu0 %v1440
    %1476 = vmatpush1.msra.mxu0 %v1439
    %1477 = vmatprep.subr.mxu0 %v1444
    %1478 = vmatpush1.msra.mxu0 %v1443
    %1479 = vmatprep.subr.mxu0 0.0
    %1480 = vmatpush1.msra.mxu0 0.0
    %1481 = vmatprep.subr.mxu0 0.0
    %1482 = vmatpush1.msra.mxu0 0.0
    %1483 = vmatprep.subr.mxu0 0.0
    %1484 = vmatpush1.msra.mxu0 0.0
    %1485 = vmatprep.subr.mxu0 0.0
    %1486 = vmatpush1.msra.mxu0 0.0
    %1487 = vmatprep.subr.mxu0 0.0
    %1488 = vmatpush1.msra.mxu0 0.0
    %1489 = vmatprep.subr.mxu0 0.0
    %1490 = vmatpush1.msra.mxu0 0.0
    %1491 = vmatprep.subr.mxu0 0.0
    %1492 = vmatpush1.msra.mxu0 0.0
    %1493 = vmatprep.subr.mxu0 0.0
    %1494 = vmatpush1.msra.mxu0 0.0
    %1495 = vmatprep.subr.mxu0 0.0
    %1496 = vmatpush1.msra.mxu0 0.0
    %1497 = vmatprep.subr.mxu0 0.0
    %1498 = vmatpush1.msra.mxu0 0.0
    %1499 = vmatprep.subr.mxu0 0.0
    %1500 = vmatpush1.msra.mxu0 0.0
    %1501 = vmatprep.subr.mxu0 0.0
    %1502 = vmatpush1.msra.mxu0 0.0
    %1503 = vmatprep.subr.mxu0 0.0
    %1504 = vmatpush1.msra.mxu0 0.0
    %1505 = vmatprep.subr.mxu0 0.0
    %1506 = vmatpush1.msra.mxu0 0.0
    %1507 = vmatprep.subr.mxu0 0.0
    %1508 = vmatpush1.msra.mxu0 0.0
    %1509 = vmatprep.subr.mxu0 0.0
    %1510 = vmatpush1.msra.mxu0 0.0
    %1511 = vmatprep.mubr.f32.mxu0 0.0
    %1512 = vmatmul.mubr.f32.gmra.mrb[0].mxu0 %v1373
    %v1513 = vpop.f32.mrb[0].mxu0
    %v1514 = vadd.f32 0.0, %v1513
    %v1515 = vpop.f32.mrb[0].mxu0
    %v1516 = vadd.f32 0.0, %v1515
    %1517 = vdwg.mxu0
    %1518 = vmatprep.subr.mxu0 %v1386
    %1519 = vmatpush1.msra.mxu0 %v1385
    %1520 = vmatprep.subr.mxu0 %v1390
    %1521 = vmatpush1.msra.mxu0 %v1389
    %1522 = vmatprep.subr.mxu0 %v1394
    %1523 = vmatpush1.msra.mxu0 %v1393
    %1524 = vmatprep.subr.mxu0 %v1398
    %1525 = vmatpush1.msra.mxu0 %v1397
    %1526 = vmatprep.subr.mxu0 %v1402
    %1527 = vmatpush1.msra.mxu0 %v1401
    %1528 = vmatprep.subr.mxu0 %v1406
    %1529 = vmatpush1.msra.mxu0 %v1405
    %1530 = vmatprep.subr.mxu0 %v1410
    %1531 = vmatpush1.msra.mxu0 %v1409
    %1532 = vmatprep.subr.mxu0 %v1414
    %1533 = vmatpush1.msra.mxu0 %v1413
    %1534 = vmatprep.subr.mxu0 %v1418
    %1535 = vmatpush1.msra.mxu0 %v1417
    %1536 = vmatprep.subr.mxu0 %v1422
    %1537 = vmatpush1.msra.mxu0 %v1421
    %1538 = vmatprep.subr.mxu0 %v1426
    %1539 = vmatpush1.msra.mxu0 %v1425
    %1540 = vmatprep.subr.mxu0 %v1430
    %1541 = vmatpush1.msra.mxu0 %v1429
    %1542 = vmatprep.subr.mxu0 %v1434
    %1543 = vmatpush1.msra.mxu0 %v1433
    %1544 = vmatprep.subr.mxu0 %v1438
    %1545 = vmatpush1.msra.mxu0 %v1437
    %1546 = vmatprep.subr.mxu0 %v1442
    %1547 = vmatpush1.msra.mxu0 %v1441
    %1548 = vmatprep.subr.mxu0 %v1446
    %1549 = vmatpush1.msra.mxu0 %v1445
    %1550 = vmatprep.subr.mxu0 0.0
    %1551 = vmatpush1.msra.mxu0 0.0
    %1552 = vmatprep.subr.mxu0 0.0
    %1553 = vmatpush1.msra.mxu0 0.0
    %1554 = vmatprep.subr.mxu0 0.0
    %1555 = vmatpush1.msra.mxu0 0.0
    %1556 = vmatprep.subr.mxu0 0.0
    %1557 = vmatpush1.msra.mxu0 0.0
    %1558 = vmatprep.subr.mxu0 0.0
    %1559 = vmatpush1.msra.mxu0 0.0
    %1560 = vmatprep.subr.mxu0 0.0
    %1561 = vmatpush1.msra.mxu0 0.0
    %1562 = vmatprep.subr.mxu0 0.0
    %1563 = vmatpush1.msra.mxu0 0.0
    %1564 = vmatprep.subr.mxu0 0.0
    %1565 = vmatpush1.msra.mxu0 0.0
    %1566 = vmatprep.subr.mxu0 0.0
    %1567 = vmatpush1.msra.mxu0 0.0
    %1568 = vmatprep.subr.mxu0 0.0
    %1569 = vmatpush1.msra.mxu0 0.0
    %1570 = vmatprep.subr.mxu0 0.0
    %1571 = vmatpush1.msra.mxu0 0.0
    %1572 = vmatprep.subr.mxu0 0.0
    %1573 = vmatpush1.msra.mxu0 0.0
    %1574 = vmatprep.subr.mxu0 0.0
    %1575 = vmatpush1.msra.mxu0 0.0
    %1576 = vmatprep.subr.mxu0 0.0
    %1577 = vmatpush1.msra.mxu0 0.0
    %1578 = vmatprep.subr.mxu0 0.0
    %1579 = vmatpush1.msra.mxu0 0.0
    %1580 = vmatprep.subr.mxu0 0.0
    %1581 = vmatpush1.msra.mxu0 0.0
    %1582 = vmatprep.mubr.f32.mxu0 0.0
    %1583 = vmatmul.mubr.f32.gmra.mrb[0].mxu0 %v1373
    %v1584 = vpop.f32.mrb[0].mxu0
    %v1585 = vadd.f32 0.0, %v1584
    %v1586 = vpop.f32.mrb[0].mxu0
    %v1587 = vadd.f32 0.0, %v1586
    %1588 = vdwg.mxu0
    %v1589 = vadd.f32 %v1379, %v1514
    %v1590 = vadd.f32 %v1380, %v1516
    %v1591 = vadd.f32 %v1381, %v1585
    %v1592 = vadd.f32 %v1382, %v1587
    %v1593 = vxor.u32 %v1589, 2147483648
    %v1594 = vmul.f32 %v1593, 1.442695
    %v1595 = vpow.pop %v1594
    %v1596 = vadd.f32 %v1595, 1.0
    %v1597 = vrcp.pop %v1596
    %v1598 = vmul.f32 1.0, %v1597
    %v1599 = vxor.u32 %v1590, 2147483648
    %v1600 = vmul.f32 %v1599, 1.442695
    %v1601 = vpow.pop %v1600
    %v1602 = vadd.f32 %v1601, 1.0
    %v1603 = vrcp.pop %v1602
    %v1604 = vmul.f32 1.0, %v1603
    %v1605 = vtanh.pop %v1591
    %v1606 = vxor.u32 %v1592, 2147483648
    %v1607 = vmul.f32 %v1606, 1.442695
    %v1608 = vpow.pop %v1607
    %v1609 = vadd.f32 %v1608, 1.0
    %v1610 = vrcp.pop %v1609
    %v1611 = vmul.f32 1.0, %v1610
    %v1612 = vmul.f32 %v1604, %v1371
    %v1613 = vmul.f32 %v1598, %v1605
    %v1614 = vadd.f32 %v1612, %v1613
    %v1615 = vtanh.pop %v1614
    %v1616 = vmul.f32 %v1611, %v1615
    %s1617 = scalar_lea.vmem [#allocation2], 32
    %1618 = vst [vmem:[%s1617] sm:$0xff] %v1616
    %s1619 = smul.u32 5, 4
    %s1620 = smul.addr %s1619, 8
    %s1621 = scalar_lea.vmem [#allocation3], %s1620
    %v1622 = vld [vmem:[%s1621] sm:$0xff]
    %v1623 = vld [vmem:[%s1621 + $0x8] sm:$0xff]
    %v1624 = vld [vmem:[%s1621 + $0x10] sm:$0xff]
    %v1625 = vld [vmem:[%s1621 + $0x18] sm:$0xff]
    %v1626 = vld [vmem:[#allocation7] sm:$0xff]
    %v1627 = vld [vmem:[#allocation7 + $0x8] sm:$0xff]
    %v1628 = vld [vmem:[#allocation7 + $0x10] sm:$0xff]
    %v1629 = vld [vmem:[#allocation7 + $0x18] sm:$0xff]
    %v1630 = vld [vmem:[#allocation7 + $0x20] sm:$0xff]
    %v1631 = vld [vmem:[#allocation7 + $0x28] sm:$0xff]
    %v1632 = vld [vmem:[#allocation7 + $0x30] sm:$0xff]
    %v1633 = vld [vmem:[#allocation7 + $0x38] sm:$0xff]
    %v1634 = vld [vmem:[#allocation7 + $0x40] sm:$0xff]
    %v1635 = vld [vmem:[#allocation7 + $0x48] sm:$0xff]
    %v1636 = vld [vmem:[#allocation7 + $0x50] sm:$0xff]
    %v1637 = vld [vmem:[#allocation7 + $0x58] sm:$0xff]
    %v1638 = vld [vmem:[#allocation7 + $0x60] sm:$0xff]
    %v1639 = vld [vmem:[#allocation7 + $0x68] sm:$0xff]
    %v1640 = vld [vmem:[#allocation7 + $0x70] sm:$0xff]
    %v1641 = vld [vmem:[#allocation7 + $0x78] sm:$0xff]
    %v1642 = vld [vmem:[#allocation7 + $0x80] sm:$0xff]
    %v1643 = vld [vmem:[#allocation7 + $0x88] sm:$0xff]
    %v1644 = vld [vmem:[#allocation7 + $0x90] sm:$0xff]
    %v1645 = vld [vmem:[#allocation7 + $0x98] sm:$0xff]
    %v1646 = vld [vmem:[#allocation7 + $0xa0] sm:$0xff]
    %v1647 = vld [vmem:[#allocation7 + $0xa8] sm:$0xff]
    %v1648 = vld [vmem:[#allocation7 + $0xb0] sm:$0xff]
    %v1649 = vld [vmem:[#allocation7 + $0xb8] sm:$0xff]
    %v1650 = vld [vmem:[#allocation7 + $0xc0] sm:$0xff]
    %v1651 = vld [vmem:[#allocation7 + $0xc8] sm:$0xff]
    %v1652 = vld [vmem:[#allocation7 + $0xd0] sm:$0xff]
    %v1653 = vld [vmem:[#allocation7 + $0xd8] sm:$0xff]
    %v1654 = vld [vmem:[#allocation7 + $0xe0] sm:$0xff]
    %v1655 = vld [vmem:[#allocation7 + $0xe8] sm:$0xff]
    %v1656 = vld [vmem:[#allocation7 + $0xf0] sm:$0xff]
    %v1657 = vld [vmem:[#allocation7 + $0xf8] sm:$0xff]
    %v1658 = vld [vmem:[#allocation7 + $0x100] sm:$0xff]
    %v1659 = vld [vmem:[#allocation7 + $0x108] sm:$0xff]
    %v1660 = vld [vmem:[#allocation7 + $0x110] sm:$0xff]
    %v1661 = vld [vmem:[#allocation7 + $0x118] sm:$0xff]
    %v1662 = vld [vmem:[#allocation7 + $0x120] sm:$0xff]
    %v1663 = vld [vmem:[#allocation7 + $0x128] sm:$0xff]
    %v1664 = vld [vmem:[#allocation7 + $0x130] sm:$0xff]
    %v1665 = vld [vmem:[#allocation7 + $0x138] sm:$0xff]
    %v1666 = vld [vmem:[#allocation7 + $0x140] sm:$0xff]
    %v1667 = vld [vmem:[#allocation7 + $0x148] sm:$0xff]
    %v1668 = vld [vmem:[#allocation7 + $0x150] sm:$0xff]
    %v1669 = vld [vmem:[#allocation7 + $0x158] sm:$0xff]
    %v1670 = vld [vmem:[#allocation7 + $0x160] sm:$0xff]
    %v1671 = vld [vmem:[#allocation7 + $0x168] sm:$0xff]
    %v1672 = vld [vmem:[#allocation7 + $0x170] sm:$0xff]
    %v1673 = vld [vmem:[#allocation7 + $0x178] sm:$0xff]
    %v1674 = vld [vmem:[#allocation7 + $0x180] sm:$0xff]
    %v1675 = vld [vmem:[#allocation7 + $0x188] sm:$0xff]
    %v1676 = vld [vmem:[#allocation7 + $0x190] sm:$0xff]
    %v1677 = vld [vmem:[#allocation7 + $0x198] sm:$0xff]
    %v1678 = vld [vmem:[#allocation7 + $0x1a0] sm:$0xff]
    %v1679 = vld [vmem:[#allocation7 + $0x1a8] sm:$0xff]
    %v1680 = vld [vmem:[#allocation7 + $0x1b0] sm:$0xff]
    %v1681 = vld [vmem:[#allocation7 + $0x1b8] sm:$0xff]
    %v1682 = vld [vmem:[#allocation7 + $0x1c0] sm:$0xff]
    %v1683 = vld [vmem:[#allocation7 + $0x1c8] sm:$0xff]
    %v1684 = vld [vmem:[#allocation7 + $0x1d0] sm:$0xff]
    %v1685 = vld [vmem:[#allocation7 + $0x1d8] sm:$0xff]
    %v1686 = vld [vmem:[#allocation7 + $0x1e0] sm:$0xff]
    %v1687 = vld [vmem:[#allocation7 + $0x1e8] sm:$0xff]
    %v1688 = vld [vmem:[#allocation7 + $0x1f0] sm:$0xff]
    %v1689 = vld [vmem:[#allocation7 + $0x1f8] sm:$0xff]
    %1690 = vmatprep.subr.mxu0 %v1627
    %1691 = vmatpush1.msra.mxu0 %v1626
    %1692 = vmatprep.subr.mxu0 %v1631
    %1693 = vmatpush1.msra.mxu0 %v1630
    %1694 = vmatprep.subr.mxu0 %v1635
    %1695 = vmatpush1.msra.mxu0 %v1634
    %1696 = vmatprep.subr.mxu0 %v1639
    %1697 = vmatpush1.msra.mxu0 %v1638
    %1698 = vmatprep.subr.mxu0 %v1643
    %1699 = vmatpush1.msra.mxu0 %v1642
    %1700 = vmatprep.subr.mxu0 %v1647
    %1701 = vmatpush1.msra.mxu0 %v1646
    %1702 = vmatprep.subr.mxu0 %v1651
    %1703 = vmatpush1.msra.mxu0 %v1650
    %1704 = vmatprep.subr.mxu0 %v1655
    %1705 = vmatpush1.msra.mxu0 %v1654
    %1706 = vmatprep.subr.mxu0 %v1659
    %1707 = vmatpush1.msra.mxu0 %v1658
    %1708 = vmatprep.subr.mxu0 %v1663
    %1709 = vmatpush1.msra.mxu0 %v1662
    %1710 = vmatprep.subr.mxu0 %v1667
    %1711 = vmatpush1.msra.mxu0 %v1666
    %1712 = vmatprep.subr.mxu0 %v1671
    %1713 = vmatpush1.msra.mxu0 %v1670
    %1714 = vmatprep.subr.mxu0 %v1675
    %1715 = vmatpush1.msra.mxu0 %v1674
    %1716 = vmatprep.subr.mxu0 %v1679
    %1717 = vmatpush1.msra.mxu0 %v1678
    %1718 = vmatprep.subr.mxu0 %v1683
    %1719 = vmatpush1.msra.mxu0 %v1682
    %1720 = vmatprep.subr.mxu0 %v1687
    %1721 = vmatpush1.msra.mxu0 %v1686
    %1722 = vmatprep.subr.mxu0 0.0
    %1723 = vmatpush1.msra.mxu0 0.0
    %1724 = vmatprep.subr.mxu0 0.0
    %1725 = vmatpush1.msra.mxu0 0.0
    %1726 = vmatprep.subr.mxu0 0.0
    %1727 = vmatpush1.msra.mxu0 0.0
    %1728 = vmatprep.subr.mxu0 0.0
    %1729 = vmatpush1.msra.mxu0 0.0
    %1730 = vmatprep.subr.mxu0 0.0
    %1731 = vmatpush1.msra.mxu0 0.0
    %1732 = vmatprep.subr.mxu0 0.0
    %1733 = vmatpush1.msra.mxu0 0.0
    %1734 = vmatprep.subr.mxu0 0.0
    %1735 = vmatpush1.msra.mxu0 0.0
    %1736 = vmatprep.subr.mxu0 0.0
    %1737 = vmatpush1.msra.mxu0 0.0
    %1738 = vmatprep.subr.mxu0 0.0
    %1739 = vmatpush1.msra.mxu0 0.0
    %1740 = vmatprep.subr.mxu0 0.0
    %1741 = vmatpush1.msra.mxu0 0.0
    %1742 = vmatprep.subr.mxu0 0.0
    %1743 = vmatpush1.msra.mxu0 0.0
    %1744 = vmatprep.subr.mxu0 0.0
    %1745 = vmatpush1.msra.mxu0 0.0
    %1746 = vmatprep.subr.mxu0 0.0
    %1747 = vmatpush1.msra.mxu0 0.0
    %1748 = vmatprep.subr.mxu0 0.0
    %1749 = vmatpush1.msra.mxu0 0.0
    %1750 = vmatprep.subr.mxu0 0.0
    %1751 = vmatpush1.msra.mxu0 0.0
    %1752 = vmatprep.subr.mxu0 0.0
    %1753 = vmatpush1.msra.mxu0 0.0
    %1754 = vmatprep.mubr.f32.mxu0 0.0
    %1755 = vmatmul.mubr.f32.gmra.mrb[0].mxu0 %v1616
    %v1756 = vpop.f32.mrb[0].mxu0
    %v1757 = vadd.f32 0.0, %v1756
    %v1758 = vpop.f32.mrb[0].mxu0
    %v1759 = vadd.f32 0.0, %v1758
    %1760 = vdwg.mxu0
    %1761 = vmatprep.subr.mxu0 %v1629
    %1762 = vmatpush1.msra.mxu0 %v1628
    %1763 = vmatprep.subr.mxu0 %v1633
    %1764 = vmatpush1.msra.mxu0 %v1632
    %1765 = vmatprep.subr.mxu0 %v1637
    %1766 = vmatpush1.msra.mxu0 %v1636
    %1767 = vmatprep.subr.mxu0 %v1641
    %1768 = vmatpush1.msra.mxu0 %v1640
    %1769 = vmatprep.subr.mxu0 %v1645
    %1770 = vmatpush1.msra.mxu0 %v1644
    %1771 = vmatprep.subr.mxu0 %v1649
    %1772 = vmatpush1.msra.mxu0 %v1648
    %1773 = vmatprep.subr.mxu0 %v1653
    %1774 = vmatpush1.msra.mxu0 %v1652
    %1775 = vmatprep.subr.mxu0 %v1657
    %1776 = vmatpush1.msra.mxu0 %v1656
    %1777 = vmatprep.subr.mxu0 %v1661
    %1778 = vmatpush1.msra.mxu0 %v1660
    %1779 = vmatprep.subr.mxu0 %v1665
    %1780 = vmatpush1.msra.mxu0 %v1664
    %1781 = vmatprep.subr.mxu0 %v1669
    %1782 = vmatpush1.msra.mxu0 %v1668
    %1783 = vmatprep.subr.mxu0 %v1673
    %1784 = vmatpush1.msra.mxu0 %v1672
    %1785 = vmatprep.subr.mxu0 %v1677
    %1786 = vmatpush1.msra.mxu0 %v1676
    %1787 = vmatprep.subr.mxu0 %v1681
    %1788 = vmatpush1.msra.mxu0 %v1680
    %1789 = vmatprep.subr.mxu0 %v1685
    %1790 = vmatpush1.msra.mxu0 %v1684
    %1791 = vmatprep.subr.mxu0 %v1689
    %1792 = vmatpush1.msra.mxu0 %v1688
    %1793 = vmatprep.subr.mxu0 0.0
    %1794 = vmatpush1.msra.mxu0 0.0
    %1795 = vmatprep.subr.mxu0 0.0
    %1796 = vmatpush1.msra.mxu0 0.0
    %1797 = vmatprep.subr.mxu0 0.0
    %1798 = vmatpush1.msra.mxu0 0.0
    %1799 = vmatprep.subr.mxu0 0.0
    %1800 = vmatpush1.msra.mxu0 0.0
    %1801 = vmatprep.subr.mxu0 0.0
    %1802 = vmatpush1.msra.mxu0 0.0
    %1803 = vmatprep.subr.mxu0 0.0
    %1804 = vmatpush1.msra.mxu0 0.0
    %1805 = vmatprep.subr.mxu0 0.0
    %1806 = vmatpush1.msra.mxu0 0.0
    %1807 = vmatprep.subr.mxu0 0.0
    %1808 = vmatpush1.msra.mxu0 0.0
    %1809 = vmatprep.subr.mxu0 0.0
    %1810 = vmatpush1.msra.mxu0 0.0
    %1811 = vmatprep.subr.mxu0 0.0
    %1812 = vmatpush1.msra.mxu0 0.0
    %1813 = vmatprep.subr.mxu0 0.0
    %1814 = vmatpush1.msra.mxu0 0.0
    %1815 = vmatprep.subr.mxu0 0.0
    %1816 = vmatpush1.msra.mxu0 0.0
    %1817 = vmatprep.subr.mxu0 0.0
    %1818 = vmatpush1.msra.mxu0 0.0
    %1819 = vmatprep.subr.mxu0 0.0
    %1820 = vmatpush1.msra.mxu0 0.0
    %1821 = vmatprep.subr.mxu0 0.0
    %1822 = vmatpush1.msra.mxu0 0.0
    %1823 = vmatprep.subr.mxu0 0.0
    %1824 = vmatpush1.msra.mxu0 0.0
    %1825 = vmatprep.mubr.f32.mxu0 0.0
    %1826 = vmatmul.mubr.f32.gmra.mrb[0].mxu0 %v1616
    %v1827 = vpop.f32.mrb[0].mxu0
    %v1828 = vadd.f32 0.0, %v1827
    %v1829 = vpop.f32.mrb[0].mxu0
    %v1830 = vadd.f32 0.0, %v1829
    %1831 = vdwg.mxu0
    %v1832 = vadd.f32 %v1622, %v1757
    %v1833 = vadd.f32 %v1623, %v1759
    %v1834 = vadd.f32 %v1624, %v1828
    %v1835 = vadd.f32 %v1625, %v1830
    %v1836 = vxor.u32 %v1832, 2147483648
    %v1837 = vmul.f32 %v1836, 1.442695
    %v1838 = vpow.pop %v1837
    %v1839 = vadd.f32 %v1838, 1.0
    %v1840 = vrcp.pop %v1839
    %v1841 = vmul.f32 1.0, %v1840
    %v1842 = vxor.u32 %v1833, 2147483648
    %v1843 = vmul.f32 %v1842, 1.442695
    %v1844 = vpow.pop %v1843
    %v1845 = vadd.f32 %v1844, 1.0
    %v1846 = vrcp.pop %v1845
    %v1847 = vmul.f32 1.0, %v1846
    %v1848 = vtanh.pop %v1834
    %v1849 = vxor.u32 %v1835, 2147483648
    %v1850 = vmul.f32 %v1849, 1.442695
    %v1851 = vpow.pop %v1850
    %v1852 = vadd.f32 %v1851, 1.0
    %v1853 = vrcp.pop %v1852
    %v1854 = vmul.f32 1.0, %v1853
    %v1855 = vmul.f32 %v1847, %v1614
    %v1856 = vmul.f32 %v1841, %v1848
    %v1857 = vadd.f32 %v1855, %v1856
    %v1858 = vtanh.pop %v1857
    %v1859 = vmul.f32 %v1854, %v1858
    %s1860 = scalar_lea.vmem [#allocation2], 40
    %1861 = vst [vmem:[%s1860] sm:$0xff] %v1859
    %s1862 = smul.u32 6, 4
    %s1863 = smul.addr %s1862, 8
    %s1864 = scalar_lea.vmem [#allocation3], %s1863
    %v1865 = vld [vmem:[%s1864] sm:$0xff]
    %v1866 = vld [vmem:[%s1864 + $0x8] sm:$0xff]
    %v1867 = vld [vmem:[%s1864 + $0x10] sm:$0xff]
    %v1868 = vld [vmem:[%s1864 + $0x18] sm:$0xff]
    %v1869 = vld [vmem:[#allocation7] sm:$0xff]
    %v1870 = vld [vmem:[#allocation7 + $0x8] sm:$0xff]
    %v1871 = vld [vmem:[#allocation7 + $0x10] sm:$0xff]
    %v1872 = vld [vmem:[#allocation7 + $0x18] sm:$0xff]
    %v1873 = vld [vmem:[#allocation7 + $0x20] sm:$0xff]
    %v1874 = vld [vmem:[#allocation7 + $0x28] sm:$0xff]
    %v1875 = vld [vmem:[#allocation7 + $0x30] sm:$0xff]
    %v1876 = vld [vmem:[#allocation7 + $0x38] sm:$0xff]
    %v1877 = vld [vmem:[#allocation7 + $0x40] sm:$0xff]
    %v1878 = vld [vmem:[#allocation7 + $0x48] sm:$0xff]
    %v1879 = vld [vmem:[#allocation7 + $0x50] sm:$0xff]
    %v1880 = vld [vmem:[#allocation7 + $0x58] sm:$0xff]
    %v1881 = vld [vmem:[#allocation7 + $0x60] sm:$0xff]
    %v1882 = vld [vmem:[#allocation7 + $0x68] sm:$0xff]
    %v1883 = vld [vmem:[#allocation7 + $0x70] sm:$0xff]
    %v1884 = vld [vmem:[#allocation7 + $0x78] sm:$0xff]
    %v1885 = vld [vmem:[#allocation7 + $0x80] sm:$0xff]
    %v1886 = vld [vmem:[#allocation7 + $0x88] sm:$0xff]
    %v1887 = vld [vmem:[#allocation7 + $0x90] sm:$0xff]
    %v1888 = vld [vmem:[#allocation7 + $0x98] sm:$0xff]
    %v1889 = vld [vmem:[#allocation7 + $0xa0] sm:$0xff]
    %v1890 = vld [vmem:[#allocation7 + $0xa8] sm:$0xff]
    %v1891 = vld [vmem:[#allocation7 + $0xb0] sm:$0xff]
    %v1892 = vld [vmem:[#allocation7 + $0xb8] sm:$0xff]
    %v1893 = vld [vmem:[#allocation7 + $0xc0] sm:$0xff]
    %v1894 = vld [vmem:[#allocation7 + $0xc8] sm:$0xff]
    %v1895 = vld [vmem:[#allocation7 + $0xd0] sm:$0xff]
    %v1896 = vld [vmem:[#allocation7 + $0xd8] sm:$0xff]
    %v1897 = vld [vmem:[#allocation7 + $0xe0] sm:$0xff]
    %v1898 = vld [vmem:[#allocation7 + $0xe8] sm:$0xff]
    %v1899 = vld [vmem:[#allocation7 + $0xf0] sm:$0xff]
    %v1900 = vld [vmem:[#allocation7 + $0xf8] sm:$0xff]
    %v1901 = vld [vmem:[#allocation7 + $0x100] sm:$0xff]
    %v1902 = vld [vmem:[#allocation7 + $0x108] sm:$0xff]
    %v1903 = vld [vmem:[#allocation7 + $0x110] sm:$0xff]
    %v1904 = vld [vmem:[#allocation7 + $0x118] sm:$0xff]
    %v1905 = vld [vmem:[#allocation7 + $0x120] sm:$0xff]
    %v1906 = vld [vmem:[#allocation7 + $0x128] sm:$0xff]
    %v1907 = vld [vmem:[#allocation7 + $0x130] sm:$0xff]
    %v1908 = vld [vmem:[#allocation7 + $0x138] sm:$0xff]
    %v1909 = vld [vmem:[#allocation7 + $0x140] sm:$0xff]
    %v1910 = vld [vmem:[#allocation7 + $0x148] sm:$0xff]
    %v1911 = vld [vmem:[#allocation7 + $0x150] sm:$0xff]
    %v1912 = vld [vmem:[#allocation7 + $0x158] sm:$0xff]
    %v1913 = vld [vmem:[#allocation7 + $0x160] sm:$0xff]
    %v1914 = vld [vmem:[#allocation7 + $0x168] sm:$0xff]
    %v1915 = vld [vmem:[#allocation7 + $0x170] sm:$0xff]
    %v1916 = vld [vmem:[#allocation7 + $0x178] sm:$0xff]
    %v1917 = vld [vmem:[#allocation7 + $0x180] sm:$0xff]
    %v1918 = vld [vmem:[#allocation7 + $0x188] sm:$0xff]
    %v1919 = vld [vmem:[#allocation7 + $0x190] sm:$0xff]
    %v1920 = vld [vmem:[#allocation7 + $0x198] sm:$0xff]
    %v1921 = vld [vmem:[#allocation7 + $0x1a0] sm:$0xff]
    %v1922 = vld [vmem:[#allocation7 + $0x1a8] sm:$0xff]
    %v1923 = vld [vmem:[#allocation7 + $0x1b0] sm:$0xff]
    %v1924 = vld [vmem:[#allocation7 + $0x1b8] sm:$0xff]
    %v1925 = vld [vmem:[#allocation7 + $0x1c0] sm:$0xff]
    %v1926 = vld [vmem:[#allocation7 + $0x1c8] sm:$0xff]
    %v1927 = vld [vmem:[#allocation7 + $0x1d0] sm:$0xff]
    %v1928 = vld [vmem:[#allocation7 + $0x1d8] sm:$0xff]
    %v1929 = vld [vmem:[#allocation7 + $0x1e0] sm:$0xff]
    %v1930 = vld [vmem:[#allocation7 + $0x1e8] sm:$0xff]
    %v1931 = vld [vmem:[#allocation7 + $0x1f0] sm:$0xff]
    %v1932 = vld [vmem:[#allocation7 + $0x1f8] sm:$0xff]
    %1933 = vmatprep.subr.mxu0 %v1870
    %1934 = vmatpush1.msra.mxu0 %v1869
    %1935 = vmatprep.subr.mxu0 %v1874
    %1936 = vmatpush1.msra.mxu0 %v1873
    %1937 = vmatprep.subr.mxu0 %v1878
    %1938 = vmatpush1.msra.mxu0 %v1877
    %1939 = vmatprep.subr.mxu0 %v1882
    %1940 = vmatpush1.msra.mxu0 %v1881
    %1941 = vmatprep.subr.mxu0 %v1886
    %1942 = vmatpush1.msra.mxu0 %v1885
    %1943 = vmatprep.subr.mxu0 %v1890
    %1944 = vmatpush1.msra.mxu0 %v1889
    %1945 = vmatprep.subr.mxu0 %v1894
    %1946 = vmatpush1.msra.mxu0 %v1893
    %1947 = vmatprep.subr.mxu0 %v1898
    %1948 = vmatpush1.msra.mxu0 %v1897
    %1949 = vmatprep.subr.mxu0 %v1902
    %1950 = vmatpush1.msra.mxu0 %v1901
    %1951 = vmatprep.subr.mxu0 %v1906
    %1952 = vmatpush1.msra.mxu0 %v1905
    %1953 = vmatprep.subr.mxu0 %v1910
    %1954 = vmatpush1.msra.mxu0 %v1909
    %1955 = vmatprep.subr.mxu0 %v1914
    %1956 = vmatpush1.msra.mxu0 %v1913
    %1957 = vmatprep.subr.mxu0 %v1918
    %1958 = vmatpush1.msra.mxu0 %v1917
    %1959 = vmatprep.subr.mxu0 %v1922
    %1960 = vmatpush1.msra.mxu0 %v1921
    %1961 = vmatprep.subr.mxu0 %v1926
    %1962 = vmatpush1.msra.mxu0 %v1925
    %1963 = vmatprep.subr.mxu0 %v1930
    %1964 = vmatpush1.msra.mxu0 %v1929
    %1965 = vmatprep.subr.mxu0 0.0
    %1966 = vmatpush1.msra.mxu0 0.0
    %1967 = vmatprep.subr.mxu0 0.0
    %1968 = vmatpush1.msra.mxu0 0.0
    %1969 = vmatprep.subr.mxu0 0.0
    %1970 = vmatpush1.msra.mxu0 0.0
    %1971 = vmatprep.subr.mxu0 0.0
    %1972 = vmatpush1.msra.mxu0 0.0
    %1973 = vmatprep.subr.mxu0 0.0
    %1974 = vmatpush1.msra.mxu0 0.0
    %1975 = vmatprep.subr.mxu0 0.0
    %1976 = vmatpush1.msra.mxu0 0.0
    %1977 = vmatprep.subr.mxu0 0.0
    %1978 = vmatpush1.msra.mxu0 0.0
    %1979 = vmatprep.subr.mxu0 0.0
    %1980 = vmatpush1.msra.mxu0 0.0
    %1981 = vmatprep.subr.mxu0 0.0
    %1982 = vmatpush1.msra.mxu0 0.0
    %1983 = vmatprep.subr.mxu0 0.0
    %1984 = vmatpush1.msra.mxu0 0.0
    %1985 = vmatprep.subr.mxu0 0.0
    %1986 = vmatpush1.msra.mxu0 0.0
    %1987 = vmatprep.subr.mxu0 0.0
    %1988 = vmatpush1.msra.mxu0 0.0
    %1989 = vmatprep.subr.mxu0 0.0
    %1990 = vmatpush1.msra.mxu0 0.0
    %1991 = vmatprep.subr.mxu0 0.0
    %1992 = vmatpush1.msra.mxu0 0.0
    %1993 = vmatprep.subr.mxu0 0.0
    %1994 = vmatpush1.msra.mxu0 0.0
    %1995 = vmatprep.subr.mxu0 0.0
    %1996 = vmatpush1.msra.mxu0 0.0
    %1997 = vmatprep.mubr.f32.mxu0 0.0
    %1998 = vmatmul.mubr.f32.gmra.mrb[0].mxu0 %v1859
    %v1999 = vpop.f32.mrb[0].mxu0
    %v2000 = vadd.f32 0.0, %v1999
    %v2001 = vpop.f32.mrb[0].mxu0
    %v2002 = vadd.f32 0.0, %v2001
    %2003 = vdwg.mxu0
    %2004 = vmatprep.subr.mxu0 %v1872
    %2005 = vmatpush1.msra.mxu0 %v1871
    %2006 = vmatprep.subr.mxu0 %v1876
    %2007 = vmatpush1.msra.mxu0 %v1875
    %2008 = vmatprep.subr.mxu0 %v1880
    %2009 = vmatpush1.msra.mxu0 %v1879
    %2010 = vmatprep.subr.mxu0 %v1884
    %2011 = vmatpush1.msra.mxu0 %v1883
    %2012 = vmatprep.subr.mxu0 %v1888
    %2013 = vmatpush1.msra.mxu0 %v1887
    %2014 = vmatprep.subr.mxu0 %v1892
    %2015 = vmatpush1.msra.mxu0 %v1891
    %2016 = vmatprep.subr.mxu0 %v1896
    %2017 = vmatpush1.msra.mxu0 %v1895
    %2018 = vmatprep.subr.mxu0 %v1900
    %2019 = vmatpush1.msra.mxu0 %v1899
    %2020 = vmatprep.subr.mxu0 %v1904
    %2021 = vmatpush1.msra.mxu0 %v1903
    %2022 = vmatprep.subr.mxu0 %v1908
    %2023 = vmatpush1.msra.mxu0 %v1907
    %2024 = vmatprep.subr.mxu0 %v1912
    %2025 = vmatpush1.msra.mxu0 %v1911
    %2026 = vmatprep.subr.mxu0 %v1916
    %2027 = vmatpush1.msra.mxu0 %v1915
    %2028 = vmatprep.subr.mxu0 %v1920
    %2029 = vmatpush1.msra.mxu0 %v1919
    %2030 = vmatprep.subr.mxu0 %v1924
    %2031 = vmatpush1.msra.mxu0 %v1923
    %2032 = vmatprep.subr.mxu0 %v1928
    %2033 = vmatpush1.msra.mxu0 %v1927
    %2034 = vmatprep.subr.mxu0 %v1932
    %2035 = vmatpush1.msra.mxu0 %v1931
    %2036 = vmatprep.subr.mxu0 0.0
    %2037 = vmatpush1.msra.mxu0 0.0
    %2038 = vmatprep.subr.mxu0 0.0
    %2039 = vmatpush1.msra.mxu0 0.0
    %2040 = vmatprep.subr.mxu0 0.0
    %2041 = vmatpush1.msra.mxu0 0.0
    %2042 = vmatprep.subr.mxu0 0.0
    %2043 = vmatpush1.msra.mxu0 0.0
    %2044 = vmatprep.subr.mxu0 0.0
    %2045 = vmatpush1.msra.mxu0 0.0
    %2046 = vmatprep.subr.mxu0 0.0
    %2047 = vmatpush1.msra.mxu0 0.0
    %2048 = vmatprep.subr.mxu0 0.0
    %2049 = vmatpush1.msra.mxu0 0.0
    %2050 = vmatprep.subr.mxu0 0.0
    %2051 = vmatpush1.msra.mxu0 0.0
    %2052 = vmatprep.subr.mxu0 0.0
    %2053 = vmatpush1.msra.mxu0 0.0
    %2054 = vmatprep.subr.mxu0 0.0
    %2055 = vmatpush1.msra.mxu0 0.0
    %2056 = vmatprep.subr.mxu0 0.0
    %2057 = vmatpush1.msra.mxu0 0.0
    %2058 = vmatprep.subr.mxu0 0.0
    %2059 = vmatpush1.msra.mxu0 0.0
    %2060 = vmatprep.subr.mxu0 0.0
    %2061 = vmatpush1.msra.mxu0 0.0
    %2062 = vmatprep.subr.mxu0 0.0
    %2063 = vmatpush1.msra.mxu0 0.0
    %2064 = vmatprep.subr.mxu0 0.0
    %2065 = vmatpush1.msra.mxu0 0.0
    %2066 = vmatprep.subr.mxu0 0.0
    %2067 = vmatpush1.msra.mxu0 0.0
    %2068 = vmatprep.mubr.f32.mxu0 0.0
    %2069 = vmatmul.mubr.f32.gmra.mrb[0].mxu0 %v1859
    %v2070 = vpop.f32.mrb[0].mxu0
    %v2071 = vadd.f32 0.0, %v2070
    %v2072 = vpop.f32.mrb[0].mxu0
    %v2073 = vadd.f32 0.0, %v2072
    %2074 = vdwg.mxu0
    %v2075 = vadd.f32 %v1865, %v2000
    %v2076 = vadd.f32 %v1866, %v2002
    %v2077 = vadd.f32 %v1867, %v2071
    %v2078 = vadd.f32 %v1868, %v2073
    %v2079 = vxor.u32 %v2075, 2147483648
    %v2080 = vmul.f32 %v2079, 1.442695
    %v2081 = vpow.pop %v2080
    %v2082 = vadd.f32 %v2081, 1.0
    %v2083 = vrcp.pop %v2082
    %v2084 = vmul.f32 1.0, %v2083
    %v2085 = vxor.u32 %v2076, 2147483648
    %v2086 = vmul.f32 %v2085, 1.442695
    %v2087 = vpow.pop %v2086
    %v2088 = vadd.f32 %v2087, 1.0
    %v2089 = vrcp.pop %v2088
    %v2090 = vmul.f32 1.0, %v2089
    %v2091 = vtanh.pop %v2077
    %v2092 = vxor.u32 %v2078, 2147483648
    %v2093 = vmul.f32 %v2092, 1.442695
    %v2094 = vpow.pop %v2093
    %v2095 = vadd.f32 %v2094, 1.0
    %v2096 = vrcp.pop %v2095
    %v2097 = vmul.f32 1.0, %v2096
    %v2098 = vmul.f32 %v2090, %v1857
    %v2099 = vmul.f32 %v2084, %v2091
    %v2100 = vadd.f32 %v2098, %v2099
    %v2101 = vtanh.pop %v2100
    %v2102 = vmul.f32 %v2097, %v2101
    %s2103 = scalar_lea.vmem [#allocation2], 48
    %2104 = vst [vmem:[%s2103] sm:$0xff] %v2102
    %s2105 = smul.u32 7, 4
    %s2106 = smul.addr %s2105, 8
    %s2107 = scalar_lea.vmem [#allocation3], %s2106
    %v2108 = vld [vmem:[%s2107] sm:$0xff]
    %v2109 = vld [vmem:[%s2107 + $0x8] sm:$0xff]
    %v2110 = vld [vmem:[%s2107 + $0x10] sm:$0xff]
    %v2111 = vld [vmem:[%s2107 + $0x18] sm:$0xff]
    %v2112 = vld [vmem:[#allocation7] sm:$0xff]
    %v2113 = vld [vmem:[#allocation7 + $0x8] sm:$0xff]
    %v2114 = vld [vmem:[#allocation7 + $0x10] sm:$0xff]
    %v2115 = vld [vmem:[#allocation7 + $0x18] sm:$0xff]
    %v2116 = vld [vmem:[#allocation7 + $0x20] sm:$0xff]
    %v2117 = vld [vmem:[#allocation7 + $0x28] sm:$0xff]
    %v2118 = vld [vmem:[#allocation7 + $0x30] sm:$0xff]
    %v2119 = vld [vmem:[#allocation7 + $0x38] sm:$0xff]
    %v2120 = vld [vmem:[#allocation7 + $0x40] sm:$0xff]
    %v2121 = vld [vmem:[#allocation7 + $0x48] sm:$0xff]
    %v2122 = vld [vmem:[#allocation7 + $0x50] sm:$0xff]
    %v2123 = vld [vmem:[#allocation7 + $0x58] sm:$0xff]
    %v2124 = vld [vmem:[#allocation7 + $0x60] sm:$0xff]
    %v2125 = vld [vmem:[#allocation7 + $0x68] sm:$0xff]
    %v2126 = vld [vmem:[#allocation7 + $0x70] sm:$0xff]
    %v2127 = vld [vmem:[#allocation7 + $0x78] sm:$0xff]
    %v2128 = vld [vmem:[#allocation7 + $0x80] sm:$0xff]
    %v2129 = vld [vmem:[#allocation7 + $0x88] sm:$0xff]
    %v2130 = vld [vmem:[#allocation7 + $0x90] sm:$0xff]
    %v2131 = vld [vmem:[#allocation7 + $0x98] sm:$0xff]
    %v2132 = vld [vmem:[#allocation7 + $0xa0] sm:$0xff]
    %v2133 = vld [vmem:[#allocation7 + $0xa8] sm:$0xff]
    %v2134 = vld [vmem:[#allocation7 + $0xb0] sm:$0xff]
    %v2135 = vld [vmem:[#allocation7 + $0xb8] sm:$0xff]
    %v2136 = vld [vmem:[#allocation7 + $0xc0] sm:$0xff]
    %v2137 = vld [vmem:[#allocation7 + $0xc8] sm:$0xff]
    %v2138 = vld [vmem:[#allocation7 + $0xd0] sm:$0xff]
    %v2139 = vld [vmem:[#allocation7 + $0xd8] sm:$0xff]
    %v2140 = vld [vmem:[#allocation7 + $0xe0] sm:$0xff]
    %v2141 = vld [vmem:[#allocation7 + $0xe8] sm:$0xff]
    %v2142 = vld [vmem:[#allocation7 + $0xf0] sm:$0xff]
    %v2143 = vld [vmem:[#allocation7 + $0xf8] sm:$0xff]
    %v2144 = vld [vmem:[#allocation7 + $0x100] sm:$0xff]
    %v2145 = vld [vmem:[#allocation7 + $0x108] sm:$0xff]
    %v2146 = vld [vmem:[#allocation7 + $0x110] sm:$0xff]
    %v2147 = vld [vmem:[#allocation7 + $0x118] sm:$0xff]
    %v2148 = vld [vmem:[#allocation7 + $0x120] sm:$0xff]
    %v2149 = vld [vmem:[#allocation7 + $0x128] sm:$0xff]
    %v2150 = vld [vmem:[#allocation7 + $0x130] sm:$0xff]
    %v2151 = vld [vmem:[#allocation7 + $0x138] sm:$0xff]
    %v2152 = vld [vmem:[#allocation7 + $0x140] sm:$0xff]
    %v2153 = vld [vmem:[#allocation7 + $0x148] sm:$0xff]
    %v2154 = vld [vmem:[#allocation7 + $0x150] sm:$0xff]
    %v2155 = vld [vmem:[#allocation7 + $0x158] sm:$0xff]
    %v2156 = vld [vmem:[#allocation7 + $0x160] sm:$0xff]
    %v2157 = vld [vmem:[#allocation7 + $0x168] sm:$0xff]
    %v2158 = vld [vmem:[#allocation7 + $0x170] sm:$0xff]
    %v2159 = vld [vmem:[#allocation7 + $0x178] sm:$0xff]
    %v2160 = vld [vmem:[#allocation7 + $0x180] sm:$0xff]
    %v2161 = vld [vmem:[#allocation7 + $0x188] sm:$0xff]
    %v2162 = vld [vmem:[#allocation7 + $0x190] sm:$0xff]
    %v2163 = vld [vmem:[#allocation7 + $0x198] sm:$0xff]
    %v2164 = vld [vmem:[#allocation7 + $0x1a0] sm:$0xff]
    %v2165 = vld [vmem:[#allocation7 + $0x1a8] sm:$0xff]
    %v2166 = vld [vmem:[#allocation7 + $0x1b0] sm:$0xff]
    %v2167 = vld [vmem:[#allocation7 + $0x1b8] sm:$0xff]
    %v2168 = vld [vmem:[#allocation7 + $0x1c0] sm:$0xff]
    %v2169 = vld [vmem:[#allocation7 + $0x1c8] sm:$0xff]
    %v2170 = vld [vmem:[#allocation7 + $0x1d0] sm:$0xff]
    %v2171 = vld [vmem:[#allocation7 + $0x1d8] sm:$0xff]
    %v2172 = vld [vmem:[#allocation7 + $0x1e0] sm:$0xff]
    %v2173 = vld [vmem:[#allocation7 + $0x1e8] sm:$0xff]
    %v2174 = vld [vmem:[#allocation7 + $0x1f0] sm:$0xff]
    %v2175 = vld [vmem:[#allocation7 + $0x1f8] sm:$0xff]
    %2176 = vmatprep.subr.mxu0 %v2113
    %2177 = vmatpush1.msra.mxu0 %v2112
    %2178 = vmatprep.subr.mxu0 %v2117
    %2179 = vmatpush1.msra.mxu0 %v2116
    %2180 = vmatprep.subr.mxu0 %v2121
    %2181 = vmatpush1.msra.mxu0 %v2120
    %2182 = vmatprep.subr.mxu0 %v2125
    %2183 = vmatpush1.msra.mxu0 %v2124
    %2184 = vmatprep.subr.mxu0 %v2129
    %2185 = vmatpush1.msra.mxu0 %v2128
    %2186 = vmatprep.subr.mxu0 %v2133
    %2187 = vmatpush1.msra.mxu0 %v2132
    %2188 = vmatprep.subr.mxu0 %v2137
    %2189 = vmatpush1.msra.mxu0 %v2136
    %2190 = vmatprep.subr.mxu0 %v2141
    %2191 = vmatpush1.msra.mxu0 %v2140
    %2192 = vmatprep.subr.mxu0 %v2145
    %2193 = vmatpush1.msra.mxu0 %v2144
    %2194 = vmatprep.subr.mxu0 %v2149
    %2195 = vmatpush1.msra.mxu0 %v2148
    %2196 = vmatprep.subr.mxu0 %v2153
    %2197 = vmatpush1.msra.mxu0 %v2152
    %2198 = vmatprep.subr.mxu0 %v2157
    %2199 = vmatpush1.msra.mxu0 %v2156
    %2200 = vmatprep.subr.mxu0 %v2161
    %2201 = vmatpush1.msra.mxu0 %v2160
    %2202 = vmatprep.subr.mxu0 %v2165
    %2203 = vmatpush1.msra.mxu0 %v2164
    %2204 = vmatprep.subr.mxu0 %v2169
    %2205 = vmatpush1.msra.mxu0 %v2168
    %2206 = vmatprep.subr.mxu0 %v2173
    %2207 = vmatpush1.msra.mxu0 %v2172
    %2208 = vmatprep.subr.mxu0 0.0
    %2209 = vmatpush1.msra.mxu0 0.0
    %2210 = vmatprep.subr.mxu0 0.0
    %2211 = vmatpush1.msra.mxu0 0.0
    %2212 = vmatprep.subr.mxu0 0.0
    %2213 = vmatpush1.msra.mxu0 0.0
    %2214 = vmatprep.subr.mxu0 0.0
    %2215 = vmatpush1.msra.mxu0 0.0
    %2216 = vmatprep.subr.mxu0 0.0
    %2217 = vmatpush1.msra.mxu0 0.0
    %2218 = vmatprep.subr.mxu0 0.0
    %2219 = vmatpush1.msra.mxu0 0.0
    %2220 = vmatprep.subr.mxu0 0.0
    %2221 = vmatpush1.msra.mxu0 0.0
    %2222 = vmatprep.subr.mxu0 0.0
    %2223 = vmatpush1.msra.mxu0 0.0
    %2224 = vmatprep.subr.mxu0 0.0
    %2225 = vmatpush1.msra.mxu0 0.0
    %2226 = vmatprep.subr.mxu0 0.0
    %2227 = vmatpush1.msra.mxu0 0.0
    %2228 = vmatprep.subr.mxu0 0.0
    %2229 = vmatpush1.msra.mxu0 0.0
    %2230 = vmatprep.subr.mxu0 0.0
    %2231 = vmatpush1.msra.mxu0 0.0
    %2232 = vmatprep.subr.mxu0 0.0
    %2233 = vmatpush1.msra.mxu0 0.0
    %2234 = vmatprep.subr.mxu0 0.0
    %2235 = vmatpush1.msra.mxu0 0.0
    %2236 = vmatprep.subr.mxu0 0.0
    %2237 = vmatpush1.msra.mxu0 0.0
    %2238 = vmatprep.subr.mxu0 0.0
    %2239 = vmatpush1.msra.mxu0 0.0
    %2240 = vmatprep.mubr.f32.mxu0 0.0
    %2241 = vmatmul.mubr.f32.gmra.mrb[0].mxu0 %v2102
    %v2242 = vpop.f32.mrb[0].mxu0
    %v2243 = vadd.f32 0.0, %v2242
    %v2244 = vpop.f32.mrb[0].mxu0
    %v2245 = vadd.f32 0.0, %v2244
    %2246 = vdwg.mxu0
    %2247 = vmatprep.subr.mxu0 %v2115
    %2248 = vmatpush1.msra.mxu0 %v2114
    %2249 = vmatprep.subr.mxu0 %v2119
    %2250 = vmatpush1.msra.mxu0 %v2118
    %2251 = vmatprep.subr.mxu0 %v2123
    %2252 = vmatpush1.msra.mxu0 %v2122
    %2253 = vmatprep.subr.mxu0 %v2127
    %2254 = vmatpush1.msra.mxu0 %v2126
    %2255 = vmatprep.subr.mxu0 %v2131
    %2256 = vmatpush1.msra.mxu0 %v2130
    %2257 = vmatprep.subr.mxu0 %v2135
    %2258 = vmatpush1.msra.mxu0 %v2134
    %2259 = vmatprep.subr.mxu0 %v2139
    %2260 = vmatpush1.msra.mxu0 %v2138
    %2261 = vmatprep.subr.mxu0 %v2143
    %2262 = vmatpush1.msra.mxu0 %v2142
    %2263 = vmatprep.subr.mxu0 %v2147
    %2264 = vmatpush1.msra.mxu0 %v2146
    %2265 = vmatprep.subr.mxu0 %v2151
    %2266 = vmatpush1.msra.mxu0 %v2150
    %2267 = vmatprep.subr.mxu0 %v2155
    %2268 = vmatpush1.msra.mxu0 %v2154
    %2269 = vmatprep.subr.mxu0 %v2159
    %2270 = vmatpush1.msra.mxu0 %v2158
    %2271 = vmatprep.subr.mxu0 %v2163
    %2272 = vmatpush1.msra.mxu0 %v2162
    %2273 = vmatprep.subr.mxu0 %v2167
    %2274 = vmatpush1.msra.mxu0 %v2166
    %2275 = vmatprep.subr.mxu0 %v2171
    %2276 = vmatpush1.msra.mxu0 %v2170
    %2277 = vmatprep.subr.mxu0 %v2175
    %2278 = vmatpush1.msra.mxu0 %v2174
    %2279 = vmatprep.subr.mxu0 0.0
    %2280 = vmatpush1.msra.mxu0 0.0
    %2281 = vmatprep.subr.mxu0 0.0
    %2282 = vmatpush1.msra.mxu0 0.0
    %2283 = vmatprep.subr.mxu0 0.0
    %2284 = vmatpush1.msra.mxu0 0.0
    %2285 = vmatprep.subr.mxu0 0.0
    %2286 = vmatpush1.msra.mxu0 0.0
    %2287 = vmatprep.subr.mxu0 0.0
    %2288 = vmatpush1.msra.mxu0 0.0
    %2289 = vmatprep.subr.mxu0 0.0
    %2290 = vmatpush1.msra.mxu0 0.0
    %2291 = vmatprep.subr.mxu0 0.0
    %2292 = vmatpush1.msra.mxu0 0.0
    %2293 = vmatprep.subr.mxu0 0.0
    %2294 = vmatpush1.msra.mxu0 0.0
    %2295 = vmatprep.subr.mxu0 0.0
    %2296 = vmatpush1.msra.mxu0 0.0
    %2297 = vmatprep.subr.mxu0 0.0
    %2298 = vmatpush1.msra.mxu0 0.0
    %2299 = vmatprep.subr.mxu0 0.0
    %2300 = vmatpush1.msra.mxu0 0.0
    %2301 = vmatprep.subr.mxu0 0.0
    %2302 = vmatpush1.msra.mxu0 0.0
    %2303 = vmatprep.subr.mxu0 0.0
    %2304 = vmatpush1.msra.mxu0 0.0
    %2305 = vmatprep.subr.mxu0 0.0
    %2306 = vmatpush1.msra.mxu0 0.0
    %2307 = vmatprep.subr.mxu0 0.0
    %2308 = vmatpush1.msra.mxu0 0.0
    %2309 = vmatprep.subr.mxu0 0.0
    %2310 = vmatpush1.msra.mxu0 0.0
    %2311 = vmatprep.mubr.f32.mxu0 0.0
    %2312 = vmatmul.mubr.f32.gmra.mrb[0].mxu0 %v2102
    %v2313 = vpop.f32.mrb[0].mxu0
    %v2314 = vadd.f32 0.0, %v2313
    %v2315 = vpop.f32.mrb[0].mxu0
    %v2316 = vadd.f32 0.0, %v2315
    %2317 = vdwg.mxu0
    %v2318 = vadd.f32 %v2108, %v2243
    %v2319 = vadd.f32 %v2109, %v2245
    %v2320 = vadd.f32 %v2110, %v2314
    %v2321 = vadd.f32 %v2111, %v2316
    %v2322 = vxor.u32 %v2318, 2147483648
    %v2323 = vmul.f32 %v2322, 1.442695
    %v2324 = vpow.pop %v2323
    %v2325 = vadd.f32 %v2324, 1.0
    %v2326 = vrcp.pop %v2325
    %v2327 = vmul.f32 1.0, %v2326
    %v2328 = vxor.u32 %v2319, 2147483648
    %v2329 = vmul.f32 %v2328, 1.442695
    %v2330 = vpow.pop %v2329
    %v2331 = vadd.f32 %v2330, 1.0
    %v2332 = vrcp.pop %v2331
    %v2333 = vmul.f32 1.0, %v2332
    %v2334 = vtanh.pop %v2320
    %v2335 = vxor.u32 %v2321, 2147483648
    %v2336 = vmul.f32 %v2335, 1.442695
    %v2337 = vpow.pop %v2336
    %v2338 = vadd.f32 %v2337, 1.0
    %v2339 = vrcp.pop %v2338
    %v2340 = vmul.f32 1.0, %v2339
    %v2341 = vmul.f32 %v2333, %v2100
    %v2342 = vmul.f32 %v2327, %v2334
    %v2343 = vadd.f32 %v2341, %v2342
    %v2344 = vtanh.pop %v2343
    %v2345 = vmul.f32 %v2340, %v2344
    %s2346 = scalar_lea.vmem [#allocation2], 56
    %2347 = vst [vmem:[%s2346] sm:$0xff] %v2345
    %v2348 = vld [vmem:[#allocation2] sm:$0xff]
    %v2349 = vld [vmem:[#allocation2 + $0x8] sm:$0xff]
    %v2350 = vld [vmem:[#allocation2 + $0x10] sm:$0xff]
    %v2351 = vld [vmem:[#allocation2 + $0x18] sm:$0xff]
    %v2352 = vld [vmem:[#allocation2 + $0x20] sm:$0xff]
    %v2353 = vld [vmem:[#allocation2 + $0x28] sm:$0xff]
    %v2354 = vld [vmem:[#allocation2 + $0x30] sm:$0xff]
    %v2355 = vld [vmem:[#allocation2 + $0x38] sm:$0xff]
    %s2356 = scalar_lea.vmem [#allocation5], 512
    %v2357 = vld [vmem:[%s2356] sm:$0xff]
    %v2358 = vld [vmem:[%s2356 + $0x8] sm:$0xff]
    %v2359 = vld [vmem:[%s2356 + $0x10] sm:$0xff]
    %v2360 = vld [vmem:[%s2356 + $0x18] sm:$0xff]
    %v2361 = vld [vmem:[%s2356 + $0x20] sm:$0xff]
    %v2362 = vld [vmem:[%s2356 + $0x28] sm:$0xff]
    %v2363 = vld [vmem:[%s2356 + $0x30] sm:$0xff]
    %v2364 = vld [vmem:[%s2356 + $0x38] sm:$0xff]
    %v2365 = vld [vmem:[%s2356 + $0x40] sm:$0xff]
    %v2366 = vld [vmem:[%s2356 + $0x48] sm:$0xff]
    %v2367 = vld [vmem:[%s2356 + $0x50] sm:$0xff]
    %v2368 = vld [vmem:[%s2356 + $0x58] sm:$0xff]
    %v2369 = vld [vmem:[%s2356 + $0x60] sm:$0xff]
    %v2370 = vld [vmem:[%s2356 + $0x68] sm:$0xff]
    %v2371 = vld [vmem:[%s2356 + $0x70] sm:$0xff]
    %v2372 = vld [vmem:[%s2356 + $0x78] sm:$0xff]
    %v2373 = vld [vmem:[%s2356 + $0x80] sm:$0xff]
    %v2374 = vld [vmem:[%s2356 + $0x88] sm:$0xff]
    %v2375 = vld [vmem:[%s2356 + $0x90] sm:$0xff]
    %v2376 = vld [vmem:[%s2356 + $0x98] sm:$0xff]
    %v2377 = vld [vmem:[%s2356 + $0xa0] sm:$0xff]
    %v2378 = vld [vmem:[%s2356 + $0xa8] sm:$0xff]
    %v2379 = vld [vmem:[%s2356 + $0xb0] sm:$0xff]
    %v2380 = vld [vmem:[%s2356 + $0xb8] sm:$0xff]
    %v2381 = vld [vmem:[%s2356 + $0xc0] sm:$0xff]
    %v2382 = vld [vmem:[%s2356 + $0xc8] sm:$0xff]
    %v2383 = vld [vmem:[%s2356 + $0xd0] sm:$0xff]
    %v2384 = vld [vmem:[%s2356 + $0xd8] sm:$0xff]
    %v2385 = vld [vmem:[%s2356 + $0xe0] sm:$0xff]
    %v2386 = vld [vmem:[%s2356 + $0xe8] sm:$0xff]
    %v2387 = vld [vmem:[%s2356 + $0xf0] sm:$0xff]
    %v2388 = vld [vmem:[%s2356 + $0xf8] sm:$0xff]
    %v2389 = vld [vmem:[%s2356 + $0x100] sm:$0xff]
    %v2390 = vld [vmem:[%s2356 + $0x108] sm:$0xff]
    %v2391 = vld [vmem:[%s2356 + $0x110] sm:$0xff]
    %v2392 = vld [vmem:[%s2356 + $0x118] sm:$0xff]
    %v2393 = vld [vmem:[%s2356 + $0x120] sm:$0xff]
    %v2394 = vld [vmem:[%s2356 + $0x128] sm:$0xff]
    %v2395 = vld [vmem:[%s2356 + $0x130] sm:$0xff]
    %v2396 = vld [vmem:[%s2356 + $0x138] sm:$0xff]
    %v2397 = vld [vmem:[%s2356 + $0x140] sm:$0xff]
    %v2398 = vld [vmem:[%s2356 + $0x148] sm:$0xff]
    %v2399 = vld [vmem:[%s2356 + $0x150] sm:$0xff]
    %v2400 = vld [vmem:[%s2356 + $0x158] sm:$0xff]
    %v2401 = vld [vmem:[%s2356 + $0x160] sm:$0xff]
    %v2402 = vld [vmem:[%s2356 + $0x168] sm:$0xff]
    %v2403 = vld [vmem:[%s2356 + $0x170] sm:$0xff]
    %v2404 = vld [vmem:[%s2356 + $0x178] sm:$0xff]
    %v2405 = vld [vmem:[%s2356 + $0x180] sm:$0xff]
    %v2406 = vld [vmem:[%s2356 + $0x188] sm:$0xff]
    %v2407 = vld [vmem:[%s2356 + $0x190] sm:$0xff]
    %v2408 = vld [vmem:[%s2356 + $0x198] sm:$0xff]
    %v2409 = vld [vmem:[%s2356 + $0x1a0] sm:$0xff]
    %v2410 = vld [vmem:[%s2356 + $0x1a8] sm:$0xff]
    %v2411 = vld [vmem:[%s2356 + $0x1b0] sm:$0xff]
    %v2412 = vld [vmem:[%s2356 + $0x1b8] sm:$0xff]
    %v2413 = vld [vmem:[%s2356 + $0x1c0] sm:$0xff]
    %v2414 = vld [vmem:[%s2356 + $0x1c8] sm:$0xff]
    %v2415 = vld [vmem:[%s2356 + $0x1d0] sm:$0xff]
    %v2416 = vld [vmem:[%s2356 + $0x1d8] sm:$0xff]
    %v2417 = vld [vmem:[%s2356 + $0x1e0] sm:$0xff]
    %v2418 = vld [vmem:[%s2356 + $0x1e8] sm:$0xff]
    %v2419 = vld [vmem:[%s2356 + $0x1f0] sm:$0xff]
    %v2420 = vld [vmem:[%s2356 + $0x1f8] sm:$0xff]
    %s2421 = scalar_lea.vmem %s3, 4
    %v2422 = vld [vmem:[%s2421] sm:$0xf]
    %v2424 = vlaneseq
    %v2425 = vshrl.u32 %v2424, 7
    %v2426 = vsub.s32 0, %v2425
    %v2427 = vrot.slane %v2422, %v2426
    %v2428 = vlaneseq
    %v2429 = vshrl.u32 %v2428, 7
    %v2430 = vsub.s32 1, %v2429
    %v2431 = vrot.slane %v2422, %v2430
    %v2432 = vlaneseq
    %v2433 = vshrl.u32 %v2432, 7
    %v2434 = vsub.s32 2, %v2433
    %v2435 = vrot.slane %v2422, %v2434
    %v2436 = vlaneseq
    %v2437 = vshrl.u32 %v2436, 7
    %v2438 = vsub.s32 3, %v2437
    %v2439 = vrot.slane %v2422, %v2438
    %2444 = vmatprep.subr.mxu0 %v2358
    %2445 = vmatpush1.msra.mxu0 %v2357
    %2446 = vmatprep.subr.mxu0 %v2362
    %2447 = vmatpush1.msra.mxu0 %v2361
    %2448 = vmatprep.subr.mxu0 %v2366
    %2449 = vmatpush1.msra.mxu0 %v2365
    %2450 = vmatprep.subr.mxu0 %v2370
    %2451 = vmatpush1.msra.mxu0 %v2369
    %2452 = vmatprep.subr.mxu0 %v2374
    %2453 = vmatpush1.msra.mxu0 %v2373
    %2454 = vmatprep.subr.mxu0 %v2378
    %2455 = vmatpush1.msra.mxu0 %v2377
    %2456 = vmatprep.subr.mxu0 %v2382
    %2457 = vmatpush1.msra.mxu0 %v2381
    %2458 = vmatprep.subr.mxu0 %v2386
    %2459 = vmatpush1.msra.mxu0 %v2385
    %2460 = vmatprep.subr.mxu0 %v2390
    %2461 = vmatpush1.msra.mxu0 %v2389
    %2462 = vmatprep.subr.mxu0 %v2394
    %2463 = vmatpush1.msra.mxu0 %v2393
    %2464 = vmatprep.subr.mxu0 %v2398
    %2465 = vmatpush1.msra.mxu0 %v2397
    %2466 = vmatprep.subr.mxu0 %v2402
    %2467 = vmatpush1.msra.mxu0 %v2401
    %2468 = vmatprep.subr.mxu0 %v2406
    %2469 = vmatpush1.msra.mxu0 %v2405
    %2470 = vmatprep.subr.mxu0 %v2410
    %2471 = vmatpush1.msra.mxu0 %v2409
    %2472 = vmatprep.subr.mxu0 %v2414
    %2473 = vmatpush1.msra.mxu0 %v2413
    %2474 = vmatprep.subr.mxu0 %v2418
    %2475 = vmatpush1.msra.mxu0 %v2417
    %2476 = vmatprep.subr.mxu0 0.0
    %2477 = vmatpush1.msra.mxu0 0.0
    %2478 = vmatprep.subr.mxu0 0.0
    %2479 = vmatpush1.msra.mxu0 0.0
    %2480 = vmatprep.subr.mxu0 0.0
    %2481 = vmatpush1.msra.mxu0 0.0
    %2482 = vmatprep.subr.mxu0 0.0
    %2483 = vmatpush1.msra.mxu0 0.0
    %2484 = vmatprep.subr.mxu0 0.0
    %2485 = vmatpush1.msra.mxu0 0.0
    %2486 = vmatprep.subr.mxu0 0.0
    %2487 = vmatpush1.msra.mxu0 0.0
    %2488 = vmatprep.subr.mxu0 0.0
    %2489 = vmatpush1.msra.mxu0 0.0
    %2490 = vmatprep.subr.mxu0 0.0
    %2491 = vmatpush1.msra.mxu0 0.0
    %2492 = vmatprep.subr.mxu0 0.0
    %2493 = vmatpush1.msra.mxu0 0.0
    %2494 = vmatprep.subr.mxu0 0.0
    %2495 = vmatpush1.msra.mxu0 0.0
    %2496 = vmatprep.subr.mxu0 0.0
    %2497 = vmatpush1.msra.mxu0 0.0
    %2498 = vmatprep.subr.mxu0 0.0
    %2499 = vmatpush1.msra.mxu0 0.0
    %2500 = vmatprep.subr.mxu0 0.0
    %2501 = vmatpush1.msra.mxu0 0.0
    %2502 = vmatprep.subr.mxu0 0.0
    %2503 = vmatpush1.msra.mxu0 0.0
    %2504 = vmatprep.subr.mxu0 0.0
    %2505 = vmatpush1.msra.mxu0 0.0
    %2506 = vmatprep.subr.mxu0 0.0
    %2507 = vmatpush1.msra.mxu0 0.0
    %2508 = vmatprep.mubr.f32.mxu0 0.0
    %2509 = vmatmul.mubr.f32.gmra.mrb[0].mxu0 %v2348
    %v2510 = vpop.f32.mrb[0].mxu0
    %v2511 = vadd.f32 %v2427, %v2510
    %v2512 = vpop.f32.mrb[0].mxu0
    %v2513 = vadd.f32 %v2431, %v2512
    %2514 = vmatprep.mubr.f32.mxu0 0.0
    %2515 = vmatmul.mubr.f32.gmra.mrb[0].mxu0 %v2349
    %v2516 = vpop.f32.mrb[0].mxu0
    %v2517 = vadd.f32 %v2427, %v2516
    %v2518 = vpop.f32.mrb[0].mxu0
    %v2519 = vadd.f32 %v2431, %v2518
    %2520 = vmatprep.mubr.f32.mxu0 0.0
    %2521 = vmatmul.mubr.f32.gmra.mrb[0].mxu0 %v2350
    %v2522 = vpop.f32.mrb[0].mxu0
    %v2523 = vadd.f32 %v2427, %v2522
    %v2524 = vpop.f32.mrb[0].mxu0
    %v2525 = vadd.f32 %v2431, %v2524
    %2526 = vmatprep.mubr.f32.mxu0 0.0
    %2527 = vmatmul.mubr.f32.gmra.mrb[0].mxu0 %v2351
    %v2528 = vpop.f32.mrb[0].mxu0
    %v2529 = vadd.f32 %v2427, %v2528
    %v2530 = vpop.f32.mrb[0].mxu0
    %v2531 = vadd.f32 %v2431, %v2530
    %2532 = vmatprep.mubr.f32.mxu0 0.0
    %2533 = vmatmul.mubr.f32.gmra.mrb[0].mxu0 %v2352
    %v2534 = vpop.f32.mrb[0].mxu0
    %v2535 = vadd.f32 %v2427, %v2534
    %v2536 = vpop.f32.mrb[0].mxu0
    %v2537 = vadd.f32 %v2431, %v2536
    %2538 = vmatprep.mubr.f32.mxu0 0.0
    %2539 = vmatmul.mubr.f32.gmra.mrb[0].mxu0 %v2353
    %v2540 = vpop.f32.mrb[0].mxu0
    %v2541 = vadd.f32 %v2427, %v2540
    %v2542 = vpop.f32.mrb[0].mxu0
    %v2543 = vadd.f32 %v2431, %v2542
    %2544 = vmatprep.mubr.f32.mxu0 0.0
    %2545 = vmatmul.mubr.f32.gmra.mrb[0].mxu0 %v2354
    %v2546 = vpop.f32.mrb[0].mxu0
    %v2547 = vadd.f32 %v2427, %v2546
    %v2548 = vpop.f32.mrb[0].mxu0
    %v2549 = vadd.f32 %v2431, %v2548
    %2550 = vmatprep.mubr.f32.mxu0 0.0
    %2551 = vmatmul.mubr.f32.gmra.mrb[0].mxu0 %v2355
    %v2552 = vpop.f32.mrb[0].mxu0
    %v2553 = vadd.f32 %v2427, %v2552
    %v2554 = vpop.f32.mrb[0].mxu0
    %v2555 = vadd.f32 %v2431, %v2554
    %2556 = vdwg.mxu0
    %2557 = vmatprep.subr.mxu0 %v2360
    %2558 = vmatpush1.msra.mxu0 %v2359
    %2559 = vmatprep.subr.mxu0 %v2364
    %2560 = vmatpush1.msra.mxu0 %v2363
    %2561 = vmatprep.subr.mxu0 %v2368
    %2562 = vmatpush1.msra.mxu0 %v2367
    %2563 = vmatprep.subr.mxu0 %v2372
    %2564 = vmatpush1.msra.mxu0 %v2371
    %2565 = vmatprep.subr.mxu0 %v2376
    %2566 = vmatpush1.msra.mxu0 %v2375
    %2567 = vmatprep.subr.mxu0 %v2380
    %2568 = vmatpush1.msra.mxu0 %v2379
    %2569 = vmatprep.subr.mxu0 %v2384
    %2570 = vmatpush1.msra.mxu0 %v2383
    %2571 = vmatprep.subr.mxu0 %v2388
    %2572 = vmatpush1.msra.mxu0 %v2387
    %2573 = vmatprep.subr.mxu0 %v2392
    %2574 = vmatpush1.msra.mxu0 %v2391
    %2575 = vmatprep.subr.mxu0 %v2396
    %2576 = vmatpush1.msra.mxu0 %v2395
    %2577 = vmatprep.subr.mxu0 %v2400
    %2578 = vmatpush1.msra.mxu0 %v2399
    %2579 = vmatprep.subr.mxu0 %v2404
    %2580 = vmatpush1.msra.mxu0 %v2403
    %2581 = vmatprep.subr.mxu0 %v2408
    %2582 = vmatpush1.msra.mxu0 %v2407
    %2583 = vmatprep.subr.mxu0 %v2412
    %2584 = vmatpush1.msra.mxu0 %v2411
    %2585 = vmatprep.subr.mxu0 %v2416
    %2586 = vmatpush1.msra.mxu0 %v2415
    %2587 = vmatprep.subr.mxu0 %v2420
    %2588 = vmatpush1.msra.mxu0 %v2419
    %2589 = vmatprep.subr.mxu0 0.0
    %2590 = vmatpush1.msra.mxu0 0.0
    %2591 = vmatprep.subr.mxu0 0.0
    %2592 = vmatpush1.msra.mxu0 0.0
    %2593 = vmatprep.subr.mxu0 0.0
    %2594 = vmatpush1.msra.mxu0 0.0
    %2595 = vmatprep.subr.mxu0 0.0
    %2596 = vmatpush1.msra.mxu0 0.0
    %2597 = vmatprep.subr.mxu0 0.0
    %2598 = vmatpush1.msra.mxu0 0.0
    %2599 = vmatprep.subr.mxu0 0.0
    %2600 = vmatpush1.msra.mxu0 0.0
    %2601 = vmatprep.subr.mxu0 0.0
    %2602 = vmatpush1.msra.mxu0 0.0
    %2603 = vmatprep.subr.mxu0 0.0
    %2604 = vmatpush1.msra.mxu0 0.0
    %2605 = vmatprep.subr.mxu0 0.0
    %2606 = vmatpush1.msra.mxu0 0.0
    %2607 = vmatprep.subr.mxu0 0.0
    %2608 = vmatpush1.msra.mxu0 0.0
    %2609 = vmatprep.subr.mxu0 0.0
    %2610 = vmatpush1.msra.mxu0 0.0
    %2611 = vmatprep.subr.mxu0 0.0
    %2612 = vmatpush1.msra.mxu0 0.0
    %2613 = vmatprep.subr.mxu0 0.0
    %2614 = vmatpush1.msra.mxu0 0.0
    %2615 = vmatprep.subr.mxu0 0.0
    %2616 = vmatpush1.msra.mxu0 0.0
    %2617 = vmatprep.subr.mxu0 0.0
    %2618 = vmatpush1.msra.mxu0 0.0
    %2619 = vmatprep.subr.mxu0 0.0
    %2620 = vmatpush1.msra.mxu0 0.0
    %2621 = vmatprep.mubr.f32.mxu0 0.0
    %2622 = vmatmul.mubr.f32.gmra.mrb[0].mxu0 %v2348
    %v2623 = vpop.f32.mrb[0].mxu0
    %v2624 = vadd.f32 %v2435, %v2623
    %v2625 = vpop.f32.mrb[0].mxu0
    %v2626 = vadd.f32 %v2439, %v2625
    %2627 = vmatprep.mubr.f32.mxu0 0.0
    %2628 = vmatmul.mubr.f32.gmra.mrb[0].mxu0 %v2349
    %v2629 = vpop.f32.mrb[0].mxu0
    %v2630 = vadd.f32 %v2435, %v2629
    %v2631 = vpop.f32.mrb[0].mxu0
    %v2632 = vadd.f32 %v2439, %v2631
    %2633 = vmatprep.mubr.f32.mxu0 0.0
    %2634 = vmatmul.mubr.f32.gmra.mrb[0].mxu0 %v2350
    %v2635 = vpop.f32.mrb[0].mxu0
    %v2636 = vadd.f32 %v2435, %v2635
    %v2637 = vpop.f32.mrb[0].mxu0
    %v2638 = vadd.f32 %v2439, %v2637
    %2639 = vmatprep.mubr.f32.mxu0 0.0
    %2640 = vmatmul.mubr.f32.gmra.mrb[0].mxu0 %v2351
    %v2641 = vpop.f32.mrb[0].mxu0
    %v2642 = vadd.f32 %v2435, %v2641
    %v2643 = vpop.f32.mrb[0].mxu0
    %v2644 = vadd.f32 %v2439, %v2643
    %2645 = vmatprep.mubr.f32.mxu0 0.0
    %2646 = vmatmul.mubr.f32.gmra.mrb[0].mxu0 %v2352
    %v2647 = vpop.f32.mrb[0].mxu0
    %v2648 = vadd.f32 %v2435, %v2647
    %v2649 = vpop.f32.mrb[0].mxu0
    %v2650 = vadd.f32 %v2439, %v2649
    %2651 = vmatprep.mubr.f32.mxu0 0.0
    %2652 = vmatmul.mubr.f32.gmra.mrb[0].mxu0 %v2353
    %v2653 = vpop.f32.mrb[0].mxu0
    %v2654 = vadd.f32 %v2435, %v2653
    %v2655 = vpop.f32.mrb[0].mxu0
    %v2656 = vadd.f32 %v2439, %v2655
    %2657 = vmatprep.mubr.f32.mxu0 0.0
    %2658 = vmatmul.mubr.f32.gmra.mrb[0].mxu0 %v2354
    %v2659 = vpop.f32.mrb[0].mxu0
    %v2660 = vadd.f32 %v2435, %v2659
    %v2661 = vpop.f32.mrb[0].mxu0
    %v2662 = vadd.f32 %v2439, %v2661
    %2663 = vmatprep.mubr.f32.mxu0 0.0
    %2664 = vmatmul.mubr.f32.gmra.mrb[0].mxu0 %v2355
    %v2665 = vpop.f32.mrb[0].mxu0
    %v2666 = vadd.f32 %v2435, %v2665
    %v2667 = vpop.f32.mrb[0].mxu0
    %v2668 = vadd.f32 %v2439, %v2667
    %2669 = vdwg.mxu0
    %2670 = vst [vmem:[#allocation3] sm:$0xff] %v2511
    %2671 = vst [vmem:[#allocation3 + $0x8] sm:$0xff] %v2513
    %2672 = vst [vmem:[#allocation3 + $0x10] sm:$0xff] %v2624
    %2673 = vst [vmem:[#allocation3 + $0x18] sm:$0xff] %v2626
    %2674 = vst [vmem:[#allocation3 + $0x20] sm:$0xff] %v2517
    %2675 = vst [vmem:[#allocation3 + $0x28] sm:$0xff] %v2519
    %2676 = vst [vmem:[#allocation3 + $0x30] sm:$0xff] %v2630
    %2677 = vst [vmem:[#allocation3 + $0x38] sm:$0xff] %v2632
    %2678 = vst [vmem:[#allocation3 + $0x40] sm:$0xff] %v2523
    %2679 = vst [vmem:[#allocation3 + $0x48] sm:$0xff] %v2525
    %2680 = vst [vmem:[#allocation3 + $0x50] sm:$0xff] %v2636
    %2681 = vst [vmem:[#allocation3 + $0x58] sm:$0xff] %v2638
    %2682 = vst [vmem:[#allocation3 + $0x60] sm:$0xff] %v2529
    %2683 = vst [vmem:[#allocation3 + $0x68] sm:$0xff] %v2531
    %2684 = vst [vmem:[#allocation3 + $0x70] sm:$0xff] %v2642
    %2685 = vst [vmem:[#allocation3 + $0x78] sm:$0xff] %v2644
    %2686 = vst [vmem:[#allocation3 + $0x80] sm:$0xff] %v2535
    %2687 = vst [vmem:[#allocation3 + $0x88] sm:$0xff] %v2537
    %2688 = vst [vmem:[#allocation3 + $0x90] sm:$0xff] %v2648
    %2689 = vst [vmem:[#allocation3 + $0x98] sm:$0xff] %v2650
    %2690 = vst [vmem:[#allocation3 + $0xa0] sm:$0xff] %v2541
    %2691 = vst [vmem:[#allocation3 + $0xa8] sm:$0xff] %v2543
    %2692 = vst [vmem:[#allocation3 + $0xb0] sm:$0xff] %v2654
    %2693 = vst [vmem:[#allocation3 + $0xb8] sm:$0xff] %v2656
    %2694 = vst [vmem:[#allocation3 + $0xc0] sm:$0xff] %v2547
    %2695 = vst [vmem:[#allocation3 + $0xc8] sm:$0xff] %v2549
    %2696 = vst [vmem:[#allocation3 + $0xd0] sm:$0xff] %v2660
    %2697 = vst [vmem:[#allocation3 + $0xd8] sm:$0xff] %v2662
    %2698 = vst [vmem:[#allocation3 + $0xe0] sm:$0xff] %v2553
    %2699 = vst [vmem:[#allocation3 + $0xe8] sm:$0xff] %v2555
    %2700 = vst [vmem:[#allocation3 + $0xf0] sm:$0xff] %v2666
    %2701 = vst [vmem:[#allocation3 + $0xf8] sm:$0xff] %v2668
    %v2702 = vld [vmem:[%s407] sm:$0xff]
    %v2703 = vld [vmem:[%s407 + $0x8] sm:$0xff]
    %v2704 = vld [vmem:[%s407 + $0x10] sm:$0xff]
    %v2705 = vld [vmem:[%s407 + $0x18] sm:$0xff]
    %s2706 = scalar_lea.vmem [#allocation7], 512
    %v2707 = vld [vmem:[%s2706] sm:$0xff]
    %v2708 = vld [vmem:[%s2706 + $0x8] sm:$0xff]
    %v2709 = vld [vmem:[%s2706 + $0x10] sm:$0xff]
    %v2710 = vld [vmem:[%s2706 + $0x18] sm:$0xff]
    %v2711 = vld [vmem:[%s2706 + $0x20] sm:$0xff]
    %v2712 = vld [vmem:[%s2706 + $0x28] sm:$0xff]
    %v2713 = vld [vmem:[%s2706 + $0x30] sm:$0xff]
    %v2714 = vld [vmem:[%s2706 + $0x38] sm:$0xff]
    %v2715 = vld [vmem:[%s2706 + $0x40] sm:$0xff]
    %v2716 = vld [vmem:[%s2706 + $0x48] sm:$0xff]
    %v2717 = vld [vmem:[%s2706 + $0x50] sm:$0xff]
    %v2718 = vld [vmem:[%s2706 + $0x58] sm:$0xff]
    %v2719 = vld [vmem:[%s2706 + $0x60] sm:$0xff]
    %v2720 = vld [vmem:[%s2706 + $0x68] sm:$0xff]
    %v2721 = vld [vmem:[%s2706 + $0x70] sm:$0xff]
    %v2722 = vld [vmem:[%s2706 + $0x78] sm:$0xff]
    %v2723 = vld [vmem:[%s2706 + $0x80] sm:$0xff]
    %v2724 = vld [vmem:[%s2706 + $0x88] sm:$0xff]
    %v2725 = vld [vmem:[%s2706 + $0x90] sm:$0xff]
    %v2726 = vld [vmem:[%s2706 + $0x98] sm:$0xff]
    %v2727 = vld [vmem:[%s2706 + $0xa0] sm:$0xff]
    %v2728 = vld [vmem:[%s2706 + $0xa8] sm:$0xff]
    %v2729 = vld [vmem:[%s2706 + $0xb0] sm:$0xff]
    %v2730 = vld [vmem:[%s2706 + $0xb8] sm:$0xff]
    %v2731 = vld [vmem:[%s2706 + $0xc0] sm:$0xff]
    %v2732 = vld [vmem:[%s2706 + $0xc8] sm:$0xff]
    %v2733 = vld [vmem:[%s2706 + $0xd0] sm:$0xff]
    %v2734 = vld [vmem:[%s2706 + $0xd8] sm:$0xff]
    %v2735 = vld [vmem:[%s2706 + $0xe0] sm:$0xff]
    %v2736 = vld [vmem:[%s2706 + $0xe8] sm:$0xff]
    %v2737 = vld [vmem:[%s2706 + $0xf0] sm:$0xff]
    %v2738 = vld [vmem:[%s2706 + $0xf8] sm:$0xff]
    %v2739 = vld [vmem:[%s2706 + $0x100] sm:$0xff]
    %v2740 = vld [vmem:[%s2706 + $0x108] sm:$0xff]
    %v2741 = vld [vmem:[%s2706 + $0x110] sm:$0xff]
    %v2742 = vld [vmem:[%s2706 + $0x118] sm:$0xff]
    %v2743 = vld [vmem:[%s2706 + $0x120] sm:$0xff]
    %v2744 = vld [vmem:[%s2706 + $0x128] sm:$0xff]
    %v2745 = vld [vmem:[%s2706 + $0x130] sm:$0xff]
    %v2746 = vld [vmem:[%s2706 + $0x138] sm:$0xff]
    %v2747 = vld [vmem:[%s2706 + $0x140] sm:$0xff]
    %v2748 = vld [vmem:[%s2706 + $0x148] sm:$0xff]
    %v2749 = vld [vmem:[%s2706 + $0x150] sm:$0xff]
    %v2750 = vld [vmem:[%s2706 + $0x158] sm:$0xff]
    %v2751 = vld [vmem:[%s2706 + $0x160] sm:$0xff]
    %v2752 = vld [vmem:[%s2706 + $0x168] sm:$0xff]
    %v2753 = vld [vmem:[%s2706 + $0x170] sm:$0xff]
    %v2754 = vld [vmem:[%s2706 + $0x178] sm:$0xff]
    %v2755 = vld [vmem:[%s2706 + $0x180] sm:$0xff]
    %v2756 = vld [vmem:[%s2706 + $0x188] sm:$0xff]
    %v2757 = vld [vmem:[%s2706 + $0x190] sm:$0xff]
    %v2758 = vld [vmem:[%s2706 + $0x198] sm:$0xff]
    %v2759 = vld [vmem:[%s2706 + $0x1a0] sm:$0xff]
    %v2760 = vld [vmem:[%s2706 + $0x1a8] sm:$0xff]
    %v2761 = vld [vmem:[%s2706 + $0x1b0] sm:$0xff]
    %v2762 = vld [vmem:[%s2706 + $0x1b8] sm:$0xff]
    %v2763 = vld [vmem:[%s2706 + $0x1c0] sm:$0xff]
    %v2764 = vld [vmem:[%s2706 + $0x1c8] sm:$0xff]
    %v2765 = vld [vmem:[%s2706 + $0x1d0] sm:$0xff]
    %v2766 = vld [vmem:[%s2706 + $0x1d8] sm:$0xff]
    %v2767 = vld [vmem:[%s2706 + $0x1e0] sm:$0xff]
    %v2768 = vld [vmem:[%s2706 + $0x1e8] sm:$0xff]
    %v2769 = vld [vmem:[%s2706 + $0x1f0] sm:$0xff]
    %v2770 = vld [vmem:[%s2706 + $0x1f8] sm:$0xff]
    %2771 = vmatprep.subr.mxu0 %v2708
    %2772 = vmatpush1.msra.mxu0 %v2707
    %2773 = vmatprep.subr.mxu0 %v2712
    %2774 = vmatpush1.msra.mxu0 %v2711
    %2775 = vmatprep.subr.mxu0 %v2716
    %2776 = vmatpush1.msra.mxu0 %v2715
    %2777 = vmatprep.subr.mxu0 %v2720
    %2778 = vmatpush1.msra.mxu0 %v2719
    %2779 = vmatprep.subr.mxu0 %v2724
    %2780 = vmatpush1.msra.mxu0 %v2723
    %2781 = vmatprep.subr.mxu0 %v2728
    %2782 = vmatpush1.msra.mxu0 %v2727
    %2783 = vmatprep.subr.mxu0 %v2732
    %2784 = vmatpush1.msra.mxu0 %v2731
    %2785 = vmatprep.subr.mxu0 %v2736
    %2786 = vmatpush1.msra.mxu0 %v2735
    %2787 = vmatprep.subr.mxu0 %v2740
    %2788 = vmatpush1.msra.mxu0 %v2739
    %2789 = vmatprep.subr.mxu0 %v2744
    %2790 = vmatpush1.msra.mxu0 %v2743
    %2791 = vmatprep.subr.mxu0 %v2748
    %2792 = vmatpush1.msra.mxu0 %v2747
    %2793 = vmatprep.subr.mxu0 %v2752
    %2794 = vmatpush1.msra.mxu0 %v2751
    %2795 = vmatprep.subr.mxu0 %v2756
    %2796 = vmatpush1.msra.mxu0 %v2755
    %2797 = vmatprep.subr.mxu0 %v2760
    %2798 = vmatpush1.msra.mxu0 %v2759
    %2799 = vmatprep.subr.mxu0 %v2764
    %2800 = vmatpush1.msra.mxu0 %v2763
    %2801 = vmatprep.subr.mxu0 %v2768
    %2802 = vmatpush1.msra.mxu0 %v2767
    %2803 = vmatprep.subr.mxu0 0.0
    %2804 = vmatpush1.msra.mxu0 0.0
    %2805 = vmatprep.subr.mxu0 0.0
    %2806 = vmatpush1.msra.mxu0 0.0
    %2807 = vmatprep.subr.mxu0 0.0
    %2808 = vmatpush1.msra.mxu0 0.0
    %2809 = vmatprep.subr.mxu0 0.0
    %2810 = vmatpush1.msra.mxu0 0.0
    %2811 = vmatprep.subr.mxu0 0.0
    %2812 = vmatpush1.msra.mxu0 0.0
    %2813 = vmatprep.subr.mxu0 0.0
    %2814 = vmatpush1.msra.mxu0 0.0
    %2815 = vmatprep.subr.mxu0 0.0
    %2816 = vmatpush1.msra.mxu0 0.0
    %2817 = vmatprep.subr.mxu0 0.0
    %2818 = vmatpush1.msra.mxu0 0.0
    %2819 = vmatprep.subr.mxu0 0.0
    %2820 = vmatpush1.msra.mxu0 0.0
    %2821 = vmatprep.subr.mxu0 0.0
    %2822 = vmatpush1.msra.mxu0 0.0
    %2823 = vmatprep.subr.mxu0 0.0
    %2824 = vmatpush1.msra.mxu0 0.0
    %2825 = vmatprep.subr.mxu0 0.0
    %2826 = vmatpush1.msra.mxu0 0.0
    %2827 = vmatprep.subr.mxu0 0.0
    %2828 = vmatpush1.msra.mxu0 0.0
    %2829 = vmatprep.subr.mxu0 0.0
    %2830 = vmatpush1.msra.mxu0 0.0
    %2831 = vmatprep.subr.mxu0 0.0
    %2832 = vmatpush1.msra.mxu0 0.0
    %2833 = vmatprep.subr.mxu0 0.0
    %2834 = vmatpush1.msra.mxu0 0.0
    %2835 = vmatprep.mubr.f32.mxu0 0.0
    %2836 = vmatmul.mubr.f32.gmra.mrb[0].mxu0 0.0
    %v2837 = vpop.f32.mrb[0].mxu0
    %v2838 = vadd.f32 0.0, %v2837
    %v2839 = vpop.f32.mrb[0].mxu0
    %v2840 = vadd.f32 0.0, %v2839
    %2841 = vdwg.mxu0
    %2842 = vmatprep.subr.mxu0 %v2710
    %2843 = vmatpush1.msra.mxu0 %v2709
    %2844 = vmatprep.subr.mxu0 %v2714
    %2845 = vmatpush1.msra.mxu0 %v2713
    %2846 = vmatprep.subr.mxu0 %v2718
    %2847 = vmatpush1.msra.mxu0 %v2717
    %2848 = vmatprep.subr.mxu0 %v2722
    %2849 = vmatpush1.msra.mxu0 %v2721
    %2850 = vmatprep.subr.mxu0 %v2726
    %2851 = vmatpush1.msra.mxu0 %v2725
    %2852 = vmatprep.subr.mxu0 %v2730
    %2853 = vmatpush1.msra.mxu0 %v2729
    %2854 = vmatprep.subr.mxu0 %v2734
    %2855 = vmatpush1.msra.mxu0 %v2733
    %2856 = vmatprep.subr.mxu0 %v2738
    %2857 = vmatpush1.msra.mxu0 %v2737
    %2858 = vmatprep.subr.mxu0 %v2742
    %2859 = vmatpush1.msra.mxu0 %v2741
    %2860 = vmatprep.subr.mxu0 %v2746
    %2861 = vmatpush1.msra.mxu0 %v2745
    %2862 = vmatprep.subr.mxu0 %v2750
    %2863 = vmatpush1.msra.mxu0 %v2749
    %2864 = vmatprep.subr.mxu0 %v2754
    %2865 = vmatpush1.msra.mxu0 %v2753
    %2866 = vmatprep.subr.mxu0 %v2758
    %2867 = vmatpush1.msra.mxu0 %v2757
    %2868 = vmatprep.subr.mxu0 %v2762
    %2869 = vmatpush1.msra.mxu0 %v2761
    %2870 = vmatprep.subr.mxu0 %v2766
    %2871 = vmatpush1.msra.mxu0 %v2765
    %2872 = vmatprep.subr.mxu0 %v2770
    %2873 = vmatpush1.msra.mxu0 %v2769
    %2874 = vmatprep.subr.mxu0 0.0
    %2875 = vmatpush1.msra.mxu0 0.0
    %2876 = vmatprep.subr.mxu0 0.0
    %2877 = vmatpush1.msra.mxu0 0.0
    %2878 = vmatprep.subr.mxu0 0.0
    %2879 = vmatpush1.msra.mxu0 0.0
    %2880 = vmatprep.subr.mxu0 0.0
    %2881 = vmatpush1.msra.mxu0 0.0
    %2882 = vmatprep.subr.mxu0 0.0
    %2883 = vmatpush1.msra.mxu0 0.0
    %2884 = vmatprep.subr.mxu0 0.0
    %2885 = vmatpush1.msra.mxu0 0.0
    %2886 = vmatprep.subr.mxu0 0.0
    %2887 = vmatpush1.msra.mxu0 0.0
    %2888 = vmatprep.subr.mxu0 0.0
    %2889 = vmatpush1.msra.mxu0 0.0
    %2890 = vmatprep.subr.mxu0 0.0
    %2891 = vmatpush1.msra.mxu0 0.0
    %2892 = vmatprep.subr.mxu0 0.0
    %2893 = vmatpush1.msra.mxu0 0.0
    %2894 = vmatprep.subr.mxu0 0.0
    %2895 = vmatpush1.msra.mxu0 0.0
    %2896 = vmatprep.subr.mxu0 0.0
    %2897 = vmatpush1.msra.mxu0 0.0
    %2898 = vmatprep.subr.mxu0 0.0
    %2899 = vmatpush1.msra.mxu0 0.0
    %2900 = vmatprep.subr.mxu0 0.0
    %2901 = vmatpush1.msra.mxu0 0.0
    %2902 = vmatprep.subr.mxu0 0.0
    %2903 = vmatpush1.msra.mxu0 0.0
    %2904 = vmatprep.subr.mxu0 0.0
    %2905 = vmatpush1.msra.mxu0 0.0
    %2906 = vmatprep.mubr.f32.mxu0 0.0
    %2907 = vmatmul.mubr.f32.gmra.mrb[0].mxu0 0.0
    %v2908 = vpop.f32.mrb[0].mxu0
    %v2909 = vadd.f32 0.0, %v2908
    %v2910 = vpop.f32.mrb[0].mxu0
    %v2911 = vadd.f32 0.0, %v2910
    %2912 = vdwg.mxu0
    %v2913 = vadd.f32 %v2702, %v2838
    %v2914 = vadd.f32 %v2703, %v2840
    %v2915 = vadd.f32 %v2704, %v2909
    %v2916 = vadd.f32 %v2705, %v2911
    %v2917 = vxor.u32 %v2913, 2147483648
    %v2918 = vmul.f32 %v2917, 1.442695
    %v2919 = vpow.pop %v2918
    %v2920 = vadd.f32 %v2919, 1.0
    %v2921 = vrcp.pop %v2920
    %v2922 = vmul.f32 1.0, %v2921
    %v2923 = vxor.u32 %v2914, 2147483648
    %v2924 = vmul.f32 %v2923, 1.442695
    %v2925 = vpow.pop %v2924
    %v2926 = vadd.f32 %v2925, 1.0
    %v2927 = vrcp.pop %v2926
    %v2928 = vmul.f32 1.0, %v2927
    %v2929 = vtanh.pop %v2915
    %v2930 = vxor.u32 %v2916, 2147483648
    %v2931 = vmul.f32 %v2930, 1.442695
    %v2932 = vpow.pop %v2931
    %v2933 = vadd.f32 %v2932, 1.0
    %v2934 = vrcp.pop %v2933
    %v2935 = vmul.f32 1.0, %v2934
    %v2936 = vmul.f32 %v2928, 0.0
    %v2937 = vmul.f32 %v2922, %v2929
    %v2938 = vadd.f32 %v2936, %v2937
    %v2939 = vtanh.pop %v2938
    %v2940 = vmul.f32 %v2935, %v2939
    %v2941 = vld [vmem:[%s649] sm:$0xff]
    %v2942 = vld [vmem:[%s649 + $0x8] sm:$0xff]
    %v2943 = vld [vmem:[%s649 + $0x10] sm:$0xff]
    %v2944 = vld [vmem:[%s649 + $0x18] sm:$0xff]
    %2945 = vmatprep.subr.mxu0 %v2708
    %2946 = vmatpush1.msra.mxu0 %v2707
    %2947 = vmatprep.subr.mxu0 %v2712
    %2948 = vmatpush1.msra.mxu0 %v2711
    %2949 = vmatprep.subr.mxu0 %v2716
    %2950 = vmatpush1.msra.mxu0 %v2715
    %2951 = vmatprep.subr.mxu0 %v2720
    %2952 = vmatpush1.msra.mxu0 %v2719
    %2953 = vmatprep.subr.mxu0 %v2724
    %2954 = vmatpush1.msra.mxu0 %v2723
    %2955 = vmatprep.subr.mxu0 %v2728
    %2956 = vmatpush1.msra.mxu0 %v2727
    %2957 = vmatprep.subr.mxu0 %v2732
    %2958 = vmatpush1.msra.mxu0 %v2731
    %2959 = vmatprep.subr.mxu0 %v2736
    %2960 = vmatpush1.msra.mxu0 %v2735
    %2961 = vmatprep.subr.mxu0 %v2740
    %2962 = vmatpush1.msra.mxu0 %v2739
    %2963 = vmatprep.subr.mxu0 %v2744
    %2964 = vmatpush1.msra.mxu0 %v2743
    %2965 = vmatprep.subr.mxu0 %v2748
    %2966 = vmatpush1.msra.mxu0 %v2747
    %2967 = vmatprep.subr.mxu0 %v2752
    %2968 = vmatpush1.msra.mxu0 %v2751
    %2969 = vmatprep.subr.mxu0 %v2756
    %2970 = vmatpush1.msra.mxu0 %v2755
    %2971 = vmatprep.subr.mxu0 %v2760
    %2972 = vmatpush1.msra.mxu0 %v2759
    %2973 = vmatprep.subr.mxu0 %v2764
    %2974 = vmatpush1.msra.mxu0 %v2763
    %2975 = vmatprep.subr.mxu0 %v2768
    %2976 = vmatpush1.msra.mxu0 %v2767
    %2977 = vmatprep.subr.mxu0 0.0
    %2978 = vmatpush1.msra.mxu0 0.0
    %2979 = vmatprep.subr.mxu0 0.0
    %2980 = vmatpush1.msra.mxu0 0.0
    %2981 = vmatprep.subr.mxu0 0.0
    %2982 = vmatpush1.msra.mxu0 0.0
    %2983 = vmatprep.subr.mxu0 0.0
    %2984 = vmatpush1.msra.mxu0 0.0
    %2985 = vmatprep.subr.mxu0 0.0
    %2986 = vmatpush1.msra.mxu0 0.0
    %2987 = vmatprep.subr.mxu0 0.0
    %2988 = vmatpush1.msra.mxu0 0.0
    %2989 = vmatprep.subr.mxu0 0.0
    %2990 = vmatpush1.msra.mxu0 0.0
    %2991 = vmatprep.subr.mxu0 0.0
    %2992 = vmatpush1.msra.mxu0 0.0
    %2993 = vmatprep.subr.mxu0 0.0
    %2994 = vmatpush1.msra.mxu0 0.0
    %2995 = vmatprep.subr.mxu0 0.0
    %2996 = vmatpush1.msra.mxu0 0.0
    %2997 = vmatprep.subr.mxu0 0.0
    %2998 = vmatpush1.msra.mxu0 0.0
    %2999 = vmatprep.subr.mxu0 0.0
    %3000 = vmatpush1.msra.mxu0 0.0
    %3001 = vmatprep.subr.mxu0 0.0
    %3002 = vmatpush1.msra.mxu0 0.0
    %3003 = vmatprep.subr.mxu0 0.0
    %3004 = vmatpush1.msra.mxu0 0.0
    %3005 = vmatprep.subr.mxu0 0.0
    %3006 = vmatpush1.msra.mxu0 0.0
    %3007 = vmatprep.subr.mxu0 0.0
    %3008 = vmatpush1.msra.mxu0 0.0
    %3009 = vmatprep.mubr.f32.mxu0 0.0
    %3010 = vmatmul.mubr.f32.gmra.mrb[0].mxu0 %v2940
    %v3011 = vpop.f32.mrb[0].mxu0
    %v3012 = vadd.f32 0.0, %v3011
    %v3013 = vpop.f32.mrb[0].mxu0
    %v3014 = vadd.f32 0.0, %v3013
    %3015 = vdwg.mxu0
    %3016 = vmatprep.subr.mxu0 %v2710
    %3017 = vmatpush1.msra.mxu0 %v2709
    %3018 = vmatprep.subr.mxu0 %v2714
    %3019 = vmatpush1.msra.mxu0 %v2713
    %3020 = vmatprep.subr.mxu0 %v2718
    %3021 = vmatpush1.msra.mxu0 %v2717
    %3022 = vmatprep.subr.mxu0 %v2722
    %3023 = vmatpush1.msra.mxu0 %v2721
    %3024 = vmatprep.subr.mxu0 %v2726
    %3025 = vmatpush1.msra.mxu0 %v2725
    %3026 = vmatprep.subr.mxu0 %v2730
    %3027 = vmatpush1.msra.mxu0 %v2729
    %3028 = vmatprep.subr.mxu0 %v2734
    %3029 = vmatpush1.msra.mxu0 %v2733
    %3030 = vmatprep.subr.mxu0 %v2738
    %3031 = vmatpush1.msra.mxu0 %v2737
    %3032 = vmatprep.subr.mxu0 %v2742
    %3033 = vmatpush1.msra.mxu0 %v2741
    %3034 = vmatprep.subr.mxu0 %v2746
    %3035 = vmatpush1.msra.mxu0 %v2745
    %3036 = vmatprep.subr.mxu0 %v2750
    %3037 = vmatpush1.msra.mxu0 %v2749
    %3038 = vmatprep.subr.mxu0 %v2754
    %3039 = vmatpush1.msra.mxu0 %v2753
    %3040 = vmatprep.subr.mxu0 %v2758
    %3041 = vmatpush1.msra.mxu0 %v2757
    %3042 = vmatprep.subr.mxu0 %v2762
    %3043 = vmatpush1.msra.mxu0 %v2761
    %3044 = vmatprep.subr.mxu0 %v2766
    %3045 = vmatpush1.msra.mxu0 %v2765
    %3046 = vmatprep.subr.mxu0 %v2770
    %3047 = vmatpush1.msra.mxu0 %v2769
    %3048 = vmatprep.subr.mxu0 0.0
    %3049 = vmatpush1.msra.mxu0 0.0
    %3050 = vmatprep.subr.mxu0 0.0
    %3051 = vmatpush1.msra.mxu0 0.0
    %3052 = vmatprep.subr.mxu0 0.0
    %3053 = vmatpush1.msra.mxu0 0.0
    %3054 = vmatprep.subr.mxu0 0.0
    %3055 = vmatpush1.msra.mxu0 0.0
    %3056 = vmatprep.subr.mxu0 0.0
    %3057 = vmatpush1.msra.mxu0 0.0
    %3058 = vmatprep.subr.mxu0 0.0
    %3059 = vmatpush1.msra.mxu0 0.0
    %3060 = vmatprep.subr.mxu0 0.0
    %3061 = vmatpush1.msra.mxu0 0.0
    %3062 = vmatprep.subr.mxu0 0.0
    %3063 = vmatpush1.msra.mxu0 0.0
    %3064 = vmatprep.subr.mxu0 0.0
    %3065 = vmatpush1.msra.mxu0 0.0
    %3066 = vmatprep.subr.mxu0 0.0
    %3067 = vmatpush1.msra.mxu0 0.0
    %3068 = vmatprep.subr.mxu0 0.0
    %3069 = vmatpush1.msra.mxu0 0.0
    %3070 = vmatprep.subr.mxu0 0.0
    %3071 = vmatpush1.msra.mxu0 0.0
    %3072 = vmatprep.subr.mxu0 0.0
    %3073 = vmatpush1.msra.mxu0 0.0
    %3074 = vmatprep.subr.mxu0 0.0
    %3075 = vmatpush1.msra.mxu0 0.0
    %3076 = vmatprep.subr.mxu0 0.0
    %3077 = vmatpush1.msra.mxu0 0.0
    %3078 = vmatprep.subr.mxu0 0.0
    %3079 = vmatpush1.msra.mxu0 0.0
    %3080 = vmatprep.mubr.f32.mxu0 0.0
    %3081 = vmatmul.mubr.f32.gmra.mrb[0].mxu0 %v2940
    %v3082 = vpop.f32.mrb[0].mxu0
    %v3083 = vadd.f32 0.0, %v3082
    %v3084 = vpop.f32.mrb[0].mxu0
    %v3085 = vadd.f32 0.0, %v3084
    %3086 = vdwg.mxu0
    %v3087 = vadd.f32 %v2941, %v3012
    %v3088 = vadd.f32 %v2942, %v3014
    %v3089 = vadd.f32 %v2943, %v3083
    %v3090 = vadd.f32 %v2944, %v3085
    %v3091 = vxor.u32 %v3087, 2147483648
    %v3092 = vmul.f32 %v3091, 1.442695
    %v3093 = vpow.pop %v3092
    %v3094 = vadd.f32 %v3093, 1.0
    %v3095 = vrcp.pop %v3094
    %v3096 = vmul.f32 1.0, %v3095
    %v3097 = vxor.u32 %v3088, 2147483648
    %v3098 = vmul.f32 %v3097, 1.442695
    %v3099 = vpow.pop %v3098
    %v3100 = vadd.f32 %v3099, 1.0
    %v3101 = vrcp.pop %v3100
    %v3102 = vmul.f32 1.0, %v3101
    %v3103 = vtanh.pop %v3089
    %v3104 = vxor.u32 %v3090, 2147483648
    %v3105 = vmul.f32 %v3104, 1.442695
    %v3106 = vpow.pop %v3105
    %v3107 = vadd.f32 %v3106, 1.0
    %v3108 = vrcp.pop %v3107
    %v3109 = vmul.f32 1.0, %v3108
    %v3110 = vmul.f32 %v3102, %v2938
    %v3111 = vmul.f32 %v3096, %v3103
    %v3112 = vadd.f32 %v3110, %v3111
    %v3113 = vtanh.pop %v3112
    %v3114 = vmul.f32 %v3109, %v3113
    %v3115 = vld [vmem:[%s892] sm:$0xff]
    %v3116 = vld [vmem:[%s892 + $0x8] sm:$0xff]
    %v3117 = vld [vmem:[%s892 + $0x10] sm:$0xff]
    %v3118 = vld [vmem:[%s892 + $0x18] sm:$0xff]
    %3119 = vmatprep.subr.mxu0 %v2708
    %3120 = vmatpush1.msra.mxu0 %v2707
    %3121 = vmatprep.subr.mxu0 %v2712
    %3122 = vmatpush1.msra.mxu0 %v2711
    %3123 = vmatprep.subr.mxu0 %v2716
    %3124 = vmatpush1.msra.mxu0 %v2715
    %3125 = vmatprep.subr.mxu0 %v2720
    %3126 = vmatpush1.msra.mxu0 %v2719
    %3127 = vmatprep.subr.mxu0 %v2724
    %3128 = vmatpush1.msra.mxu0 %v2723
    %3129 = vmatprep.subr.mxu0 %v2728
    %3130 = vmatpush1.msra.mxu0 %v2727
    %3131 = vmatprep.subr.mxu0 %v2732
    %3132 = vmatpush1.msra.mxu0 %v2731
    %3133 = vmatprep.subr.mxu0 %v2736
    %3134 = vmatpush1.msra.mxu0 %v2735
    %3135 = vmatprep.subr.mxu0 %v2740
    %3136 = vmatpush1.msra.mxu0 %v2739
    %3137 = vmatprep.subr.mxu0 %v2744
    %3138 = vmatpush1.msra.mxu0 %v2743
    %3139 = vmatprep.subr.mxu0 %v2748
    %3140 = vmatpush1.msra.mxu0 %v2747
    %3141 = vmatprep.subr.mxu0 %v2752
    %3142 = vmatpush1.msra.mxu0 %v2751
    %3143 = vmatprep.subr.mxu0 %v2756
    %3144 = vmatpush1.msra.mxu0 %v2755
    %3145 = vmatprep.subr.mxu0 %v2760
    %3146 = vmatpush1.msra.mxu0 %v2759
    %3147 = vmatprep.subr.mxu0 %v2764
    %3148 = vmatpush1.msra.mxu0 %v2763
    %3149 = vmatprep.subr.mxu0 %v2768
    %3150 = vmatpush1.msra.mxu0 %v2767
    %3151 = vmatprep.subr.mxu0 0.0
    %3152 = vmatpush1.msra.mxu0 0.0
    %3153 = vmatprep.subr.mxu0 0.0
    %3154 = vmatpush1.msra.mxu0 0.0
    %3155 = vmatprep.subr.mxu0 0.0
    %3156 = vmatpush1.msra.mxu0 0.0
    %3157 = vmatprep.subr.mxu0 0.0
    %3158 = vmatpush1.msra.mxu0 0.0
    %3159 = vmatprep.subr.mxu0 0.0
    %3160 = vmatpush1.msra.mxu0 0.0
    %3161 = vmatprep.subr.mxu0 0.0
    %3162 = vmatpush1.msra.mxu0 0.0
    %3163 = vmatprep.subr.mxu0 0.0
    %3164 = vmatpush1.msra.mxu0 0.0
    %3165 = vmatprep.subr.mxu0 0.0
    %3166 = vmatpush1.msra.mxu0 0.0
    %3167 = vmatprep.subr.mxu0 0.0
    %3168 = vmatpush1.msra.mxu0 0.0
    %3169 = vmatprep.subr.mxu0 0.0
    %3170 = vmatpush1.msra.mxu0 0.0
    %3171 = vmatprep.subr.mxu0 0.0
    %3172 = vmatpush1.msra.mxu0 0.0
    %3173 = vmatprep.subr.mxu0 0.0
    %3174 = vmatpush1.msra.mxu0 0.0
    %3175 = vmatprep.subr.mxu0 0.0
    %3176 = vmatpush1.msra.mxu0 0.0
    %3177 = vmatprep.subr.mxu0 0.0
    %3178 = vmatpush1.msra.mxu0 0.0
    %3179 = vmatprep.subr.mxu0 0.0
    %3180 = vmatpush1.msra.mxu0 0.0
    %3181 = vmatprep.subr.mxu0 0.0
    %3182 = vmatpush1.msra.mxu0 0.0
    %3183 = vmatprep.mubr.f32.mxu0 0.0
    %3184 = vmatmul.mubr.f32.gmra.mrb[0].mxu0 %v3114
    %v3185 = vpop.f32.mrb[0].mxu0
    %v3186 = vadd.f32 0.0, %v3185
    %v3187 = vpop.f32.mrb[0].mxu0
    %v3188 = vadd.f32 0.0, %v3187
    %3189 = vdwg.mxu0
    %3190 = vmatprep.subr.mxu0 %v2710
    %3191 = vmatpush1.msra.mxu0 %v2709
    %3192 = vmatprep.subr.mxu0 %v2714
    %3193 = vmatpush1.msra.mxu0 %v2713
    %3194 = vmatprep.subr.mxu0 %v2718
    %3195 = vmatpush1.msra.mxu0 %v2717
    %3196 = vmatprep.subr.mxu0 %v2722
    %3197 = vmatpush1.msra.mxu0 %v2721
    %3198 = vmatprep.subr.mxu0 %v2726
    %3199 = vmatpush1.msra.mxu0 %v2725
    %3200 = vmatprep.subr.mxu0 %v2730
    %3201 = vmatpush1.msra.mxu0 %v2729
    %3202 = vmatprep.subr.mxu0 %v2734
    %3203 = vmatpush1.msra.mxu0 %v2733
    %3204 = vmatprep.subr.mxu0 %v2738
    %3205 = vmatpush1.msra.mxu0 %v2737
    %3206 = vmatprep.subr.mxu0 %v2742
    %3207 = vmatpush1.msra.mxu0 %v2741
    %3208 = vmatprep.subr.mxu0 %v2746
    %3209 = vmatpush1.msra.mxu0 %v2745
    %3210 = vmatprep.subr.mxu0 %v2750
    %3211 = vmatpush1.msra.mxu0 %v2749
    %3212 = vmatprep.subr.mxu0 %v2754
    %3213 = vmatpush1.msra.mxu0 %v2753
    %3214 = vmatprep.subr.mxu0 %v2758
    %3215 = vmatpush1.msra.mxu0 %v2757
    %3216 = vmatprep.subr.mxu0 %v2762
    %3217 = vmatpush1.msra.mxu0 %v2761
    %3218 = vmatprep.subr.mxu0 %v2766
    %3219 = vmatpush1.msra.mxu0 %v2765
    %3220 = vmatprep.subr.mxu0 %v2770
    %3221 = vmatpush1.msra.mxu0 %v2769
    %3222 = vmatprep.subr.mxu0 0.0
    %3223 = vmatpush1.msra.mxu0 0.0
    %3224 = vmatprep.subr.mxu0 0.0
    %3225 = vmatpush1.msra.mxu0 0.0
    %3226 = vmatprep.subr.mxu0 0.0
    %3227 = vmatpush1.msra.mxu0 0.0
    %3228 = vmatprep.subr.mxu0 0.0
    %3229 = vmatpush1.msra.mxu0 0.0
    %3230 = vmatprep.subr.mxu0 0.0
    %3231 = vmatpush1.msra.mxu0 0.0
    %3232 = vmatprep.subr.mxu0 0.0
    %3233 = vmatpush1.msra.mxu0 0.0
    %3234 = vmatprep.subr.mxu0 0.0
    %3235 = vmatpush1.msra.mxu0 0.0
    %3236 = vmatprep.subr.mxu0 0.0
    %3237 = vmatpush1.msra.mxu0 0.0
    %3238 = vmatprep.subr.mxu0 0.0
    %3239 = vmatpush1.msra.mxu0 0.0
    %3240 = vmatprep.subr.mxu0 0.0
    %3241 = vmatpush1.msra.mxu0 0.0
    %3242 = vmatprep.subr.mxu0 0.0
    %3243 = vmatpush1.msra.mxu0 0.0
    %3244 = vmatprep.subr.mxu0 0.0
    %3245 = vmatpush1.msra.mxu0 0.0
    %3246 = vmatprep.subr.mxu0 0.0
    %3247 = vmatpush1.msra.mxu0 0.0
    %3248 = vmatprep.subr.mxu0 0.0
    %3249 = vmatpush1.msra.mxu0 0.0
    %3250 = vmatprep.subr.mxu0 0.0
    %3251 = vmatpush1.msra.mxu0 0.0
    %3252 = vmatprep.subr.mxu0 0.0
    %3253 = vmatpush1.msra.mxu0 0.0
    %3254 = vmatprep.mubr.f32.mxu0 0.0
    %3255 = vmatmul.mubr.f32.gmra.mrb[0].mxu0 %v3114
    %v3256 = vpop.f32.mrb[0].mxu0
    %v3257 = vadd.f32 0.0, %v3256
    %v3258 = vpop.f32.mrb[0].mxu0
    %v3259 = vadd.f32 0.0, %v3258
    %3260 = vdwg.mxu0
    %v3261 = vadd.f32 %v3115, %v3186
    %v3262 = vadd.f32 %v3116, %v3188
    %v3263 = vadd.f32 %v3117, %v3257
    %v3264 = vadd.f32 %v3118, %v3259
    %v3265 = vxor.u32 %v3261, 2147483648
    %v3266 = vmul.f32 %v3265, 1.442695
    %v3267 = vpow.pop %v3266
    %v3268 = vadd.f32 %v3267, 1.0
    %v3269 = vrcp.pop %v3268
    %v3270 = vmul.f32 1.0, %v3269
    %v3271 = vxor.u32 %v3262, 2147483648
    %v3272 = vmul.f32 %v3271, 1.442695
    %v3273 = vpow.pop %v3272
    %v3274 = vadd.f32 %v3273, 1.0
    %v3275 = vrcp.pop %v3274
    %v3276 = vmul.f32 1.0, %v3275
    %v3277 = vtanh.pop %v3263
    %v3278 = vxor.u32 %v3264, 2147483648
    %v3279 = vmul.f32 %v3278, 1.442695
    %v3280 = vpow.pop %v3279
    %v3281 = vadd.f32 %v3280, 1.0
    %v3282 = vrcp.pop %v3281
    %v3283 = vmul.f32 1.0, %v3282
    %v3284 = vmul.f32 %v3276, %v3112
    %v3285 = vmul.f32 %v3270, %v3277
    %v3286 = vadd.f32 %v3284, %v3285
    %v3287 = vtanh.pop %v3286
    %v3288 = vmul.f32 %v3283, %v3287
    %v3289 = vld [vmem:[%s1135] sm:$0xff]
    %v3290 = vld [vmem:[%s1135 + $0x8] sm:$0xff]
    %v3291 = vld [vmem:[%s1135 + $0x10] sm:$0xff]
    %v3292 = vld [vmem:[%s1135 + $0x18] sm:$0xff]
    %3293 = vmatprep.subr.mxu0 %v2708
    %3294 = vmatpush1.msra.mxu0 %v2707
    %3295 = vmatprep.subr.mxu0 %v2712
    %3296 = vmatpush1.msra.mxu0 %v2711
    %3297 = vmatprep.subr.mxu0 %v2716
    %3298 = vmatpush1.msra.mxu0 %v2715
    %3299 = vmatprep.subr.mxu0 %v2720
    %3300 = vmatpush1.msra.mxu0 %v2719
    %3301 = vmatprep.subr.mxu0 %v2724
    %3302 = vmatpush1.msra.mxu0 %v2723
    %3303 = vmatprep.subr.mxu0 %v2728
    %3304 = vmatpush1.msra.mxu0 %v2727
    %3305 = vmatprep.subr.mxu0 %v2732
    %3306 = vmatpush1.msra.mxu0 %v2731
    %3307 = vmatprep.subr.mxu0 %v2736
    %3308 = vmatpush1.msra.mxu0 %v2735
    %3309 = vmatprep.subr.mxu0 %v2740
    %3310 = vmatpush1.msra.mxu0 %v2739
    %3311 = vmatprep.subr.mxu0 %v2744
    %3312 = vmatpush1.msra.mxu0 %v2743
    %3313 = vmatprep.subr.mxu0 %v2748
    %3314 = vmatpush1.msra.mxu0 %v2747
    %3315 = vmatprep.subr.mxu0 %v2752
    %3316 = vmatpush1.msra.mxu0 %v2751
    %3317 = vmatprep.subr.mxu0 %v2756
    %3318 = vmatpush1.msra.mxu0 %v2755
    %3319 = vmatprep.subr.mxu0 %v2760
    %3320 = vmatpush1.msra.mxu0 %v2759
    %3321 = vmatprep.subr.mxu0 %v2764
    %3322 = vmatpush1.msra.mxu0 %v2763
    %3323 = vmatprep.subr.mxu0 %v2768
    %3324 = vmatpush1.msra.mxu0 %v2767
    %3325 = vmatprep.subr.mxu0 0.0
    %3326 = vmatpush1.msra.mxu0 0.0
    %3327 = vmatprep.subr.mxu0 0.0
    %3328 = vmatpush1.msra.mxu0 0.0
    %3329 = vmatprep.subr.mxu0 0.0
    %3330 = vmatpush1.msra.mxu0 0.0
    %3331 = vmatprep.subr.mxu0 0.0
    %3332 = vmatpush1.msra.mxu0 0.0
    %3333 = vmatprep.subr.mxu0 0.0
    %3334 = vmatpush1.msra.mxu0 0.0
    %3335 = vmatprep.subr.mxu0 0.0
    %3336 = vmatpush1.msra.mxu0 0.0
    %3337 = vmatprep.subr.mxu0 0.0
    %3338 = vmatpush1.msra.mxu0 0.0
    %3339 = vmatprep.subr.mxu0 0.0
    %3340 = vmatpush1.msra.mxu0 0.0
    %3341 = vmatprep.subr.mxu0 0.0
    %3342 = vmatpush1.msra.mxu0 0.0
    %3343 = vmatprep.subr.mxu0 0.0
    %3344 = vmatpush1.msra.mxu0 0.0
    %3345 = vmatprep.subr.mxu0 0.0
    %3346 = vmatpush1.msra.mxu0 0.0
    %3347 = vmatprep.subr.mxu0 0.0
    %3348 = vmatpush1.msra.mxu0 0.0
    %3349 = vmatprep.subr.mxu0 0.0
    %3350 = vmatpush1.msra.mxu0 0.0
    %3351 = vmatprep.subr.mxu0 0.0
    %3352 = vmatpush1.msra.mxu0 0.0
    %3353 = vmatprep.subr.mxu0 0.0
    %3354 = vmatpush1.msra.mxu0 0.0
    %3355 = vmatprep.subr.mxu0 0.0
    %3356 = vmatpush1.msra.mxu0 0.0
    %3357 = vmatprep.mubr.f32.mxu0 0.0
    %3358 = vmatmul.mubr.f32.gmra.mrb[0].mxu0 %v3288
    %v3359 = vpop.f32.mrb[0].mxu0
    %v3360 = vadd.f32 0.0, %v3359
    %v3361 = vpop.f32.mrb[0].mxu0
    %v3362 = vadd.f32 0.0, %v3361
    %3363 = vdwg.mxu0
    %3364 = vmatprep.subr.mxu0 %v2710
    %3365 = vmatpush1.msra.mxu0 %v2709
    %3366 = vmatprep.subr.mxu0 %v2714
    %3367 = vmatpush1.msra.mxu0 %v2713
    %3368 = vmatprep.subr.mxu0 %v2718
    %3369 = vmatpush1.msra.mxu0 %v2717
    %3370 = vmatprep.subr.mxu0 %v2722
    %3371 = vmatpush1.msra.mxu0 %v2721
    %3372 = vmatprep.subr.mxu0 %v2726
    %3373 = vmatpush1.msra.mxu0 %v2725
    %3374 = vmatprep.subr.mxu0 %v2730
    %3375 = vmatpush1.msra.mxu0 %v2729
    %3376 = vmatprep.subr.mxu0 %v2734
    %3377 = vmatpush1.msra.mxu0 %v2733
    %3378 = vmatprep.subr.mxu0 %v2738
    %3379 = vmatpush1.msra.mxu0 %v2737
    %3380 = vmatprep.subr.mxu0 %v2742
    %3381 = vmatpush1.msra.mxu0 %v2741
    %3382 = vmatprep.subr.mxu0 %v2746
    %3383 = vmatpush1.msra.mxu0 %v2745
    %3384 = vmatprep.subr.mxu0 %v2750
    %3385 = vmatpush1.msra.mxu0 %v2749
    %3386 = vmatprep.subr.mxu0 %v2754
    %3387 = vmatpush1.msra.mxu0 %v2753
    %3388 = vmatprep.subr.mxu0 %v2758
    %3389 = vmatpush1.msra.mxu0 %v2757
    %3390 = vmatprep.subr.mxu0 %v2762
    %3391 = vmatpush1.msra.mxu0 %v2761
    %3392 = vmatprep.subr.mxu0 %v2766
    %3393 = vmatpush1.msra.mxu0 %v2765
    %3394 = vmatprep.subr.mxu0 %v2770
    %3395 = vmatpush1.msra.mxu0 %v2769
    %3396 = vmatprep.subr.mxu0 0.0
    %3397 = vmatpush1.msra.mxu0 0.0
    %3398 = vmatprep.subr.mxu0 0.0
    %3399 = vmatpush1.msra.mxu0 0.0
    %3400 = vmatprep.subr.mxu0 0.0
    %3401 = vmatpush1.msra.mxu0 0.0
    %3402 = vmatprep.subr.mxu0 0.0
    %3403 = vmatpush1.msra.mxu0 0.0
    %3404 = vmatprep.subr.mxu0 0.0
    %3405 = vmatpush1.msra.mxu0 0.0
    %3406 = vmatprep.subr.mxu0 0.0
    %3407 = vmatpush1.msra.mxu0 0.0
    %3408 = vmatprep.subr.mxu0 0.0
    %3409 = vmatpush1.msra.mxu0 0.0
    %3410 = vmatprep.subr.mxu0 0.0
    %3411 = vmatpush1.msra.mxu0 0.0
    %3412 = vmatprep.subr.mxu0 0.0
    %3413 = vmatpush1.msra.mxu0 0.0
    %3414 = vmatprep.subr.mxu0 0.0
    %3415 = vmatpush1.msra.mxu0 0.0
    %3416 = vmatprep.subr.mxu0 0.0
    %3417 = vmatpush1.msra.mxu0 0.0
    %3418 = vmatprep.subr.mxu0 0.0
    %3419 = vmatpush1.msra.mxu0 0.0
    %3420 = vmatprep.subr.mxu0 0.0
    %3421 = vmatpush1.msra.mxu0 0.0
    %3422 = vmatprep.subr.mxu0 0.0
    %3423 = vmatpush1.msra.mxu0 0.0
    %3424 = vmatprep.subr.mxu0 0.0
    %3425 = vmatpush1.msra.mxu0 0.0
    %3426 = vmatprep.subr.mxu0 0.0
    %3427 = vmatpush1.msra.mxu0 0.0
    %3428 = vmatprep.mubr.f32.mxu0 0.0
    %3429 = vmatmul.mubr.f32.gmra.mrb[0].mxu0 %v3288
    %v3430 = vpop.f32.mrb[0].mxu0
    %v3431 = vadd.f32 0.0, %v3430
    %v3432 = vpop.f32.mrb[0].mxu0
    %v3433 = vadd.f32 0.0, %v3432
    %3434 = vdwg.mxu0
    %v3435 = vadd.f32 %v3289, %v3360
    %v3436 = vadd.f32 %v3290, %v3362
    %v3437 = vadd.f32 %v3291, %v3431
    %v3438 = vadd.f32 %v3292, %v3433
    %v3439 = vxor.u32 %v3435, 2147483648
    %v3440 = vmul.f32 %v3439, 1.442695
    %v3441 = vpow.pop %v3440
    %v3442 = vadd.f32 %v3441, 1.0
    %v3443 = vrcp.pop %v3442
    %v3444 = vmul.f32 1.0, %v3443
    %v3445 = vxor.u32 %v3436, 2147483648
    %v3446 = vmul.f32 %v3445, 1.442695
    %v3447 = vpow.pop %v3446
    %v3448 = vadd.f32 %v3447, 1.0
    %v3449 = vrcp.pop %v3448
    %v3450 = vmul.f32 1.0, %v3449
    %v3451 = vtanh.pop %v3437
    %v3452 = vxor.u32 %v3438, 2147483648
    %v3453 = vmul.f32 %v3452, 1.442695
    %v3454 = vpow.pop %v3453
    %v3455 = vadd.f32 %v3454, 1.0
    %v3456 = vrcp.pop %v3455
    %v3457 = vmul.f32 1.0, %v3456
    %v3458 = vmul.f32 %v3450, %v3286
    %v3459 = vmul.f32 %v3444, %v3451
    %v3460 = vadd.f32 %v3458, %v3459
    %v3461 = vtanh.pop %v3460
    %v3462 = vmul.f32 %v3457, %v3461
    %v3463 = vld [vmem:[%s1378] sm:$0xff]
    %v3464 = vld [vmem:[%s1378 + $0x8] sm:$0xff]
    %v3465 = vld [vmem:[%s1378 + $0x10] sm:$0xff]
    %v3466 = vld [vmem:[%s1378 + $0x18] sm:$0xff]
    %3467 = vmatprep.subr.mxu0 %v2708
    %3468 = vmatpush1.msra.mxu0 %v2707
    %3469 = vmatprep.subr.mxu0 %v2712
    %3470 = vmatpush1.msra.mxu0 %v2711
    %3471 = vmatprep.subr.mxu0 %v2716
    %3472 = vmatpush1.msra.mxu0 %v2715
    %3473 = vmatprep.subr.mxu0 %v2720
    %3474 = vmatpush1.msra.mxu0 %v2719
    %3475 = vmatprep.subr.mxu0 %v2724
    %3476 = vmatpush1.msra.mxu0 %v2723
    %3477 = vmatprep.subr.mxu0 %v2728
    %3478 = vmatpush1.msra.mxu0 %v2727
    %3479 = vmatprep.subr.mxu0 %v2732
    %3480 = vmatpush1.msra.mxu0 %v2731
    %3481 = vmatprep.subr.mxu0 %v2736
    %3482 = vmatpush1.msra.mxu0 %v2735
    %3483 = vmatprep.subr.mxu0 %v2740
    %3484 = vmatpush1.msra.mxu0 %v2739
    %3485 = vmatprep.subr.mxu0 %v2744
    %3486 = vmatpush1.msra.mxu0 %v2743
    %3487 = vmatprep.subr.mxu0 %v2748
    %3488 = vmatpush1.msra.mxu0 %v2747
    %3489 = vmatprep.subr.mxu0 %v2752
    %3490 = vmatpush1.msra.mxu0 %v2751
    %3491 = vmatprep.subr.mxu0 %v2756
    %3492 = vmatpush1.msra.mxu0 %v2755
    %3493 = vmatprep.subr.mxu0 %v2760
    %3494 = vmatpush1.msra.mxu0 %v2759
    %3495 = vmatprep.subr.mxu0 %v2764
    %3496 = vmatpush1.msra.mxu0 %v2763
    %3497 = vmatprep.subr.mxu0 %v2768
    %3498 = vmatpush1.msra.mxu0 %v2767
    %3499 = vmatprep.subr.mxu0 0.0
    %3500 = vmatpush1.msra.mxu0 0.0
    %3501 = vmatprep.subr.mxu0 0.0
    %3502 = vmatpush1.msra.mxu0 0.0
    %3503 = vmatprep.subr.mxu0 0.0
    %3504 = vmatpush1.msra.mxu0 0.0
    %3505 = vmatprep.subr.mxu0 0.0
    %3506 = vmatpush1.msra.mxu0 0.0
    %3507 = vmatprep.subr.mxu0 0.0
    %3508 = vmatpush1.msra.mxu0 0.0
    %3509 = vmatprep.subr.mxu0 0.0
    %3510 = vmatpush1.msra.mxu0 0.0
    %3511 = vmatprep.subr.mxu0 0.0
    %3512 = vmatpush1.msra.mxu0 0.0
    %3513 = vmatprep.subr.mxu0 0.0
    %3514 = vmatpush1.msra.mxu0 0.0
    %3515 = vmatprep.subr.mxu0 0.0
    %3516 = vmatpush1.msra.mxu0 0.0
    %3517 = vmatprep.subr.mxu0 0.0
    %3518 = vmatpush1.msra.mxu0 0.0
    %3519 = vmatprep.subr.mxu0 0.0
    %3520 = vmatpush1.msra.mxu0 0.0
    %3521 = vmatprep.subr.mxu0 0.0
    %3522 = vmatpush1.msra.mxu0 0.0
    %3523 = vmatprep.subr.mxu0 0.0
    %3524 = vmatpush1.msra.mxu0 0.0
    %3525 = vmatprep.subr.mxu0 0.0
    %3526 = vmatpush1.msra.mxu0 0.0
    %3527 = vmatprep.subr.mxu0 0.0
    %3528 = vmatpush1.msra.mxu0 0.0
    %3529 = vmatprep.subr.mxu0 0.0
    %3530 = vmatpush1.msra.mxu0 0.0
    %3531 = vmatprep.mubr.f32.mxu0 0.0
    %3532 = vmatmul.mubr.f32.gmra.mrb[0].mxu0 %v3462
    %v3533 = vpop.f32.mrb[0].mxu0
    %v3534 = vadd.f32 0.0, %v3533
    %v3535 = vpop.f32.mrb[0].mxu0
    %v3536 = vadd.f32 0.0, %v3535
    %3537 = vdwg.mxu0
    %3538 = vmatprep.subr.mxu0 %v2710
    %3539 = vmatpush1.msra.mxu0 %v2709
    %3540 = vmatprep.subr.mxu0 %v2714
    %3541 = vmatpush1.msra.mxu0 %v2713
    %3542 = vmatprep.subr.mxu0 %v2718
    %3543 = vmatpush1.msra.mxu0 %v2717
    %3544 = vmatprep.subr.mxu0 %v2722
    %3545 = vmatpush1.msra.mxu0 %v2721
    %3546 = vmatprep.subr.mxu0 %v2726
    %3547 = vmatpush1.msra.mxu0 %v2725
    %3548 = vmatprep.subr.mxu0 %v2730
    %3549 = vmatpush1.msra.mxu0 %v2729
    %3550 = vmatprep.subr.mxu0 %v2734
    %3551 = vmatpush1.msra.mxu0 %v2733
    %3552 = vmatprep.subr.mxu0 %v2738
    %3553 = vmatpush1.msra.mxu0 %v2737
    %3554 = vmatprep.subr.mxu0 %v2742
    %3555 = vmatpush1.msra.mxu0 %v2741
    %3556 = vmatprep.subr.mxu0 %v2746
    %3557 = vmatpush1.msra.mxu0 %v2745
    %3558 = vmatprep.subr.mxu0 %v2750
    %3559 = vmatpush1.msra.mxu0 %v2749
    %3560 = vmatprep.subr.mxu0 %v2754
    %3561 = vmatpush1.msra.mxu0 %v2753
    %3562 = vmatprep.subr.mxu0 %v2758
    %3563 = vmatpush1.msra.mxu0 %v2757
    %3564 = vmatprep.subr.mxu0 %v2762
    %3565 = vmatpush1.msra.mxu0 %v2761
    %3566 = vmatprep.subr.mxu0 %v2766
    %3567 = vmatpush1.msra.mxu0 %v2765
    %3568 = vmatprep.subr.mxu0 %v2770
    %3569 = vmatpush1.msra.mxu0 %v2769
    %3570 = vmatprep.subr.mxu0 0.0
    %3571 = vmatpush1.msra.mxu0 0.0
    %3572 = vmatprep.subr.mxu0 0.0
    %3573 = vmatpush1.msra.mxu0 0.0
    %3574 = vmatprep.subr.mxu0 0.0
    %3575 = vmatpush1.msra.mxu0 0.0
    %3576 = vmatprep.subr.mxu0 0.0
    %3577 = vmatpush1.msra.mxu0 0.0
    %3578 = vmatprep.subr.mxu0 0.0
    %3579 = vmatpush1.msra.mxu0 0.0
    %3580 = vmatprep.subr.mxu0 0.0
    %3581 = vmatpush1.msra.mxu0 0.0
    %3582 = vmatprep.subr.mxu0 0.0
    %3583 = vmatpush1.msra.mxu0 0.0
    %3584 = vmatprep.subr.mxu0 0.0
    %3585 = vmatpush1.msra.mxu0 0.0
    %3586 = vmatprep.subr.mxu0 0.0
    %3587 = vmatpush1.msra.mxu0 0.0
    %3588 = vmatprep.subr.mxu0 0.0
    %3589 = vmatpush1.msra.mxu0 0.0
    %3590 = vmatprep.subr.mxu0 0.0
    %3591 = vmatpush1.msra.mxu0 0.0
    %3592 = vmatprep.subr.mxu0 0.0
    %3593 = vmatpush1.msra.mxu0 0.0
    %3594 = vmatprep.subr.mxu0 0.0
    %3595 = vmatpush1.msra.mxu0 0.0
    %3596 = vmatprep.subr.mxu0 0.0
    %3597 = vmatpush1.msra.mxu0 0.0
    %3598 = vmatprep.subr.mxu0 0.0
    %3599 = vmatpush1.msra.mxu0 0.0
    %3600 = vmatprep.subr.mxu0 0.0
    %3601 = vmatpush1.msra.mxu0 0.0
    %3602 = vmatprep.mubr.f32.mxu0 0.0
    %3603 = vmatmul.mubr.f32.gmra.mrb[0].mxu0 %v3462
    %v3604 = vpop.f32.mrb[0].mxu0
    %v3605 = vadd.f32 0.0, %v3604
    %v3606 = vpop.f32.mrb[0].mxu0
    %v3607 = vadd.f32 0.0, %v3606
    %3608 = vdwg.mxu0
    %v3609 = vadd.f32 %v3463, %v3534
    %v3610 = vadd.f32 %v3464, %v3536
    %v3611 = vadd.f32 %v3465, %v3605
    %v3612 = vadd.f32 %v3466, %v3607
    %v3613 = vxor.u32 %v3609, 2147483648
    %v3614 = vmul.f32 %v3613, 1.442695
    %v3615 = vpow.pop %v3614
    %v3616 = vadd.f32 %v3615, 1.0
    %v3617 = vrcp.pop %v3616
    %v3618 = vmul.f32 1.0, %v3617
    %v3619 = vxor.u32 %v3610, 2147483648
    %v3620 = vmul.f32 %v3619, 1.442695
    %v3621 = vpow.pop %v3620
    %v3622 = vadd.f32 %v3621, 1.0
    %v3623 = vrcp.pop %v3622
    %v3624 = vmul.f32 1.0, %v3623
    %v3625 = vtanh.pop %v3611
    %v3626 = vxor.u32 %v3612, 2147483648
    %v3627 = vmul.f32 %v3626, 1.442695
    %v3628 = vpow.pop %v3627
    %v3629 = vadd.f32 %v3628, 1.0
    %v3630 = vrcp.pop %v3629
    %v3631 = vmul.f32 1.0, %v3630
    %v3632 = vmul.f32 %v3624, %v3460
    %v3633 = vmul.f32 %v3618, %v3625
    %v3634 = vadd.f32 %v3632, %v3633
    %v3635 = vtanh.pop %v3634
    %v3636 = vmul.f32 %v3631, %v3635
    %v3637 = vld [vmem:[%s1621] sm:$0xff]
    %v3638 = vld [vmem:[%s1621 + $0x8] sm:$0xff]
    %v3639 = vld [vmem:[%s1621 + $0x10] sm:$0xff]
    %v3640 = vld [vmem:[%s1621 + $0x18] sm:$0xff]
    %3641 = vmatprep.subr.mxu0 %v2708
    %3642 = vmatpush1.msra.mxu0 %v2707
    %3643 = vmatprep.subr.mxu0 %v2712
    %3644 = vmatpush1.msra.mxu0 %v2711
    %3645 = vmatprep.subr.mxu0 %v2716
    %3646 = vmatpush1.msra.mxu0 %v2715
    %3647 = vmatprep.subr.mxu0 %v2720
    %3648 = vmatpush1.msra.mxu0 %v2719
    %3649 = vmatprep.subr.mxu0 %v2724
    %3650 = vmatpush1.msra.mxu0 %v2723
    %3651 = vmatprep.subr.mxu0 %v2728
    %3652 = vmatpush1.msra.mxu0 %v2727
    %3653 = vmatprep.subr.mxu0 %v2732
    %3654 = vmatpush1.msra.mxu0 %v2731
    %3655 = vmatprep.subr.mxu0 %v2736
    %3656 = vmatpush1.msra.mxu0 %v2735
    %3657 = vmatprep.subr.mxu0 %v2740
    %3658 = vmatpush1.msra.mxu0 %v2739
    %3659 = vmatprep.subr.mxu0 %v2744
    %3660 = vmatpush1.msra.mxu0 %v2743
    %3661 = vmatprep.subr.mxu0 %v2748
    %3662 = vmatpush1.msra.mxu0 %v2747
    %3663 = vmatprep.subr.mxu0 %v2752
    %3664 = vmatpush1.msra.mxu0 %v2751
    %3665 = vmatprep.subr.mxu0 %v2756
    %3666 = vmatpush1.msra.mxu0 %v2755
    %3667 = vmatprep.subr.mxu0 %v2760
    %3668 = vmatpush1.msra.mxu0 %v2759
    %3669 = vmatprep.subr.mxu0 %v2764
    %3670 = vmatpush1.msra.mxu0 %v2763
    %3671 = vmatprep.subr.mxu0 %v2768
    %3672 = vmatpush1.msra.mxu0 %v2767
    %3673 = vmatprep.subr.mxu0 0.0
    %3674 = vmatpush1.msra.mxu0 0.0
    %3675 = vmatprep.subr.mxu0 0.0
    %3676 = vmatpush1.msra.mxu0 0.0
    %3677 = vmatprep.subr.mxu0 0.0
    %3678 = vmatpush1.msra.mxu0 0.0
    %3679 = vmatprep.subr.mxu0 0.0
    %3680 = vmatpush1.msra.mxu0 0.0
    %3681 = vmatprep.subr.mxu0 0.0
    %3682 = vmatpush1.msra.mxu0 0.0
    %3683 = vmatprep.subr.mxu0 0.0
    %3684 = vmatpush1.msra.mxu0 0.0
    %3685 = vmatprep.subr.mxu0 0.0
    %3686 = vmatpush1.msra.mxu0 0.0
    %3687 = vmatprep.subr.mxu0 0.0
    %3688 = vmatpush1.msra.mxu0 0.0
    %3689 = vmatprep.subr.mxu0 0.0
    %3690 = vmatpush1.msra.mxu0 0.0
    %3691 = vmatprep.subr.mxu0 0.0
    %3692 = vmatpush1.msra.mxu0 0.0
    %3693 = vmatprep.subr.mxu0 0.0
    %3694 = vmatpush1.msra.mxu0 0.0
    %3695 = vmatprep.subr.mxu0 0.0
    %3696 = vmatpush1.msra.mxu0 0.0
    %3697 = vmatprep.subr.mxu0 0.0
    %3698 = vmatpush1.msra.mxu0 0.0
    %3699 = vmatprep.subr.mxu0 0.0
    %3700 = vmatpush1.msra.mxu0 0.0
    %3701 = vmatprep.subr.mxu0 0.0
    %3702 = vmatpush1.msra.mxu0 0.0
    %3703 = vmatprep.subr.mxu0 0.0
    %3704 = vmatpush1.msra.mxu0 0.0
    %3705 = vmatprep.mubr.f32.mxu0 0.0
    %3706 = vmatmul.mubr.f32.gmra.mrb[0].mxu0 %v3636
    %v3707 = vpop.f32.mrb[0].mxu0
    %v3708 = vadd.f32 0.0, %v3707
    %v3709 = vpop.f32.mrb[0].mxu0
    %v3710 = vadd.f32 0.0, %v3709
    %3711 = vdwg.mxu0
    %3712 = vmatprep.subr.mxu0 %v2710
    %3713 = vmatpush1.msra.mxu0 %v2709
    %3714 = vmatprep.subr.mxu0 %v2714
    %3715 = vmatpush1.msra.mxu0 %v2713
    %3716 = vmatprep.subr.mxu0 %v2718
    %3717 = vmatpush1.msra.mxu0 %v2717
    %3718 = vmatprep.subr.mxu0 %v2722
    %3719 = vmatpush1.msra.mxu0 %v2721
    %3720 = vmatprep.subr.mxu0 %v2726
    %3721 = vmatpush1.msra.mxu0 %v2725
    %3722 = vmatprep.subr.mxu0 %v2730
    %3723 = vmatpush1.msra.mxu0 %v2729
    %3724 = vmatprep.subr.mxu0 %v2734
    %3725 = vmatpush1.msra.mxu0 %v2733
    %3726 = vmatprep.subr.mxu0 %v2738
    %3727 = vmatpush1.msra.mxu0 %v2737
    %3728 = vmatprep.subr.mxu0 %v2742
    %3729 = vmatpush1.msra.mxu0 %v2741
    %3730 = vmatprep.subr.mxu0 %v2746
    %3731 = vmatpush1.msra.mxu0 %v2745
    %3732 = vmatprep.subr.mxu0 %v2750
    %3733 = vmatpush1.msra.mxu0 %v2749
    %3734 = vmatprep.subr.mxu0 %v2754
    %3735 = vmatpush1.msra.mxu0 %v2753
    %3736 = vmatprep.subr.mxu0 %v2758
    %3737 = vmatpush1.msra.mxu0 %v2757
    %3738 = vmatprep.subr.mxu0 %v2762
    %3739 = vmatpush1.msra.mxu0 %v2761
    %3740 = vmatprep.subr.mxu0 %v2766
    %3741 = vmatpush1.msra.mxu0 %v2765
    %3742 = vmatprep.subr.mxu0 %v2770
    %3743 = vmatpush1.msra.mxu0 %v2769
    %3744 = vmatprep.subr.mxu0 0.0
    %3745 = vmatpush1.msra.mxu0 0.0
    %3746 = vmatprep.subr.mxu0 0.0
    %3747 = vmatpush1.msra.mxu0 0.0
    %3748 = vmatprep.subr.mxu0 0.0
    %3749 = vmatpush1.msra.mxu0 0.0
    %3750 = vmatprep.subr.mxu0 0.0
    %3751 = vmatpush1.msra.mxu0 0.0
    %3752 = vmatprep.subr.mxu0 0.0
    %3753 = vmatpush1.msra.mxu0 0.0
    %3754 = vmatprep.subr.mxu0 0.0
    %3755 = vmatpush1.msra.mxu0 0.0
    %3756 = vmatprep.subr.mxu0 0.0
    %3757 = vmatpush1.msra.mxu0 0.0
    %3758 = vmatprep.subr.mxu0 0.0
    %3759 = vmatpush1.msra.mxu0 0.0
    %3760 = vmatprep.subr.mxu0 0.0
    %3761 = vmatpush1.msra.mxu0 0.0
    %3762 = vmatprep.subr.mxu0 0.0
    %3763 = vmatpush1.msra.mxu0 0.0
    %3764 = vmatprep.subr.mxu0 0.0
    %3765 = vmatpush1.msra.mxu0 0.0
    %3766 = vmatprep.subr.mxu0 0.0
    %3767 = vmatpush1.msra.mxu0 0.0
    %3768 = vmatprep.subr.mxu0 0.0
    %3769 = vmatpush1.msra.mxu0 0.0
    %3770 = vmatprep.subr.mxu0 0.0
    %3771 = vmatpush1.msra.mxu0 0.0
    %3772 = vmatprep.subr.mxu0 0.0
    %3773 = vmatpush1.msra.mxu0 0.0
    %3774 = vmatprep.subr.mxu0 0.0
    %3775 = vmatpush1.msra.mxu0 0.0
    %3776 = vmatprep.mubr.f32.mxu0 0.0
    %3777 = vmatmul.mubr.f32.gmra.mrb[0].mxu0 %v3636
    %v3778 = vpop.f32.mrb[0].mxu0
    %v3779 = vadd.f32 0.0, %v3778
    %v3780 = vpop.f32.mrb[0].mxu0
    %v3781 = vadd.f32 0.0, %v3780
    %3782 = vdwg.mxu0
    %v3783 = vadd.f32 %v3637, %v3708
    %v3784 = vadd.f32 %v3638, %v3710
    %v3785 = vadd.f32 %v3639, %v3779
    %v3786 = vadd.f32 %v3640, %v3781
    %v3787 = vxor.u32 %v3783, 2147483648
    %v3788 = vmul.f32 %v3787, 1.442695
    %v3789 = vpow.pop %v3788
    %v3790 = vadd.f32 %v3789, 1.0
    %v3791 = vrcp.pop %v3790
    %v3792 = vmul.f32 1.0, %v3791
    %v3793 = vxor.u32 %v3784, 2147483648
    %v3794 = vmul.f32 %v3793, 1.442695
    %v3795 = vpow.pop %v3794
    %v3796 = vadd.f32 %v3795, 1.0
    %v3797 = vrcp.pop %v3796
    %v3798 = vmul.f32 1.0, %v3797
    %v3799 = vtanh.pop %v3785
    %v3800 = vxor.u32 %v3786, 2147483648
    %v3801 = vmul.f32 %v3800, 1.442695
    %v3802 = vpow.pop %v3801
    %v3803 = vadd.f32 %v3802, 1.0
    %v3804 = vrcp.pop %v3803
    %v3805 = vmul.f32 1.0, %v3804
    %v3806 = vmul.f32 %v3798, %v3634
    %v3807 = vmul.f32 %v3792, %v3799
    %v3808 = vadd.f32 %v3806, %v3807
    %v3809 = vtanh.pop %v3808
    %v3810 = vmul.f32 %v3805, %v3809
    %v3811 = vld [vmem:[%s1864] sm:$0xff]
    %v3812 = vld [vmem:[%s1864 + $0x8] sm:$0xff]
    %v3813 = vld [vmem:[%s1864 + $0x10] sm:$0xff]
    %v3814 = vld [vmem:[%s1864 + $0x18] sm:$0xff]
    %3815 = vmatprep.subr.mxu0 %v2708
    %3816 = vmatpush1.msra.mxu0 %v2707
    %3817 = vmatprep.subr.mxu0 %v2712
    %3818 = vmatpush1.msra.mxu0 %v2711
    %3819 = vmatprep.subr.mxu0 %v2716
    %3820 = vmatpush1.msra.mxu0 %v2715
    %3821 = vmatprep.subr.mxu0 %v2720
    %3822 = vmatpush1.msra.mxu0 %v2719
    %3823 = vmatprep.subr.mxu0 %v2724
    %3824 = vmatpush1.msra.mxu0 %v2723
    %3825 = vmatprep.subr.mxu0 %v2728
    %3826 = vmatpush1.msra.mxu0 %v2727
    %3827 = vmatprep.subr.mxu0 %v2732
    %3828 = vmatpush1.msra.mxu0 %v2731
    %3829 = vmatprep.subr.mxu0 %v2736
    %3830 = vmatpush1.msra.mxu0 %v2735
    %3831 = vmatprep.subr.mxu0 %v2740
    %3832 = vmatpush1.msra.mxu0 %v2739
    %3833 = vmatprep.subr.mxu0 %v2744
    %3834 = vmatpush1.msra.mxu0 %v2743
    %3835 = vmatprep.subr.mxu0 %v2748
    %3836 = vmatpush1.msra.mxu0 %v2747
    %3837 = vmatprep.subr.mxu0 %v2752
    %3838 = vmatpush1.msra.mxu0 %v2751
    %3839 = vmatprep.subr.mxu0 %v2756
    %3840 = vmatpush1.msra.mxu0 %v2755
    %3841 = vmatprep.subr.mxu0 %v2760
    %3842 = vmatpush1.msra.mxu0 %v2759
    %3843 = vmatprep.subr.mxu0 %v2764
    %3844 = vmatpush1.msra.mxu0 %v2763
    %3845 = vmatprep.subr.mxu0 %v2768
    %3846 = vmatpush1.msra.mxu0 %v2767
    %3847 = vmatprep.subr.mxu0 0.0
    %3848 = vmatpush1.msra.mxu0 0.0
    %3849 = vmatprep.subr.mxu0 0.0
    %3850 = vmatpush1.msra.mxu0 0.0
    %3851 = vmatprep.subr.mxu0 0.0
    %3852 = vmatpush1.msra.mxu0 0.0
    %3853 = vmatprep.subr.mxu0 0.0
    %3854 = vmatpush1.msra.mxu0 0.0
    %3855 = vmatprep.subr.mxu0 0.0
    %3856 = vmatpush1.msra.mxu0 0.0
    %3857 = vmatprep.subr.mxu0 0.0
    %3858 = vmatpush1.msra.mxu0 0.0
    %3859 = vmatprep.subr.mxu0 0.0
    %3860 = vmatpush1.msra.mxu0 0.0
    %3861 = vmatprep.subr.mxu0 0.0
    %3862 = vmatpush1.msra.mxu0 0.0
    %3863 = vmatprep.subr.mxu0 0.0
    %3864 = vmatpush1.msra.mxu0 0.0
    %3865 = vmatprep.subr.mxu0 0.0
    %3866 = vmatpush1.msra.mxu0 0.0
    %3867 = vmatprep.subr.mxu0 0.0
    %3868 = vmatpush1.msra.mxu0 0.0
    %3869 = vmatprep.subr.mxu0 0.0
    %3870 = vmatpush1.msra.mxu0 0.0
    %3871 = vmatprep.subr.mxu0 0.0
    %3872 = vmatpush1.msra.mxu0 0.0
    %3873 = vmatprep.subr.mxu0 0.0
    %3874 = vmatpush1.msra.mxu0 0.0
    %3875 = vmatprep.subr.mxu0 0.0
    %3876 = vmatpush1.msra.mxu0 0.0
    %3877 = vmatprep.subr.mxu0 0.0
    %3878 = vmatpush1.msra.mxu0 0.0
    %3879 = vmatprep.mubr.f32.mxu0 0.0
    %3880 = vmatmul.mubr.f32.gmra.mrb[0].mxu0 %v3810
    %v3881 = vpop.f32.mrb[0].mxu0
    %v3882 = vadd.f32 0.0, %v3881
    %v3883 = vpop.f32.mrb[0].mxu0
    %v3884 = vadd.f32 0.0, %v3883
    %3885 = vdwg.mxu0
    %3886 = vmatprep.subr.mxu0 %v2710
    %3887 = vmatpush1.msra.mxu0 %v2709
    %3888 = vmatprep.subr.mxu0 %v2714
    %3889 = vmatpush1.msra.mxu0 %v2713
    %3890 = vmatprep.subr.mxu0 %v2718
    %3891 = vmatpush1.msra.mxu0 %v2717
    %3892 = vmatprep.subr.mxu0 %v2722
    %3893 = vmatpush1.msra.mxu0 %v2721
    %3894 = vmatprep.subr.mxu0 %v2726
    %3895 = vmatpush1.msra.mxu0 %v2725
    %3896 = vmatprep.subr.mxu0 %v2730
    %3897 = vmatpush1.msra.mxu0 %v2729
    %3898 = vmatprep.subr.mxu0 %v2734
    %3899 = vmatpush1.msra.mxu0 %v2733
    %3900 = vmatprep.subr.mxu0 %v2738
    %3901 = vmatpush1.msra.mxu0 %v2737
    %3902 = vmatprep.subr.mxu0 %v2742
    %3903 = vmatpush1.msra.mxu0 %v2741
    %3904 = vmatprep.subr.mxu0 %v2746
    %3905 = vmatpush1.msra.mxu0 %v2745
    %3906 = vmatprep.subr.mxu0 %v2750
    %3907 = vmatpush1.msra.mxu0 %v2749
    %3908 = vmatprep.subr.mxu0 %v2754
    %3909 = vmatpush1.msra.mxu0 %v2753
    %3910 = vmatprep.subr.mxu0 %v2758
    %3911 = vmatpush1.msra.mxu0 %v2757
    %3912 = vmatprep.subr.mxu0 %v2762
    %3913 = vmatpush1.msra.mxu0 %v2761
    %3914 = vmatprep.subr.mxu0 %v2766
    %3915 = vmatpush1.msra.mxu0 %v2765
    %3916 = vmatprep.subr.mxu0 %v2770
    %3917 = vmatpush1.msra.mxu0 %v2769
    %3918 = vmatprep.subr.mxu0 0.0
    %3919 = vmatpush1.msra.mxu0 0.0
    %3920 = vmatprep.subr.mxu0 0.0
    %3921 = vmatpush1.msra.mxu0 0.0
    %3922 = vmatprep.subr.mxu0 0.0
    %3923 = vmatpush1.msra.mxu0 0.0
    %3924 = vmatprep.subr.mxu0 0.0
    %3925 = vmatpush1.msra.mxu0 0.0
    %3926 = vmatprep.subr.mxu0 0.0
    %3927 = vmatpush1.msra.mxu0 0.0
    %3928 = vmatprep.subr.mxu0 0.0
    %3929 = vmatpush1.msra.mxu0 0.0
    %3930 = vmatprep.subr.mxu0 0.0
    %3931 = vmatpush1.msra.mxu0 0.0
    %3932 = vmatprep.subr.mxu0 0.0
    %3933 = vmatpush1.msra.mxu0 0.0
    %3934 = vmatprep.subr.mxu0 0.0
    %3935 = vmatpush1.msra.mxu0 0.0
    %3936 = vmatprep.subr.mxu0 0.0
    %3937 = vmatpush1.msra.mxu0 0.0
    %3938 = vmatprep.subr.mxu0 0.0
    %3939 = vmatpush1.msra.mxu0 0.0
    %3940 = vmatprep.subr.mxu0 0.0
    %3941 = vmatpush1.msra.mxu0 0.0
    %3942 = vmatprep.subr.mxu0 0.0
    %3943 = vmatpush1.msra.mxu0 0.0
    %3944 = vmatprep.subr.mxu0 0.0
    %3945 = vmatpush1.msra.mxu0 0.0
    %3946 = vmatprep.subr.mxu0 0.0
    %3947 = vmatpush1.msra.mxu0 0.0
    %3948 = vmatprep.subr.mxu0 0.0
    %3949 = vmatpush1.msra.mxu0 0.0
    %3950 = vmatprep.mubr.f32.mxu0 0.0
    %3951 = vmatmul.mubr.f32.gmra.mrb[0].mxu0 %v3810
    %v3952 = vpop.f32.mrb[0].mxu0
    %v3953 = vadd.f32 0.0, %v3952
    %v3954 = vpop.f32.mrb[0].mxu0
    %v3955 = vadd.f32 0.0, %v3954
    %3956 = vdwg.mxu0
    %v3957 = vadd.f32 %v3811, %v3882
    %v3958 = vadd.f32 %v3812, %v3884
    %v3959 = vadd.f32 %v3813, %v3953
    %v3960 = vadd.f32 %v3814, %v3955
    %v3961 = vxor.u32 %v3957, 2147483648
    %v3962 = vmul.f32 %v3961, 1.442695
    %v3963 = vpow.pop %v3962
    %v3964 = vadd.f32 %v3963, 1.0
    %v3965 = vrcp.pop %v3964
    %v3966 = vmul.f32 1.0, %v3965
    %v3967 = vxor.u32 %v3958, 2147483648
    %v3968 = vmul.f32 %v3967, 1.442695
    %v3969 = vpow.pop %v3968
    %v3970 = vadd.f32 %v3969, 1.0
    %v3971 = vrcp.pop %v3970
    %v3972 = vmul.f32 1.0, %v3971
    %v3973 = vtanh.pop %v3959
    %v3974 = vxor.u32 %v3960, 2147483648
    %v3975 = vmul.f32 %v3974, 1.442695
    %v3976 = vpow.pop %v3975
    %v3977 = vadd.f32 %v3976, 1.0
    %v3978 = vrcp.pop %v3977
    %v3979 = vmul.f32 1.0, %v3978
    %v3980 = vmul.f32 %v3972, %v3808
    %v3981 = vmul.f32 %v3966, %v3973
    %v3982 = vadd.f32 %v3980, %v3981
    %v3983 = vtanh.pop %v3982
    %v3984 = vmul.f32 %v3979, %v3983
    %v3985 = vld [vmem:[%s2107] sm:$0xff]
    %v3986 = vld [vmem:[%s2107 + $0x8] sm:$0xff]
    %v3987 = vld [vmem:[%s2107 + $0x10] sm:$0xff]
    %v3988 = vld [vmem:[%s2107 + $0x18] sm:$0xff]
    %3989 = vmatprep.subr.mxu0 %v2708
    %3990 = vmatpush1.msra.mxu0 %v2707
    %3991 = vmatprep.subr.mxu0 %v2712
    %3992 = vmatpush1.msra.mxu0 %v2711
    %3993 = vmatprep.subr.mxu0 %v2716
    %3994 = vmatpush1.msra.mxu0 %v2715
    %3995 = vmatprep.subr.mxu0 %v2720
    %3996 = vmatpush1.msra.mxu0 %v2719
    %3997 = vmatprep.subr.mxu0 %v2724
    %3998 = vmatpush1.msra.mxu0 %v2723
    %3999 = vmatprep.subr.mxu0 %v2728
    %4000 = vmatpush1.msra.mxu0 %v2727
    %4001 = vmatprep.subr.mxu0 %v2732
    %4002 = vmatpush1.msra.mxu0 %v2731
    %4003 = vmatprep.subr.mxu0 %v2736
    %4004 = vmatpush1.msra.mxu0 %v2735
    %4005 = vmatprep.subr.mxu0 %v2740
    %4006 = vmatpush1.msra.mxu0 %v2739
    %4007 = vmatprep.subr.mxu0 %v2744
    %4008 = vmatpush1.msra.mxu0 %v2743
    %4009 = vmatprep.subr.mxu0 %v2748
    %4010 = vmatpush1.msra.mxu0 %v2747
    %4011 = vmatprep.subr.mxu0 %v2752
    %4012 = vmatpush1.msra.mxu0 %v2751
    %4013 = vmatprep.subr.mxu0 %v2756
    %4014 = vmatpush1.msra.mxu0 %v2755
    %4015 = vmatprep.subr.mxu0 %v2760
    %4016 = vmatpush1.msra.mxu0 %v2759
    %4017 = vmatprep.subr.mxu0 %v2764
    %4018 = vmatpush1.msra.mxu0 %v2763
    %4019 = vmatprep.subr.mxu0 %v2768
    %4020 = vmatpush1.msra.mxu0 %v2767
    %4021 = vmatprep.subr.mxu0 0.0
    %4022 = vmatpush1.msra.mxu0 0.0
    %4023 = vmatprep.subr.mxu0 0.0
    %4024 = vmatpush1.msra.mxu0 0.0
    %4025 = vmatprep.subr.mxu0 0.0
    %4026 = vmatpush1.msra.mxu0 0.0
    %4027 = vmatprep.subr.mxu0 0.0
    %4028 = vmatpush1.msra.mxu0 0.0
    %4029 = vmatprep.subr.mxu0 0.0
    %4030 = vmatpush1.msra.mxu0 0.0
    %4031 = vmatprep.subr.mxu0 0.0
    %4032 = vmatpush1.msra.mxu0 0.0
    %4033 = vmatprep.subr.mxu0 0.0
    %4034 = vmatpush1.msra.mxu0 0.0
    %4035 = vmatprep.subr.mxu0 0.0
    %4036 = vmatpush1.msra.mxu0 0.0
    %4037 = vmatprep.subr.mxu0 0.0
    %4038 = vmatpush1.msra.mxu0 0.0
    %4039 = vmatprep.subr.mxu0 0.0
    %4040 = vmatpush1.msra.mxu0 0.0
    %4041 = vmatprep.subr.mxu0 0.0
    %4042 = vmatpush1.msra.mxu0 0.0
    %4043 = vmatprep.subr.mxu0 0.0
    %4044 = vmatpush1.msra.mxu0 0.0
    %4045 = vmatprep.subr.mxu0 0.0
    %4046 = vmatpush1.msra.mxu0 0.0
    %4047 = vmatprep.subr.mxu0 0.0
    %4048 = vmatpush1.msra.mxu0 0.0
    %4049 = vmatprep.subr.mxu0 0.0
    %4050 = vmatpush1.msra.mxu0 0.0
    %4051 = vmatprep.subr.mxu0 0.0
    %4052 = vmatpush1.msra.mxu0 0.0
    %4053 = vmatprep.mubr.f32.mxu0 0.0
    %4054 = vmatmul.mubr.f32.gmra.mrb[0].mxu0 %v3984
    %v4055 = vpop.f32.mrb[0].mxu0
    %v4056 = vadd.f32 0.0, %v4055
    %v4057 = vpop.f32.mrb[0].mxu0
    %v4058 = vadd.f32 0.0, %v4057
    %4059 = vdwg.mxu0
    %4060 = vmatprep.subr.mxu0 %v2710
    %4061 = vmatpush1.msra.mxu0 %v2709
    %4062 = vmatprep.subr.mxu0 %v2714
    %4063 = vmatpush1.msra.mxu0 %v2713
    %4064 = vmatprep.subr.mxu0 %v2718
    %4065 = vmatpush1.msra.mxu0 %v2717
    %4066 = vmatprep.subr.mxu0 %v2722
    %4067 = vmatpush1.msra.mxu0 %v2721
    %4068 = vmatprep.subr.mxu0 %v2726
    %4069 = vmatpush1.msra.mxu0 %v2725
    %4070 = vmatprep.subr.mxu0 %v2730
    %4071 = vmatpush1.msra.mxu0 %v2729
    %4072 = vmatprep.subr.mxu0 %v2734
    %4073 = vmatpush1.msra.mxu0 %v2733
    %4074 = vmatprep.subr.mxu0 %v2738
    %4075 = vmatpush1.msra.mxu0 %v2737
    %4076 = vmatprep.subr.mxu0 %v2742
    %4077 = vmatpush1.msra.mxu0 %v2741
    %4078 = vmatprep.subr.mxu0 %v2746
    %4079 = vmatpush1.msra.mxu0 %v2745
    %4080 = vmatprep.subr.mxu0 %v2750
    %4081 = vmatpush1.msra.mxu0 %v2749
    %4082 = vmatprep.subr.mxu0 %v2754
    %4083 = vmatpush1.msra.mxu0 %v2753
    %4084 = vmatprep.subr.mxu0 %v2758
    %4085 = vmatpush1.msra.mxu0 %v2757
    %4086 = vmatprep.subr.mxu0 %v2762
    %4087 = vmatpush1.msra.mxu0 %v2761
    %4088 = vmatprep.subr.mxu0 %v2766
    %4089 = vmatpush1.msra.mxu0 %v2765
    %4090 = vmatprep.subr.mxu0 %v2770
    %4091 = vmatpush1.msra.mxu0 %v2769
    %4092 = vmatprep.subr.mxu0 0.0
    %4093 = vmatpush1.msra.mxu0 0.0
    %4094 = vmatprep.subr.mxu0 0.0
    %4095 = vmatpush1.msra.mxu0 0.0
    %4096 = vmatprep.subr.mxu0 0.0
    %4097 = vmatpush1.msra.mxu0 0.0
    %4098 = vmatprep.subr.mxu0 0.0
    %4099 = vmatpush1.msra.mxu0 0.0
    %4100 = vmatprep.subr.mxu0 0.0
    %4101 = vmatpush1.msra.mxu0 0.0
    %4102 = vmatprep.subr.mxu0 0.0
    %4103 = vmatpush1.msra.mxu0 0.0
    %4104 = vmatprep.subr.mxu0 0.0
    %4105 = vmatpush1.msra.mxu0 0.0
    %4106 = vmatprep.subr.mxu0 0.0
    %4107 = vmatpush1.msra.mxu0 0.0
    %4108 = vmatprep.subr.mxu0 0.0
    %4109 = vmatpush1.msra.mxu0 0.0
    %4110 = vmatprep.subr.mxu0 0.0
    %4111 = vmatpush1.msra.mxu0 0.0
    %4112 = vmatprep.subr.mxu0 0.0
    %4113 = vmatpush1.msra.mxu0 0.0
    %4114 = vmatprep.subr.mxu0 0.0
    %4115 = vmatpush1.msra.mxu0 0.0
    %4116 = vmatprep.subr.mxu0 0.0
    %4117 = vmatpush1.msra.mxu0 0.0
    %4118 = vmatprep.subr.mxu0 0.0
    %4119 = vmatpush1.msra.mxu0 0.0
    %4120 = vmatprep.subr.mxu0 0.0
    %4121 = vmatpush1.msra.mxu0 0.0
    %4122 = vmatprep.subr.mxu0 0.0
    %4123 = vmatpush1.msra.mxu0 0.0
    %4124 = vmatprep.mubr.f32.mxu0 0.0
    %4125 = vmatmul.mubr.f32.gmra.mrb[0].mxu0 %v3984
    %v4126 = vpop.f32.mrb[0].mxu0
    %v4127 = vadd.f32 0.0, %v4126
    %v4128 = vpop.f32.mrb[0].mxu0
    %v4129 = vadd.f32 0.0, %v4128
    %4130 = vdwg.mxu0
    %v4131 = vadd.f32 %v3985, %v4056
    %v4132 = vadd.f32 %v3986, %v4058
    %v4133 = vadd.f32 %v3987, %v4127
    %v4134 = vadd.f32 %v3988, %v4129
    %v4135 = vxor.u32 %v4131, 2147483648
    %v4136 = vmul.f32 %v4135, 1.442695
    %v4137 = vpow.pop %v4136
    %v4138 = vadd.f32 %v4137, 1.0
    %v4139 = vrcp.pop %v4138
    %v4140 = vmul.f32 1.0, %v4139
    %v4141 = vxor.u32 %v4132, 2147483648
    %v4142 = vmul.f32 %v4141, 1.442695
    %v4143 = vpow.pop %v4142
    %v4144 = vadd.f32 %v4143, 1.0
    %v4145 = vrcp.pop %v4144
    %v4146 = vmul.f32 1.0, %v4145
    %v4147 = vtanh.pop %v4133
    %v4148 = vxor.u32 %v4134, 2147483648
    %v4149 = vmul.f32 %v4148, 1.442695
    %v4150 = vpow.pop %v4149
    %v4151 = vadd.f32 %v4150, 1.0
    %v4152 = vrcp.pop %v4151
    %v4153 = vmul.f32 1.0, %v4152
    %v4154 = vmul.f32 %v4146, %v3982
    %v4155 = vmul.f32 %v4140, %v4147
    %v4156 = vadd.f32 %v4154, %v4155
    %v4157 = vtanh.pop %v4156
    %v4158 = vmul.f32 %v4153, %v4157
    %v4159 = vld [vmem:[%s4] sm:$0x1]
    %v4161 = vlaneseq
    %v4162 = vshrl.u32 %v4161, 7
    %v4163 = vsub.s32 0, %v4162
    %v4164 = vrot.slane %v4159, %v4163
    %v4166 = vmul.f32 %v4158, %v4164
    %4167 = vadd.xlane.f32.xlu0 %v4166
    %v4168 = vpop.xlane.xlu0 %4167
    %v4169 = vld [vmem:[#allocation4] sm:$0x1]
    %v4171 = vlaneseq
    %v4172 = vshrl.u32 %v4171, 7
    %v4173 = vsub.s32 0, %v4172
    %v4174 = vrot.slane %v4169, %v4173
    %v4176 = vadd.f32 %v4168, %v4174
    %4178 = vset.pattern.permute.xlu0 0
    %4179 = vperm.xlu0 %4178, %v4176
    %v4180 = vpop.permute.xlu0 %4179
    %4182 = vst [vmem:[%s6] sm:$0xff] %v4180
    // Predicated region
    $region34: #{multivariate_lstm_forward.1} parent=1 // pred_check
      _
    $region35: #{multivariate_lstm_forward.1} parent=1 // pred_check_branch
      %4184 = sbr.rel (0) target = $region37
    $region36: #{multivariate_lstm_forward.1} parent=1 // pred_region
      _
    $region37: #{multivariate_lstm_forward.1} parent=1 // pred_fallthru
      _
    // Predicated region
    $region38: #{multivariate_lstm_forward.1} parent=1 // pred_check
      _
    $region39: #{multivariate_lstm_forward.1} parent=1 // pred_check_branch
      %4186 = sbr.rel (0) target = $region41
    $region40: #{multivariate_lstm_forward.1} parent=1 // pred_region
      _
    $region41: #{multivariate_lstm_forward.1} parent=1 // pred_fallthru
      _
    %4187 = vsyncpa [#allocation6], 1
    %4188 = vsyncpa [#allocation8], 1

</llo_original>
